<compile_context>
chip_gen: v5e
topology: v5e:2x2
jax: 0.10.0
libtpu: 0.0.40
codegen_flags: <defaults>
</compile_context>

<pallas_src>
import math

import jax
import jax.numpy as jnp
from jax.experimental import pallas as pl
from jax.experimental.pallas import tpu as pltpu

_SQRT2 = math.sqrt(2.0)
_INV_SQRT2 = 1.0 / math.sqrt(2.0)
_LANE = 128   # lane padding for the 66-ch inputs and the ToRGB output


def _vmem_limit_bytes():
    """~5/8 of physical VMEM: 80 MiB on v5e/v6e (128 MiB), 40 MiB on v7x (64 MiB)."""
    try:
        cap = pltpu.get_tpu_info().vmem_capacity_bytes
    except Exception:
        cap = 64 * 1024 * 1024
    return int(min(cap * 5 // 8, 100 * 1024 * 1024))


# ----------------------------------------------------------------------------
# Pallas kernel: the whole decoder (res1..res4 + ToRGB) for one (b, HW-tile)
# ----------------------------------------------------------------------------
def _decoder_kernel(
    x0_ref, xm_ref, xh_ref,
    r1_w1_ref, r1_b1_ref, r1_w2_ref, r1_b2_ref, r1_wsk_ref,
    r2_w1a_ref, r2_w1b_ref, r2_b1_ref, r2_w2_ref, r2_b2_ref, r2_wska_ref, r2_wskb_ref,
    r3_w1a_ref, r3_w1b_ref, r3_b1_ref, r3_w2_ref, r3_b2_ref, r3_wska_ref, r3_wskb_ref,
    r4_w1_ref, r4_b1_ref, r4_w2_ref, r4_b2_ref,
    wrgb_ref, brgb_ref,
    o_ref,
):
    """Constant folding (done in JAX weight prep, post-demodulation):
         * conv2 weights carry the sqrt(2) of the first FusedLeakyReLU,
         * skip-conv weights carry the final 1/sqrt(2),
         * the sqrt(2) of the second FusedLeakyReLU cancels the final 1/sqrt(2),
       so per block the kernel computes  leaky(h @ W2' + b2) + x @ Wsk'  exactly
       equal to the reference  (leaky(..)*sqrt2 + x @ Wsk) / sqrt2.
       Matmul accumulation + bias adds are f32; the elementwise epilogue is bf16."""

    def leaky(v):                       # bf16 LeakyReLU(0.2): mul + max on the VALU
        return jnp.maximum(v, v * 0.2)

    def act(acc, b_ref):                # f32 acc + f32 bias -> bf16 leaky
        return leaky((acc + b_ref[...]).astype(jnp.bfloat16))

    x0 = x0_ref[0]                      # (T, 128) bf16 (66 real channels, rest zero)
    xm = xm_ref[0]
    xh = xh_ref[0]

    # ---- res1: Cin = 66 (lane-padded to 128), 1x1 skip conv ----
    h = act(jnp.dot(x0, r1_w1_ref[0], preferred_element_type=jnp.float32), r1_b1_ref)
    o = act(jnp.dot(h, r1_w2_ref[0], preferred_element_type=jnp.float32), r1_b2_ref)
    skip = jnp.dot(x0, r1_wsk_ref[...], preferred_element_type=jnp.float32)
    x1 = o + skip.astype(jnp.bfloat16)                                  # (T, 256)

    # ---- res2: virtual concat [x1, xm] via split-K ----
    acc = jnp.dot(x1, r2_w1a_ref[0], preferred_element_type=jnp.float32)
    acc = acc + jnp.dot(xm, r2_w1b_ref[0], preferred_element_type=jnp.float32)
    h = act(acc, r2_b1_ref)
    o = act(jnp.dot(h, r2_w2_ref[0], preferred_element_type=jnp.float32), r2_b2_ref)
    skip = jnp.dot(x1, r2_wska_ref[...], preferred_element_type=jnp.float32)
    skip = skip + jnp.dot(xm, r2_wskb_ref[...], preferred_element_type=jnp.float32)
    x2 = o + skip.astype(jnp.bfloat16)

    # ---- res3: virtual concat [x2, xh] via split-K ----
    acc = jnp.dot(x2, r3_w1a_ref[0], preferred_element_type=jnp.float32)
    acc = acc + jnp.dot(xh, r3_w1b_ref[0], preferred_element_type=jnp.float32)
    h = act(acc, r3_b1_ref)
    o = act(jnp.dot(h, r3_w2_ref[0], preferred_element_type=jnp.float32), r3_b2_ref)
    skip = jnp.dot(x2, r3_wska_ref[...], preferred_element_type=jnp.float32)
    skip = skip + jnp.dot(xh, r3_wskb_ref[...], preferred_element_type=jnp.float32)
    x3 = o + skip.astype(jnp.bfloat16)

    # ---- res4: identity skip (single cheap bf16 scale) ----
    h = act(jnp.dot(x3, r4_w1_ref[0], preferred_element_type=jnp.float32), r4_b1_ref)
    o = act(jnp.dot(h, r4_w2_ref[0], preferred_element_type=jnp.float32), r4_b2_ref)
    x4 = o + x3 * _INV_SQRT2

    # ---- ToRGB (modulated, no demod, no activation), lane-padded to 128 ----
    rgb = jnp.dot(x4, wrgb_ref[0], preferred_element_type=jnp.float32) + brgb_ref[...]
    o_ref[0] = rgb.astype(o_ref.dtype)                                  # bf16 store


# ----------------------------------------------------------------------------
# JAX glue: per-sample weight modulation (tiny: B x Cin x Cout)
# ----------------------------------------------------------------------------
def _modulated_weight(p, style, demodulate=True):
    """StyleGAN2 ModulatedConv2d (k=1) weight, per sample, pre-transposed.
    Returns (B, Cin, Cout) f32 so the kernel does x @ w with no transpose."""
    s = style @ (p["w_mod"] * p["mod_scale"]).T + p["b_mod"]            # (B, Cin)
    w = p["weight"][None, :, :] * p["scale"] * s[:, None, :]            # (B, Cout, Cin)
    if demodulate:
        d = jax.lax.rsqrt(jnp.sum(w * w, axis=2, keepdims=True) + 1e-8)
        w = w * d
    return jnp.transpose(w, (0, 2, 1))                                   # (B, Cin, Cout)


def _pad_k(w, k_to):
    """Zero-pad the K (second-to-last) axis of a (..., K, N) array to k_to."""
    pad = k_to - w.shape[-2]
    if pad == 0:
        return w
    cfg = [(0, 0)] * w.ndim
    cfg[-2] = (0, pad)
    return jnp.pad(w, cfg)


# ----------------------------------------------------------------------------
# Fused decoder wrapper around the Pallas kernel
# ----------------------------------------------------------------------------
def fused_decoder(params, x0, xm, xh, style, *, out_ch, tile_hw=2048):
    """x0/xm/xh: (B, HW, 128) bf16 lane-padded positional encodings."""
    B, HW, CP = x0.shape
    ch = params["res1"]["conv2"]["weight"].shape[0]
    bf16, f32 = jnp.bfloat16, jnp.float32

    def bias(p):
        return p["act_bias"].reshape(1, ch).astype(f32)

    def conv2_w(p):                                   # sqrt(2) fold (post-demod)
        return (_modulated_weight(p, style) * _SQRT2).astype(bf16)

    # --- res1 (Cin = 66 -> padded 128, 1x1 skip conv) ---
    r1 = params["res1"]
    r1_w1 = _pad_k(_modulated_weight(r1["conv1"], style), CP).astype(bf16)
    r1_w2 = conv2_w(r1["conv2"])
    r1_wsk = _pad_k((r1["skip_w"] * r1["skip_scale"]).T * _INV_SQRT2, CP).astype(bf16)

    # --- res2 / res3 (Cin = ch + 66, split-K over the virtual concat) ---
    def split_block(p):
        w1 = _modulated_weight(p["conv1"], style)                       # (B, ch+66, ch)
        w1a = w1[:, :ch, :].astype(bf16)
        w1b = _pad_k(w1[:, ch:, :], CP).astype(bf16)
        wsk = (p["skip_w"] * p["skip_scale"]).T * _INV_SQRT2            # (ch+66, ch)
        wska = wsk[:ch].astype(bf16)
        wskb = _pad_k(wsk[ch:], CP).astype(bf16)
        return w1a, w1b, conv2_w(p["conv2"]), wska, wskb

    r2_w1a, r2_w1b, r2_w2, r2_wska, r2_wskb = split_block(params["res2"])
    r3_w1a, r3_w1b, r3_w2, r3_wska, r3_wskb = split_block(params["res3"])

    # --- res4 (identity skip) ---
    r4 = params["res4"]
    r4_w1 = _modulated_weight(r4["conv1"], style).astype(bf16)
    r4_w2 = conv2_w(r4["conv2"])

    # --- ToRGB (no demodulation), out channels lane-padded to 128 ---
    tg = params["torgb"]
    wrgb = _modulated_weight(tg, style, demodulate=False)               # (B, ch, out_ch)
    wrgb = jnp.pad(wrgb, ((0, 0), (0, 0), (0, _LANE - out_ch))).astype(bf16)
    brgb = jnp.pad(tg["bias"].astype(f32), (0, _LANE - out_ch)).reshape(1, _LANE)

    # --- HW tiling: full tile if small, otherwise a multiple-of-8 tile ---
    T = HW if HW <= tile_hw else tile_hw

    act_spec = pl.BlockSpec((1, T, CP), lambda b, t: (b, t, 0))

    def b_spec(k, n):      # per-sample weight, b-resident across the HW axis
        return pl.BlockSpec((1, k, n), lambda b, t: (b, 0, 0))

    def shared2(r, c):     # batch-shared 2-D array, fully resident
        return pl.BlockSpec((r, c), lambda b, t: (0, 0))

    inputs = [
        x0, xm, xh,
        r1_w1, bias(r1["conv1"]), r1_w2, bias(r1["conv2"]), r1_wsk,
        r2_w1a, r2_w1b, bias(params["res2"]["conv1"]), r2_w2,
        bias(params["res2"]["conv2"]), r2_wska, r2_wskb,
        r3_w1a, r3_w1b, bias(params["res3"]["conv1"]), r3_w2,
        bias(params["res3"]["conv2"]), r3_wska, r3_wskb,
        r4_w1, bias(r4["conv1"]), r4_w2, bias(r4["conv2"]),
        wrgb, brgb,
    ]
    in_specs = [
        act_spec, act_spec, act_spec,
        b_spec(CP, ch), shared2(1, ch), b_spec(ch, ch), shared2(1, ch), shared2(CP, ch),
        b_spec(ch, ch), b_spec(CP, ch), shared2(1, ch), b_spec(ch, ch),
        shared2(1, ch), shared2(ch, ch), shared2(CP, ch),
        b_spec(ch, ch), b_spec(CP, ch), shared2(1, ch), b_spec(ch, ch),
        shared2(1, ch), shared2(ch, ch), shared2(CP, ch),
        b_spec(ch, ch), shared2(1, ch), b_spec(ch, ch), shared2(1, ch),
        b_spec(ch, _LANE), shared2(1, _LANE),
    ]

    return pl.pallas_call(
        _decoder_kernel,
        out_shape=jax.ShapeDtypeStruct((B, HW, _LANE), bf16),
        grid=(B, pl.cdiv(HW, T)),
        in_specs=in_specs,
        out_specs=pl.BlockSpec((1, T, _LANE), lambda b, t: (b, t, 0)),
        compiler_params=pltpu.CompilerParams(
            dimension_semantics=("parallel", "parallel"),
            vmem_limit_bytes=_vmem_limit_bytes()),
    )(*inputs)


# ----------------------------------------------------------------------------
# JAX glue (tiny ops)
# ----------------------------------------------------------------------------
def sinusoidal_pos_emb(t, dim):
    half = dim // 2
    emb = math.log(10000.0) / (half - 1)
    freqs = jnp.exp(jnp.arange(half, dtype=jnp.float32) * -emb)
    args = t[:, None] * freqs[None, :]
    return jnp.concatenate([jnp.sin(args), jnp.cos(args)], axis=-1)


def time_mlp(p, t):
    # Tiny (B x ch) MLP; kept in plain JAX (the per-pixel convs are the hot path).
    dim = p["w1"].shape[1]
    h = sinusoidal_pos_emb(t, dim)
    h = h @ p["w1"].T + p["b1"]
    h = jax.nn.gelu(h, approximate=False)          # torch nn.GELU() is exact
    h = h @ p["w2"].T + p["b2"]
    return h


def grid_sample_bilinear(plane, grid):
    """Bilinear grid_sample (align_corners=True) as 4 gathers + weighted sum.
    plane: (B, C, Hp, Wp); grid: (B, H, W, 2) with (x, y) in [-1, 1].
    Returns (B, H*W, C).
    """
    # TODO(synk): border-clamp padding here vs PyTorch's default padding_mode='zeros';
    # identical for in-range coords (the regular [-1,1] grid used by this module).
    B, C, Hp, Wp = plane.shape
    _, H, W, _ = grid.shape
    HW, Q = H * W, Hp * Wp

    gx = (grid[..., 0] + 1.0) * 0.5 * (Wp - 1)
    gy = (grid[..., 1] + 1.0) * 0.5 * (Hp - 1)
    x0 = jnp.floor(gx)
    y0 = jnp.floor(gy)
    wx1 = gx - x0
    wy1 = gy - y0
    wx0 = 1.0 - wx1
    wy0 = 1.0 - wy1
    x0i = jnp.clip(x0, 0, Wp - 1).astype(jnp.int32)
    x1i = jnp.clip(x0 + 1.0, 0, Wp - 1).astype(jnp.int32)
    y0i = jnp.clip(y0, 0, Hp - 1).astype(jnp.int32)
    y1i = jnp.clip(y0 + 1.0, 0, Hp - 1).astype(jnp.int32)

    plane_flat = jnp.transpose(plane.reshape(B, C, Q), (0, 2, 1))       # (B, Q, C)

    def tap(yi, xi):
        idx = (yi * Wp + xi).reshape(B, HW, 1)
        return jnp.take_along_axis(plane_flat, idx, axis=1)             # (B, HW, C)

    return ((wy0 * wx0).reshape(B, HW, 1) * tap(y0i, x0i)
            + (wy0 * wx1).reshape(B, HW, 1) * tap(y0i, x1i)
            + (wy1 * wx0).reshape(B, HW, 1) * tap(y1i, x0i)
            + (wy1 * wx1).reshape(B, HW, 1) * tap(y1i, x1i))


# ----------------------------------------------------------------------------
# Deterministic parameter init (synthetic weights; shapes from __init__)
# ----------------------------------------------------------------------------
def _init_styled_conv(key, in_ch, out_ch, style_dim):
    k1, k2 = jax.random.split(key)
    return {
        "weight": jax.random.normal(k1, (out_ch, in_ch), jnp.float32),
        "scale": 1.0 / math.sqrt(in_ch),                  # kernel_size == 1
        "w_mod": jax.random.normal(k2, (in_ch, style_dim), jnp.float32),
        "mod_scale": 1.0 / math.sqrt(style_dim),
        "b_mod": jnp.ones((in_ch,), jnp.float32),         # EqualLinear bias_init=1
        "act_bias": jnp.zeros((out_ch,), jnp.float32),    # FusedLeakyReLU bias
    }


def _init_resblock(key, in_ch, out_ch, style_dim):
    k1, k2, k3 = jax.random.split(key, 3)
    p = {
        "conv1": _init_styled_conv(k1, in_ch, out_ch, style_dim),
        "conv2": _init_styled_conv(k2, out_ch, out_ch, style_dim),
    }
    if in_ch != out_ch:
        p["skip_w"] = jax.random.normal(k3, (out_ch, in_ch), jnp.float32)
        p["skip_scale"] = 1.0 / math.sqrt(in_ch)
    return p


def init_params(key, *, in_ch=2, latent_dim=64, out_ch=3, ch=256):
    dim = ch // 4
    keys = jax.random.split(key, 8)
    return {
        "time_mlp": {
            "w1": jax.random.normal(keys[0], (ch, dim), jnp.float32) * 0.02,
            "b1": jnp.zeros((ch,), jnp.float32),
            "w2": jax.random.normal(keys[1], (ch, ch), jnp.float32) * 0.02,
            "b2": jnp.zeros((ch,), jnp.float32),
        },
        "res1": _init_resblock(keys[2], in_ch + latent_dim, ch, ch),
        "res2": _init_resblock(keys[3], ch + in_ch + latent_dim, ch, ch),
        "res3": _init_resblock(keys[4], ch + in_ch + latent_dim, ch, ch),
        "res4": _init_resblock(keys[5], ch, ch, ch),
        "torgb": {
            "weight": jax.random.normal(keys[6], (out_ch, ch), jnp.float32),
            "scale": 1.0 / math.sqrt(ch),
            "w_mod": jax.random.normal(keys[7], (ch, ch), jnp.float32),
            "mod_scale": 1.0 / math.sqrt(ch),
            "b_mod": jnp.ones((ch,), jnp.float32),
            "bias": jnp.zeros((out_ch,), jnp.float32),
        },
    }


# ----------------------------------------------------------------------------
# Forward (matches MLP.forward semantics)
# ----------------------------------------------------------------------------
def mlp_forward(params, coords, hdbf, si=1.0, *, tile_hw=2048):
    # coords: (1, 2, H, W) NCHW; hdbf: list of 3 planes (B, latent_dim, Hp, Wp)
    assert hdbf is not None and len(hdbf) == 3
    b = hdbf[0].shape[0]
    _, c, h, w = coords.shape
    HW = h * w
    out_ch = params["torgb"]["weight"].shape[0]

    grid = jnp.transpose(jnp.tile(coords, (b, 1, 1, 1)), (0, 2, 3, 1))   # (B,H,W,2)
    sip_flat = jnp.full((b, HW, c), si, jnp.float32)                     # scale_inj_pixel
    scale_inj = jnp.full((b,), si, jnp.float32)

    style = time_mlp(params["time_mlp"], scale_inj)                      # (B, ch)

    def pe(plane):
        f = grid_sample_bilinear(plane, grid)                            # (B, HW, L)
        feat = jnp.concatenate([f, sip_flat], axis=-1)                   # (B, HW, L+c)
        pad = _LANE - feat.shape[-1]
        return jnp.pad(feat, ((0, 0), (0, 0), (0, pad))).astype(jnp.bfloat16)

    x0 = pe(hdbf[0])
    xm = pe(hdbf[1])
    xh = pe(hdbf[2])

    rgb = fused_decoder(params, x0, xm, xh, style, out_ch=out_ch,
                        tile_hw=tile_hw)                                 # (B,HW,128) bf16
    rgb = rgb[:, :, :out_ch].astype(jnp.float32)
    return jnp.transpose(rgb.reshape(b, h, w, out_ch), (0, 3, 1, 2))     # (B,3,H,W)


if __name__ == "__main__":
    key = jax.random.PRNGKey(0)
    kp, k0, k1, k2 = jax.random.split(key, 4)

    B, H, W = 2, 8, 8
    in_ch, latent_dim, out_ch, ch = 2, 64, 3, 256
    Hp = Wp = 16

    params = init_params(kp, in_ch=in_ch, latent_dim=latent_dim,
                         out_ch=out_ch, ch=ch)

    # regular coordinate grid in [-1, 1]; channel 0 = x (width), channel 1 = y (height)
    ys, xs = jnp.meshgrid(jnp.linspace(-1.0, 1.0, H), jnp.linspace(-1.0, 1.0, W),
                          indexing="ij")
    coords = jnp.stack([xs, ys], axis=0)[None].astype(jnp.float32)  # (1, 2, H, W)

    hdbf = [jax.random.normal(k, (B, latent_dim, Hp, Wp), jnp.float32)
            for k in (k0, k1, k2)]

    fwd = jax.jit(mlp_forward, static_argnames=("tile_hw",))
    out = fwd(params, coords, hdbf, 1.0)
    out = jax.block_until_ready(out)
    assert out.shape == (B, out_ch, H, W), out.shape
    assert bool(jnp.all(jnp.isfinite(out)))
    print("KERNEL_OK")
</pallas_src>

<mosaic_0001>
module attributes {stable_mosaic.version = 11 : i64} {
  func.func @_decoder_kernel(%arg0: i32, %arg1: i32, %arg2: memref<1x64x128xbf16, #tpu.memory_space<vmem>>, %arg3: memref<1x64x128xbf16, #tpu.memory_space<vmem>>, %arg4: memref<1x64x128xbf16, #tpu.memory_space<vmem>>, %arg5: memref<1x128x256xbf16, #tpu.memory_space<vmem>>, %arg6: memref<1x256xf32, #tpu.memory_space<vmem>>, %arg7: memref<1x256x256xbf16, #tpu.memory_space<vmem>>, %arg8: memref<1x256xf32, #tpu.memory_space<vmem>>, %arg9: memref<128x256xbf16, #tpu.memory_space<vmem>>, %arg10: memref<1x256x256xbf16, #tpu.memory_space<vmem>>, %arg11: memref<1x128x256xbf16, #tpu.memory_space<vmem>>, %arg12: memref<1x256xf32, #tpu.memory_space<vmem>>, %arg13: memref<1x256x256xbf16, #tpu.memory_space<vmem>>, %arg14: memref<1x256xf32, #tpu.memory_space<vmem>>, %arg15: memref<256x256xbf16, #tpu.memory_space<vmem>>, %arg16: memref<128x256xbf16, #tpu.memory_space<vmem>>, %arg17: memref<1x256x256xbf16, #tpu.memory_space<vmem>>, %arg18: memref<1x128x256xbf16, #tpu.memory_space<vmem>>, %arg19: memref<1x256xf32, #tpu.memory_space<vmem>>, %arg20: memref<1x256x256xbf16, #tpu.memory_space<vmem>>, %arg21: memref<1x256xf32, #tpu.memory_space<vmem>>, %arg22: memref<256x256xbf16, #tpu.memory_space<vmem>>, %arg23: memref<128x256xbf16, #tpu.memory_space<vmem>>, %arg24: memref<1x256x256xbf16, #tpu.memory_space<vmem>>, %arg25: memref<1x256xf32, #tpu.memory_space<vmem>>, %arg26: memref<1x256x256xbf16, #tpu.memory_space<vmem>>, %arg27: memref<1x256xf32, #tpu.memory_space<vmem>>, %arg28: memref<1x256x128xbf16, #tpu.memory_space<vmem>>, %arg29: memref<1x128xf32, #tpu.memory_space<vmem>>, %arg30: memref<1x64x128xbf16, #tpu.memory_space<vmem>>) attributes {dimension_semantics = [#tpu.dimension_semantics<parallel>, #tpu.dimension_semantics<parallel>], iteration_bounds = array<i64: 2, 1>, scalar_prefetch = 0 : i64, scratch_operands = 0 : i64, tpu.core_type = #tpu.core_type<tc>, window_params = [{transform_indices = @transform_0, window_bounds = array<i64: 1, 64, 128>}, {transform_indices = @transform_1, window_bounds = array<i64: 1, 64, 128>}, {transform_indices = @transform_2, window_bounds = array<i64: 1, 64, 128>}, {transform_indices = @transform_3, window_bounds = array<i64: 1, 128, 256>}, {pipeline_mode = #tpu.pipeline_mode<synchronous>, transform_indices = @transform_4, window_bounds = array<i64: 1, 256>}, {transform_indices = @transform_5, window_bounds = array<i64: 1, 256, 256>}, {pipeline_mode = #tpu.pipeline_mode<synchronous>, transform_indices = @transform_6, window_bounds = array<i64: 1, 256>}, {pipeline_mode = #tpu.pipeline_mode<synchronous>, transform_indices = @transform_7, window_bounds = array<i64: 128, 256>}, {transform_indices = @transform_8, window_bounds = array<i64: 1, 256, 256>}, {transform_indices = @transform_9, window_bounds = array<i64: 1, 128, 256>}, {pipeline_mode = #tpu.pipeline_mode<synchronous>, transform_indices = @transform_10, window_bounds = array<i64: 1, 256>}, {transform_indices = @transform_11, window_bounds = array<i64: 1, 256, 256>}, {pipeline_mode = #tpu.pipeline_mode<synchronous>, transform_indices = @transform_12, window_bounds = array<i64: 1, 256>}, {pipeline_mode = #tpu.pipeline_mode<synchronous>, transform_indices = @transform_13, window_bounds = array<i64: 256, 256>}, {pipeline_mode = #tpu.pipeline_mode<synchronous>, transform_indices = @transform_14, window_bounds = array<i64: 128, 256>}, {transform_indices = @transform_15, window_bounds = array<i64: 1, 256, 256>}, {transform_indices = @transform_16, window_bounds = array<i64: 1, 128, 256>}, {pipeline_mode = #tpu.pipeline_mode<synchronous>, transform_indices = @transform_17, window_bounds = array<i64: 1, 256>}, {transform_indices = @transform_18, window_bounds = array<i64: 1, 256, 256>}, {pipeline_mode = #tpu.pipeline_mode<synchronous>, transform_indices = @transform_19, window_bounds = array<i64: 1, 256>}, {pipeline_mode = #tpu.pipeline_mode<synchronous>, transform_indices = @transform_20, window_bounds = array<i64: 256, 256>}, {pipeline_mode = #tpu.pipeline_mode<synchronous>, transform_indices = @transform_21, window_bounds = array<i64: 128, 256>}, {transform_indices = @transform_22, window_bounds = array<i64: 1, 256, 256>}, {pipeline_mode = #tpu.pipeline_mode<synchronous>, transform_indices = @transform_23, window_bounds = array<i64: 1, 256>}, {transform_indices = @transform_24, window_bounds = array<i64: 1, 256, 256>}, {pipeline_mode = #tpu.pipeline_mode<synchronous>, transform_indices = @transform_25, window_bounds = array<i64: 1, 256>}, {transform_indices = @transform_26, window_bounds = array<i64: 1, 256, 128>}, {pipeline_mode = #tpu.pipeline_mode<synchronous>, transform_indices = @transform_27, window_bounds = array<i64: 1, 128>}, {transform_indices = @transform_28, window_bounds = array<i64: 1, 64, 128>}]} {
    %c0 = arith.constant 0 : index
    %c0_0 = arith.constant 0 : index
    %c0_1 = arith.constant 0 : index
    %0 = vector.load %arg2[%c0, %c0_0, %c0_1] : memref<1x64x128xbf16, #tpu.memory_space<vmem>>, vector<1x64x128xbf16>
    %1 = vector.shape_cast %0 : vector<1x64x128xbf16> to vector<64x128xbf16>
    %c0_2 = arith.constant 0 : index
    %c0_3 = arith.constant 0 : index
    %c0_4 = arith.constant 0 : index
    %2 = vector.load %arg3[%c0_2, %c0_3, %c0_4] : memref<1x64x128xbf16, #tpu.memory_space<vmem>>, vector<1x64x128xbf16>
    %3 = vector.shape_cast %2 : vector<1x64x128xbf16> to vector<64x128xbf16>
    %c0_5 = arith.constant 0 : index
    %c0_6 = arith.constant 0 : index
    %c0_7 = arith.constant 0 : index
    %4 = vector.load %arg4[%c0_5, %c0_6, %c0_7] : memref<1x64x128xbf16, #tpu.memory_space<vmem>>, vector<1x64x128xbf16>
    %5 = vector.shape_cast %4 : vector<1x64x128xbf16> to vector<64x128xbf16>
    %c0_8 = arith.constant 0 : index
    %c0_9 = arith.constant 0 : index
    %c0_10 = arith.constant 0 : index
    %6 = vector.load %arg5[%c0_8, %c0_9, %c0_10] : memref<1x128x256xbf16, #tpu.memory_space<vmem>>, vector<1x128x256xbf16>
    %7 = vector.shape_cast %6 : vector<1x128x256xbf16> to vector<128x256xbf16>
    %cst = arith.constant dense<0.000000e+00> : vector<64x256xf32>
    %8 = tpu.matmul %1, %7, %cst {dimension_numbers = #tpu.dot_dimension_numbers<[1], [0], [0], [1], [0, 0, 1, 1], [], []>} : vector<64x128xbf16>, vector<128x256xbf16>, vector<64x256xf32> -> vector<64x256xf32>
    %c0_11 = arith.constant 0 : index
    %c0_12 = arith.constant 0 : index
    %9 = vector.load %arg6[%c0_11, %c0_12] : memref<1x256xf32, #tpu.memory_space<vmem>>, vector<1x256xf32>
    %10 = vector.broadcast %9 : vector<1x256xf32> to vector<64x256xf32>
    %11 = arith.addf %8, %10 : vector<64x256xf32>
    %12 = arith.truncf %11 : vector<64x256xf32> to vector<64x256xbf16>
    %cst_13 = arith.constant 2.001950e-01 : bf16
    %13 = vector.broadcast %cst_13 : bf16 to vector<64x256xbf16>
    %14 = arith.mulf %12, %13 : vector<64x256xbf16>
    %15 = arith.maximumf %12, %14 : vector<64x256xbf16>
    %c0_14 = arith.constant 0 : index
    %c0_15 = arith.constant 0 : index
    %c0_16 = arith.constant 0 : index
    %16 = vector.load %arg7[%c0_14, %c0_15, %c0_16] : memref<1x256x256xbf16, #tpu.memory_space<vmem>>, vector<1x256x256xbf16>
    %17 = vector.shape_cast %16 : vector<1x256x256xbf16> to vector<256x256xbf16>
    %cst_17 = arith.constant dense<0.000000e+00> : vector<64x256xf32>
    %18 = tpu.matmul %15, %17, %cst_17 {dimension_numbers = #tpu.dot_dimension_numbers<[1], [0], [0], [1], [0, 0, 1, 1], [], []>} : vector<64x256xbf16>, vector<256x256xbf16>, vector<64x256xf32> -> vector<64x256xf32>
    %c0_18 = arith.constant 0 : index
    %c0_19 = arith.constant 0 : index
    %19 = vector.load %arg8[%c0_18, %c0_19] : memref<1x256xf32, #tpu.memory_space<vmem>>, vector<1x256xf32>
    %20 = vector.broadcast %19 : vector<1x256xf32> to vector<64x256xf32>
    %21 = arith.addf %18, %20 : vector<64x256xf32>
    %22 = arith.truncf %21 : vector<64x256xf32> to vector<64x256xbf16>
    %cst_20 = arith.constant 2.001950e-01 : bf16
    %23 = vector.broadcast %cst_20 : bf16 to vector<64x256xbf16>
    %24 = arith.mulf %22, %23 : vector<64x256xbf16>
    %25 = arith.maximumf %22, %24 : vector<64x256xbf16>
    %c0_21 = arith.constant 0 : index
    %c0_22 = arith.constant 0 : index
    %26 = vector.load %arg9[%c0_21, %c0_22] : memref<128x256xbf16, #tpu.memory_space<vmem>>, vector<128x256xbf16>
    %cst_23 = arith.constant dense<0.000000e+00> : vector<64x256xf32>
    %27 = tpu.matmul %1, %26, %cst_23 {dimension_numbers = #tpu.dot_dimension_numbers<[1], [0], [0], [1], [0, 0, 1, 1], [], []>} : vector<64x128xbf16>, vector<128x256xbf16>, vector<64x256xf32> -> vector<64x256xf32>
    %28 = arith.truncf %27 : vector<64x256xf32> to vector<64x256xbf16>
    %29 = arith.addf %25, %28 : vector<64x256xbf16>
    %c0_24 = arith.constant 0 : index
    %c0_25 = arith.constant 0 : index
    %c0_26 = arith.constant 0 : index
    %30 = vector.load %arg10[%c0_24, %c0_25, %c0_26] : memref<1x256x256xbf16, #tpu.memory_space<vmem>>, vector<1x256x256xbf16>
    %31 = vector.shape_cast %30 : vector<1x256x256xbf16> to vector<256x256xbf16>
    %cst_27 = arith.constant dense<0.000000e+00> : vector<64x256xf32>
    %32 = tpu.matmul %29, %31, %cst_27 {dimension_numbers = #tpu.dot_dimension_numbers<[1], [0], [0], [1], [0, 0, 1, 1], [], []>} : vector<64x256xbf16>, vector<256x256xbf16>, vector<64x256xf32> -> vector<64x256xf32>
    %c0_28 = arith.constant 0 : index
    %c0_29 = arith.constant 0 : index
    %c0_30 = arith.constant 0 : index
    %33 = vector.load %arg11[%c0_28, %c0_29, %c0_30] : memref<1x128x256xbf16, #tpu.memory_space<vmem>>, vector<1x128x256xbf16>
    %34 = vector.shape_cast %33 : vector<1x128x256xbf16> to vector<128x256xbf16>
    %cst_31 = arith.constant dense<0.000000e+00> : vector<64x256xf32>
    %35 = tpu.matmul %3, %34, %cst_31 {dimension_numbers = #tpu.dot_dimension_numbers<[1], [0], [0], [1], [0, 0, 1, 1], [], []>} : vector<64x128xbf16>, vector<128x256xbf16>, vector<64x256xf32> -> vector<64x256xf32>
    %36 = arith.addf %32, %35 : vector<64x256xf32>
    %c0_32 = arith.constant 0 : index
    %c0_33 = arith.constant 0 : index
    %37 = vector.load %arg12[%c0_32, %c0_33] : memref<1x256xf32, #tpu.memory_space<vmem>>, vector<1x256xf32>
    %38 = vector.broadcast %37 : vector<1x256xf32> to vector<64x256xf32>
    %39 = arith.addf %36, %38 : vector<64x256xf32>
    %40 = arith.truncf %39 : vector<64x256xf32> to vector<64x256xbf16>
    %cst_34 = arith.constant 2.001950e-01 : bf16
    %41 = vector.broadcast %cst_34 : bf16 to vector<64x256xbf16>
    %42 = arith.mulf %40, %41 : vector<64x256xbf16>
    %43 = arith.maximumf %40, %42 : vector<64x256xbf16>
    %c0_35 = arith.constant 0 : index
    %c0_36 = arith.constant 0 : index
    %c0_37 = arith.constant 0 : index
    %44 = vector.load %arg13[%c0_35, %c0_36, %c0_37] : memref<1x256x256xbf16, #tpu.memory_space<vmem>>, vector<1x256x256xbf16>
    %45 = vector.shape_cast %44 : vector<1x256x256xbf16> to vector<256x256xbf16>
    %cst_38 = arith.constant dense<0.000000e+00> : vector<64x256xf32>
    %46 = tpu.matmul %43, %45, %cst_38 {dimension_numbers = #tpu.dot_dimension_numbers<[1], [0], [0], [1], [0, 0, 1, 1], [], []>} : vector<64x256xbf16>, vector<256x256xbf16>, vector<64x256xf32> -> vector<64x256xf32>
    %c0_39 = arith.constant 0 : index
    %c0_40 = arith.constant 0 : index
    %47 = vector.load %arg14[%c0_39, %c0_40] : memref<1x256xf32, #tpu.memory_space<vmem>>, vector<1x256xf32>
    %48 = vector.broadcast %47 : vector<1x256xf32> to vector<64x256xf32>
    %49 = arith.addf %46, %48 : vector<64x256xf32>
    %50 = arith.truncf %49 : vector<64x256xf32> to vector<64x256xbf16>
    %cst_41 = arith.constant 2.001950e-01 : bf16
    %51 = vector.broadcast %cst_41 : bf16 to vector<64x256xbf16>
    %52 = arith.mulf %50, %51 : vector<64x256xbf16>
    %53 = arith.maximumf %50, %52 : vector<64x256xbf16>
    %c0_42 = arith.constant 0 : index
    %c0_43 = arith.constant 0 : index
    %54 = vector.load %arg15[%c0_42, %c0_43] : memref<256x256xbf16, #tpu.memory_space<vmem>>, vector<256x256xbf16>
    %cst_44 = arith.constant dense<0.000000e+00> : vector<64x256xf32>
    %55 = tpu.matmul %29, %54, %cst_44 {dimension_numbers = #tpu.dot_dimension_numbers<[1], [0], [0], [1], [0, 0, 1, 1], [], []>} : vector<64x256xbf16>, vector<256x256xbf16>, vector<64x256xf32> -> vector<64x256xf32>
    %c0_45 = arith.constant 0 : index
    %c0_46 = arith.constant 0 : index
    %56 = vector.load %arg16[%c0_45, %c0_46] : memref<128x256xbf16, #tpu.memory_space<vmem>>, vector<128x256xbf16>
    %cst_47 = arith.constant dense<0.000000e+00> : vector<64x256xf32>
    %57 = tpu.matmul %3, %56, %cst_47 {dimension_numbers = #tpu.dot_dimension_numbers<[1], [0], [0], [1], [0, 0, 1, 1], [], []>} : vector<64x128xbf16>, vector<128x256xbf16>, vector<64x256xf32> -> vector<64x256xf32>
    %58 = arith.addf %55, %57 : vector<64x256xf32>
    %59 = arith.truncf %58 : vector<64x256xf32> to vector<64x256xbf16>
    %60 = arith.addf %53, %59 : vector<64x256xbf16>
    %c0_48 = arith.constant 0 : index
    %c0_49 = arith.constant 0 : index
    %c0_50 = arith.constant 0 : index
    %61 = vector.load %arg17[%c0_48, %c0_49, %c0_50] : memref<1x256x256xbf16, #tpu.memory_space<vmem>>, vector<1x256x256xbf16>
    %62 = vector.shape_cast %61 : vector<1x256x256xbf16> to vector<256x256xbf16>
    %cst_51 = arith.constant dense<0.000000e+00> : vector<64x256xf32>
    %63 = tpu.matmul %60, %62, %cst_51 {dimension_numbers = #tpu.dot_dimension_numbers<[1], [0], [0], [1], [0, 0, 1, 1], [], []>} : vector<64x256xbf16>, vector<256x256xbf16>, vector<64x256xf32> -> vector<64x256xf32>
    %c0_52 = arith.constant 0 : index
    %c0_53 = arith.constant 0 : index
    %c0_54 = arith.constant 0 : index
    %64 = vector.load %arg18[%c0_52, %c0_53, %c0_54] : memref<1x128x256xbf16, #tpu.memory_space<vmem>>, vector<1x128x256xbf16>
    %65 = vector.shape_cast %64 : vector<1x128x256xbf16> to vector<128x256xbf16>
    %cst_55 = arith.constant dense<0.000000e+00> : vector<64x256xf32>
    %66 = tpu.matmul %5, %65, %cst_55 {dimension_numbers = #tpu.dot_dimension_numbers<[1], [0], [0], [1], [0, 0, 1, 1], [], []>} : vector<64x128xbf16>, vector<128x256xbf16>, vector<64x256xf32> -> vector<64x256xf32>
    %67 = arith.addf %63, %66 : vector<64x256xf32>
    %c0_56 = arith.constant 0 : index
    %c0_57 = arith.constant 0 : index
    %68 = vector.load %arg19[%c0_56, %c0_57] : memref<1x256xf32, #tpu.memory_space<vmem>>, vector<1x256xf32>
    %69 = vector.broadcast %68 : vector<1x256xf32> to vector<64x256xf32>
    %70 = arith.addf %67, %69 : vector<64x256xf32>
    %71 = arith.truncf %70 : vector<64x256xf32> to vector<64x256xbf16>
    %cst_58 = arith.constant 2.001950e-01 : bf16
    %72 = vector.broadcast %cst_58 : bf16 to vector<64x256xbf16>
    %73 = arith.mulf %71, %72 : vector<64x256xbf16>
    %74 = arith.maximumf %71, %73 : vector<64x256xbf16>
    %c0_59 = arith.constant 0 : index
    %c0_60 = arith.constant 0 : index
    %c0_61 = arith.constant 0 : index
    %75 = vector.load %arg20[%c0_59, %c0_60, %c0_61] : memref<1x256x256xbf16, #tpu.memory_space<vmem>>, vector<1x256x256xbf16>
    %76 = vector.shape_cast %75 : vector<1x256x256xbf16> to vector<256x256xbf16>
    %cst_62 = arith.constant dense<0.000000e+00> : vector<64x256xf32>
    %77 = tpu.matmul %74, %76, %cst_62 {dimension_numbers = #tpu.dot_dimension_numbers<[1], [0], [0], [1], [0, 0, 1, 1], [], []>} : vector<64x256xbf16>, vector<256x256xbf16>, vector<64x256xf32> -> vector<64x256xf32>
    %c0_63 = arith.constant 0 : index
    %c0_64 = arith.constant 0 : index
    %78 = vector.load %arg21[%c0_63, %c0_64] : memref<1x256xf32, #tpu.memory_space<vmem>>, vector<1x256xf32>
    %79 = vector.broadcast %78 : vector<1x256xf32> to vector<64x256xf32>
    %80 = arith.addf %77, %79 : vector<64x256xf32>
    %81 = arith.truncf %80 : vector<64x256xf32> to vector<64x256xbf16>
    %cst_65 = arith.constant 2.001950e-01 : bf16
    %82 = vector.broadcast %cst_65 : bf16 to vector<64x256xbf16>
    %83 = arith.mulf %81, %82 : vector<64x256xbf16>
    %84 = arith.maximumf %81, %83 : vector<64x256xbf16>
    %c0_66 = arith.constant 0 : index
    %c0_67 = arith.constant 0 : index
    %85 = vector.load %arg22[%c0_66, %c0_67] : memref<256x256xbf16, #tpu.memory_space<vmem>>, vector<256x256xbf16>
    %cst_68 = arith.constant dense<0.000000e+00> : vector<64x256xf32>
    %86 = tpu.matmul %60, %85, %cst_68 {dimension_numbers = #tpu.dot_dimension_numbers<[1], [0], [0], [1], [0, 0, 1, 1], [], []>} : vector<64x256xbf16>, vector<256x256xbf16>, vector<64x256xf32> -> vector<64x256xf32>
    %c0_69 = arith.constant 0 : index
    %c0_70 = arith.constant 0 : index
    %87 = vector.load %arg23[%c0_69, %c0_70] : memref<128x256xbf16, #tpu.memory_space<vmem>>, vector<128x256xbf16>
    %cst_71 = arith.constant dense<0.000000e+00> : vector<64x256xf32>
    %88 = tpu.matmul %5, %87, %cst_71 {dimension_numbers = #tpu.dot_dimension_numbers<[1], [0], [0], [1], [0, 0, 1, 1], [], []>} : vector<64x128xbf16>, vector<128x256xbf16>, vector<64x256xf32> -> vector<64x256xf32>
    %89 = arith.addf %86, %88 : vector<64x256xf32>
    %90 = arith.truncf %89 : vector<64x256xf32> to vector<64x256xbf16>
    %91 = arith.addf %84, %90 : vector<64x256xbf16>
    %c0_72 = arith.constant 0 : index
    %c0_73 = arith.constant 0 : index
    %c0_74 = arith.constant 0 : index
    %92 = vector.load %arg24[%c0_72, %c0_73, %c0_74] : memref<1x256x256xbf16, #tpu.memory_space<vmem>>, vector<1x256x256xbf16>
    %93 = vector.shape_cast %92 : vector<1x256x256xbf16> to vector<256x256xbf16>
    %cst_75 = arith.constant dense<0.000000e+00> : vector<64x256xf32>
    %94 = tpu.matmul %91, %93, %cst_75 {dimension_numbers = #tpu.dot_dimension_numbers<[1], [0], [0], [1], [0, 0, 1, 1], [], []>} : vector<64x256xbf16>, vector<256x256xbf16>, vector<64x256xf32> -> vector<64x256xf32>
    %c0_76 = arith.constant 0 : index
    %c0_77 = arith.constant 0 : index
    %95 = vector.load %arg25[%c0_76, %c0_77] : memref<1x256xf32, #tpu.memory_space<vmem>>, vector<1x256xf32>
    %96 = vector.broadcast %95 : vector<1x256xf32> to vector<64x256xf32>
    %97 = arith.addf %94, %96 : vector<64x256xf32>
    %98 = arith.truncf %97 : vector<64x256xf32> to vector<64x256xbf16>
    %cst_78 = arith.constant 2.001950e-01 : bf16
    %99 = vector.broadcast %cst_78 : bf16 to vector<64x256xbf16>
    %100 = arith.mulf %98, %99 : vector<64x256xbf16>
    %101 = arith.maximumf %98, %100 : vector<64x256xbf16>
    %c0_79 = arith.constant 0 : index
    %c0_80 = arith.constant 0 : index
    %c0_81 = arith.constant 0 : index
    %102 = vector.load %arg26[%c0_79, %c0_80, %c0_81] : memref<1x256x256xbf16, #tpu.memory_space<vmem>>, vector<1x256x256xbf16>
    %103 = vector.shape_cast %102 : vector<1x256x256xbf16> to vector<256x256xbf16>
    %cst_82 = arith.constant dense<0.000000e+00> : vector<64x256xf32>
    %104 = tpu.matmul %101, %103, %cst_82 {dimension_numbers = #tpu.dot_dimension_numbers<[1], [0], [0], [1], [0, 0, 1, 1], [], []>} : vector<64x256xbf16>, vector<256x256xbf16>, vector<64x256xf32> -> vector<64x256xf32>
    %c0_83 = arith.constant 0 : index
    %c0_84 = arith.constant 0 : index
    %105 = vector.load %arg27[%c0_83, %c0_84] : memref<1x256xf32, #tpu.memory_space<vmem>>, vector<1x256xf32>
    %106 = vector.broadcast %105 : vector<1x256xf32> to vector<64x256xf32>
    %107 = arith.addf %104, %106 : vector<64x256xf32>
    %108 = arith.truncf %107 : vector<64x256xf32> to vector<64x256xbf16>
    %cst_85 = arith.constant 2.001950e-01 : bf16
    %109 = vector.broadcast %cst_85 : bf16 to vector<64x256xbf16>
    %110 = arith.mulf %108, %109 : vector<64x256xbf16>
    %111 = arith.maximumf %108, %110 : vector<64x256xbf16>
    %cst_86 = arith.constant 7.070310e-01 : bf16
    %112 = vector.broadcast %cst_86 : bf16 to vector<64x256xbf16>
    %113 = arith.mulf %91, %112 : vector<64x256xbf16>
    %114 = arith.addf %111, %113 : vector<64x256xbf16>
    %c0_87 = arith.constant 0 : index
    %c0_88 = arith.constant 0 : index
    %c0_89 = arith.constant 0 : index
    %115 = vector.load %arg28[%c0_87, %c0_88, %c0_89] : memref<1x256x128xbf16, #tpu.memory_space<vmem>>, vector<1x256x128xbf16>
    %116 = vector.shape_cast %115 : vector<1x256x128xbf16> to vector<256x128xbf16>
    %cst_90 = arith.constant dense<0.000000e+00> : vector<64x128xf32>
    %117 = tpu.matmul %114, %116, %cst_90 {dimension_numbers = #tpu.dot_dimension_numbers<[1], [0], [0], [1], [0, 0, 1, 1], [], []>} : vector<64x256xbf16>, vector<256x128xbf16>, vector<64x128xf32> -> vector<64x128xf32>
    %c0_91 = arith.constant 0 : index
    %c0_92 = arith.constant 0 : index
    %118 = vector.load %arg29[%c0_91, %c0_92] : memref<1x128xf32, #tpu.memory_space<vmem>>, vector<1x128xf32>
    %119 = vector.broadcast %118 : vector<1x128xf32> to vector<64x128xf32>
    %120 = arith.addf %117, %119 : vector<64x128xf32>
    %121 = arith.truncf %120 : vector<64x128xf32> to vector<64x128xbf16>
    %c0_93 = arith.constant 0 : index
    %c0_94 = arith.constant 0 : index
    %c0_95 = arith.constant 0 : index
    %122 = vector.load %arg30[%c0_93, %c0_94, %c0_95] : memref<1x64x128xbf16, #tpu.memory_space<vmem>>, vector<1x64x128xbf16>
    %123 = vector.shape_cast %122 : vector<1x64x128xbf16> to vector<64x128xbf16>
    %124 = vector.shape_cast %121 : vector<64x128xbf16> to vector<1x64x128xbf16>
    tpu.vector_store %arg30[%c0_93, %c0_94, %c0_95], %124 {strides = array<i32>} : memref<1x64x128xbf16, #tpu.memory_space<vmem>>, vector<1x64x128xbf16>,
    return
  }
  func.func @transform_0(%arg0: i32, %arg1: i32) -> (i32, i32, i32) {
    %c0_i32 = arith.constant 0 : i32
    %c0_i32_0 = arith.constant 0 : i32
    return %arg0, %arg1, %c0_i32 : i32, i32, i32
  }
  func.func @transform_1(%arg0: i32, %arg1: i32) -> (i32, i32, i32) {
    %c0_i32 = arith.constant 0 : i32
    %c0_i32_0 = arith.constant 0 : i32
    return %arg0, %arg1, %c0_i32 : i32, i32, i32
  }
  func.func @transform_2(%arg0: i32, %arg1: i32) -> (i32, i32, i32) {
    %c0_i32 = arith.constant 0 : i32
    %c0_i32_0 = arith.constant 0 : i32
    return %arg0, %arg1, %c0_i32 : i32, i32, i32
  }
  func.func @transform_3(%arg0: i32, %arg1: i32) -> (i32, i32, i32) {
    %c0_i32 = arith.constant 0 : i32
    %c0_i32_0 = arith.constant 0 : i32
    %c0_i32_1 = arith.constant 0 : i32
    return %arg0, %c0_i32, %c0_i32_0 : i32, i32, i32
  }
  func.func @transform_4(%arg0: i32, %arg1: i32) -> (i32, i32) {
    %c0_i32 = arith.constant 0 : i32
    %c0_i32_0 = arith.constant 0 : i32
    %c0_i32_1 = arith.constant 0 : i32
    return %c0_i32, %c0_i32_0 : i32, i32
  }
  func.func @transform_5(%arg0: i32, %arg1: i32) -> (i32, i32, i32) {
    %c0_i32 = arith.constant 0 : i32
    %c0_i32_0 = arith.constant 0 : i32
    %c0_i32_1 = arith.constant 0 : i32
    return %arg0, %c0_i32, %c0_i32_0 : i32, i32, i32
  }
  func.func @transform_6(%arg0: i32, %arg1: i32) -> (i32, i32) {
    %c0_i32 = arith.constant 0 : i32
    %c0_i32_0 = arith.constant 0 : i32
    %c0_i32_1 = arith.constant 0 : i32
    return %c0_i32, %c0_i32_0 : i32, i32
  }
  func.func @transform_7(%arg0: i32, %arg1: i32) -> (i32, i32) {
    %c0_i32 = arith.constant 0 : i32
    %c0_i32_0 = arith.constant 0 : i32
    %c0_i32_1 = arith.constant 0 : i32
    return %c0_i32, %c0_i32_0 : i32, i32
  }
  func.func @transform_8(%arg0: i32, %arg1: i32) -> (i32, i32, i32) {
    %c0_i32 = arith.constant 0 : i32
    %c0_i32_0 = arith.constant 0 : i32
    %c0_i32_1 = arith.constant 0 : i32
    return %arg0, %c0_i32, %c0_i32_0 : i32, i32, i32
  }
  func.func @transform_9(%arg0: i32, %arg1: i32) -> (i32, i32, i32) {
    %c0_i32 = arith.constant 0 : i32
    %c0_i32_0 = arith.constant 0 : i32
    %c0_i32_1 = arith.constant 0 : i32
    return %arg0, %c0_i32, %c0_i32_0 : i32, i32, i32
  }
  func.func @transform_10(%arg0: i32, %arg1: i32) -> (i32, i32) {
    %c0_i32 = arith.constant 0 : i32
    %c0_i32_0 = arith.constant 0 : i32
    %c0_i32_1 = arith.constant 0 : i32
    return %c0_i32, %c0_i32_0 : i32, i32
  }
  func.func @transform_11(%arg0: i32, %arg1: i32) -> (i32, i32, i32) {
    %c0_i32 = arith.constant 0 : i32
    %c0_i32_0 = arith.constant 0 : i32
    %c0_i32_1 = arith.constant 0 : i32
    return %arg0, %c0_i32, %c0_i32_0 : i32, i32, i32
  }
  func.func @transform_12(%arg0: i32, %arg1: i32) -> (i32, i32) {
    %c0_i32 = arith.constant 0 : i32
    %c0_i32_0 = arith.constant 0 : i32
    %c0_i32_1 = arith.constant 0 : i32
    return %c0_i32, %c0_i32_0 : i32, i32
  }
  func.func @transform_13(%arg0: i32, %arg1: i32) -> (i32, i32) {
    %c0_i32 = arith.constant 0 : i32
    %c0_i32_0 = arith.constant 0 : i32
    %c0_i32_1 = arith.constant 0 : i32
    return %c0_i32, %c0_i32_0 : i32, i32
  }
  func.func @transform_14(%arg0: i32, %arg1: i32) -> (i32, i32) {
    %c0_i32 = arith.constant 0 : i32
    %c0_i32_0 = arith.constant 0 : i32
    %c0_i32_1 = arith.constant 0 : i32
    return %c0_i32, %c0_i32_0 : i32, i32
  }
  func.func @transform_15(%arg0: i32, %arg1: i32) -> (i32, i32, i32) {
    %c0_i32 = arith.constant 0 : i32
    %c0_i32_0 = arith.constant 0 : i32
    %c0_i32_1 = arith.constant 0 : i32
    return %arg0, %c0_i32, %c0_i32_0 : i32, i32, i32
  }
  func.func @transform_16(%arg0: i32, %arg1: i32) -> (i32, i32, i32) {
    %c0_i32 = arith.constant 0 : i32
    %c0_i32_0 = arith.constant 0 : i32
    %c0_i32_1 = arith.constant 0 : i32
    return %arg0, %c0_i32, %c0_i32_0 : i32, i32, i32
  }
  func.func @transform_17(%arg0: i32, %arg1: i32) -> (i32, i32) {
    %c0_i32 = arith.constant 0 : i32
    %c0_i32_0 = arith.constant 0 : i32
    %c0_i32_1 = arith.constant 0 : i32
    return %c0_i32, %c0_i32_0 : i32, i32
  }
  func.func @transform_18(%arg0: i32, %arg1: i32) -> (i32, i32, i32) {
    %c0_i32 = arith.constant 0 : i32
    %c0_i32_0 = arith.constant 0 : i32
    %c0_i32_1 = arith.constant 0 : i32
    return %arg0, %c0_i32, %c0_i32_0 : i32, i32, i32
  }
  func.func @transform_19(%arg0: i32, %arg1: i32) -> (i32, i32) {
    %c0_i32 = arith.constant 0 : i32
    %c0_i32_0 = arith.constant 0 : i32
    %c0_i32_1 = arith.constant 0 : i32
    return %c0_i32, %c0_i32_0 : i32, i32
  }
  func.func @transform_20(%arg0: i32, %arg1: i32) -> (i32, i32) {
    %c0_i32 = arith.constant 0 : i32
    %c0_i32_0 = arith.constant 0 : i32
    %c0_i32_1 = arith.constant 0 : i32
    return %c0_i32, %c0_i32_0 : i32, i32
  }
  func.func @transform_21(%arg0: i32, %arg1: i32) -> (i32, i32) {
    %c0_i32 = arith.constant 0 : i32
    %c0_i32_0 = arith.constant 0 : i32
    %c0_i32_1 = arith.constant 0 : i32
    return %c0_i32, %c0_i32_0 : i32, i32
  }
  func.func @transform_22(%arg0: i32, %arg1: i32) -> (i32, i32, i32) {
    %c0_i32 = arith.constant 0 : i32
    %c0_i32_0 = arith.constant 0 : i32
    %c0_i32_1 = arith.constant 0 : i32
    return %arg0, %c0_i32, %c0_i32_0 : i32, i32, i32
  }
  func.func @transform_23(%arg0: i32, %arg1: i32) -> (i32, i32) {
    %c0_i32 = arith.constant 0 : i32
    %c0_i32_0 = arith.constant 0 : i32
    %c0_i32_1 = arith.constant 0 : i32
    return %c0_i32, %c0_i32_0 : i32, i32
  }
  func.func @transform_24(%arg0: i32, %arg1: i32) -> (i32, i32, i32) {
    %c0_i32 = arith.constant 0 : i32
    %c0_i32_0 = arith.constant 0 : i32
    %c0_i32_1 = arith.constant 0 : i32
    return %arg0, %c0_i32, %c0_i32_0 : i32, i32, i32
  }
  func.func @transform_25(%arg0: i32, %arg1: i32) -> (i32, i32) {
    %c0_i32 = arith.constant 0 : i32
    %c0_i32_0 = arith.constant 0 : i32
    %c0_i32_1 = arith.constant 0 : i32
    return %c0_i32, %c0_i32_0 : i32, i32
  }
  func.func @transform_26(%arg0: i32, %arg1: i32) -> (i32, i32, i32) {
    %c0_i32 = arith.constant 0 : i32
    %c0_i32_0 = arith.constant 0 : i32
    %c0_i32_1 = arith.constant 0 : i32
    return %arg0, %c0_i32, %c0_i32_0 : i32, i32, i32
  }
  func.func @transform_27(%arg0: i32, %arg1: i32) -> (i32, i32) {
    %c0_i32 = arith.constant 0 : i32
    %c0_i32_0 = arith.constant 0 : i32
    %c0_i32_1 = arith.constant 0 : i32
    return %c0_i32, %c0_i32_0 : i32, i32
  }
  func.func @transform_28(%arg0: i32, %arg1: i32) -> (i32, i32, i32) {
    %c0_i32 = arith.constant 0 : i32
    %c0_i32_0 = arith.constant 0 : i32
    return %arg0, %arg1, %c0_i32 : i32, i32, i32
  }
}

</mosaic_0001>

<llo_original>
// kernel: mlp_forward.1
$region0: #{mlp_forward.1}
  #allocation0 [shape = 'u32[]', space=smem, size = 0x4, offset = 0x4, fixed_abs, tag = 'smem constant byte address 0x4 - core index']
  #allocation1 [shape = 'u32[72,128]{1,0:T(1,128)}', space=vmem, size = 0x9000, scoped, tag = 'internal scratch']
  %s0 = inlined_call_operand.vmem [shape: bf16[2,64,128], index: 0, kind: input, shape index: {}]
  %s1 = inlined_call_operand.vmem [shape: bf16[2,64,128], index: 1, kind: input, shape index: {}]
  %s2 = inlined_call_operand.vmem [shape: bf16[2,64,128], index: 2, kind: input, shape index: {}]
  %s3 = inlined_call_operand.vmem [shape: bf16[2,128,256], index: 3, kind: input, shape index: {}]
  %s4 = inlined_call_operand.vmem [shape: f32[1,256], index: 4, kind: input, shape index: {}]
  %s5 = inlined_call_operand.vmem [shape: bf16[2,256,256], index: 5, kind: input, shape index: {}]
  %s6 = inlined_call_operand.vmem [shape: f32[1,256], index: 6, kind: input, shape index: {}]
  %s7 = inlined_call_operand.vmem [shape: bf16[128,256], index: 7, kind: input, shape index: {}]
  %s8 = inlined_call_operand.vmem [shape: bf16[2,256,256], index: 8, kind: input, shape index: {}]
  %s9 = inlined_call_operand.vmem [shape: bf16[2,128,256], index: 9, kind: input, shape index: {}]
  %s10 = inlined_call_operand.vmem [shape: f32[1,256], index: 10, kind: input, shape index: {}]
  %s11 = inlined_call_operand.vmem [shape: bf16[2,256,256], index: 11, kind: input, shape index: {}]
  %s12 = inlined_call_operand.vmem [shape: f32[1,256], index: 12, kind: input, shape index: {}]
  %s13 = inlined_call_operand.vmem [shape: bf16[256,256], index: 13, kind: input, shape index: {}]
  %s14 = inlined_call_operand.vmem [shape: bf16[128,256], index: 14, kind: input, shape index: {}]
  %s15 = inlined_call_operand.vmem [shape: bf16[2,256,256], index: 15, kind: input, shape index: {}]
  %s16 = inlined_call_operand.vmem [shape: bf16[2,128,256], index: 16, kind: input, shape index: {}]
  %s17 = inlined_call_operand.vmem [shape: f32[1,256], index: 17, kind: input, shape index: {}]
  %s18 = inlined_call_operand.vmem [shape: bf16[2,256,256], index: 18, kind: input, shape index: {}]
  %s19 = inlined_call_operand.vmem [shape: f32[1,256], index: 19, kind: input, shape index: {}]
  %s20 = inlined_call_operand.vmem [shape: bf16[256,256], index: 20, kind: input, shape index: {}]
  %s21 = inlined_call_operand.vmem [shape: bf16[128,256], index: 21, kind: input, shape index: {}]
  %s22 = inlined_call_operand.vmem [shape: bf16[2,256,256], index: 22, kind: input, shape index: {}]
  %s23 = inlined_call_operand.vmem [shape: f32[1,256], index: 23, kind: input, shape index: {}]
  %s24 = inlined_call_operand.vmem [shape: bf16[2,256,256], index: 24, kind: input, shape index: {}]
  %s25 = inlined_call_operand.vmem [shape: f32[1,256], index: 25, kind: input, shape index: {}]
  %s26 = inlined_call_operand.vmem [shape: bf16[2,256,128], index: 26, kind: input, shape index: {}]
  %s27 = inlined_call_operand.vmem [shape: f32[1,128], index: 27, kind: input, shape index: {}]
  %s28 = inlined_call_operand.vmem [shape: bf16[2,64,128], index: 28, kind: output, shape index: {}]
  %s29 = sld [smem:[#allocation0]]
  $region145: #{mlp_forward.1} parent=0
    _
  %s31 = ssub.s32 1, %s29
  %s32 = scalar_select 0, %s31, %s29
  loop: start=0, step=1, limit=4
  $region2: #{mlp_forward.1} parent=0 // loop_pre_header
    _
  $region3: #{mlp_forward.1} parent=0 // loop_header
    %s34 = sphi 0, %s38
    %p35 = scmp.ge.s32.totalorder %s34, 4
    %s41 = sphi 0, %s53
    %s42 = sphi 0, %s49
    %s43 = sphi 0, %s41
    %s44 = sphi 0, %s42
    %s45 = sphi 0, %s43
    %s46 = sphi 0, %s44
    %s58 = sphi 0, %s60
    %s61 = sphi 0, %s58
    %s62 = sphi 0, %s61
    %s78 = sphi 0, %s62
    %s86 = sphi 0, %s88
    %s89 = sphi 0, %s86
    %s90 = sphi 0, %s89
    %s106 = sphi 0, %s90
    %s114 = sphi 0, %s116
    %s117 = sphi 0, %s114
    %s118 = sphi 0, %s117
    %s134 = sphi 0, %s118
    %s140 = sphi 0, %s142
    %s143 = sphi 0, %s140
    %s144 = sphi 0, %s143
    %s160 = sphi 0, %s144
    %s164 = sphi 0, %s164
    %s166 = sphi 0, %s164
    %s167 = sphi 0, %s166
    %s181 = sphi 0, %s167
    %s187 = sphi 0, %s189
    %s190 = sphi 0, %s187
    %s191 = sphi 0, %s190
    %s207 = sphi 0, %s191
    %s211 = sphi 0, %s211
    %s213 = sphi 0, %s211
    %s214 = sphi 0, %s213
    %s228 = sphi 0, %s214
    %s232 = sphi 0, %s232
    %s234 = sphi 0, %s232
    %s235 = sphi 0, %s234
    %s249 = sphi 0, %s235
    %s255 = sphi 0, %s257
    %s258 = sphi 0, %s255
    %s259 = sphi 0, %s258
    %s275 = sphi 0, %s259
    %s281 = sphi 0, %s283
    %s284 = sphi 0, %s281
    %s285 = sphi 0, %s284
    %s301 = sphi 0, %s285
    %s305 = sphi 0, %s305
    %s307 = sphi 0, %s305
    %s308 = sphi 0, %s307
    %s322 = sphi 0, %s308
    %s328 = sphi 0, %s330
    %s331 = sphi 0, %s328
    %s332 = sphi 0, %s331
    %s348 = sphi 0, %s332
    %s352 = sphi 0, %s352
    %s354 = sphi 0, %s352
    %s355 = sphi 0, %s354
    %s369 = sphi 0, %s355
    %s373 = sphi 0, %s373
    %s375 = sphi 0, %s373
    %s376 = sphi 0, %s375
    %s390 = sphi 0, %s376
    %s394 = sphi 0, %s394
    %s396 = sphi 0, %s394
    %s397 = sphi 0, %s396
    %s411 = sphi 0, %s397
    %s417 = sphi 0, %s419
    %s420 = sphi 0, %s417
    %s421 = sphi 0, %s420
    %s437 = sphi 0, %s421
    %s443 = sphi 0, %s445
    %s446 = sphi 0, %s443
    %s447 = sphi 0, %s446
    %s463 = sphi 0, %s447
    %s467 = sphi 0, %s467
    %s469 = sphi 0, %s467
    %s470 = sphi 0, %s469
    %s484 = sphi 0, %s470
    %s490 = sphi 0, %s492
    %s493 = sphi 0, %s490
    %s494 = sphi 0, %s493
    %s510 = sphi 0, %s494
    %s514 = sphi 0, %s514
    %s516 = sphi 0, %s514
    %s517 = sphi 0, %s516
    %s531 = sphi 0, %s517
    %s535 = sphi 0, %s535
    %s537 = sphi 0, %s535
    %s538 = sphi 0, %s537
    %s552 = sphi 0, %s538
    %s556 = sphi 0, %s556
    %s558 = sphi 0, %s556
    %s559 = sphi 0, %s558
    %s573 = sphi 0, %s559
    %s579 = sphi 0, %s581
    %s582 = sphi 0, %s579
    %s583 = sphi 0, %s582
    %s599 = sphi 0, %s583
    %s603 = sphi 0, %s603
    %s605 = sphi 0, %s603
    %s606 = sphi 0, %s605
    %s620 = sphi 0, %s606
    %s626 = sphi 0, %s628
    %s629 = sphi 0, %s626
    %s630 = sphi 0, %s629
    %s646 = sphi 0, %s630
    %s650 = sphi 0, %s650
    %s652 = sphi 0, %s650
    %s653 = sphi 0, %s652
    %s667 = sphi 0, %s653
    %s673 = sphi 0, %s675
    %s676 = sphi 0, %s673
    %s677 = sphi 0, %s676
    %s693 = sphi 0, %s677
    %s697 = sphi 0, %s697
    %s699 = sphi 0, %s697
    %s700 = sphi 0, %s699
    %s714 = sphi 0, %s700
    %s722 = sphi 0, %s724
    %s725 = sphi 0, %s722
    %s726 = sphi 0, %s725
    %s742 = sphi 0, %s726
  $region4: #{mlp_forward.1} parent=0 // loop_header_branch
    %37 = sbr.rel (%p35) target = $region8
  $region5: #{mlp_forward.1} parent=0 // loop_body
    %s39 = ssub.s32 %s34, 1
    %s40 = ssub.s32 %s34, 2
    %s47 = sadd.s32 1, %s42
    %p48 = scmp.ge.s32.totalorder %s47, 1
    %s49 = scalar_select %p48, 0, %s47
    %s50 = sadd.s32 1, %s41
    %s51 = scalar_select %p48, %s50, %s41
    %p52 = scmp.ge.s32.totalorder %s51, 2
    %s53 = scalar_select %p52, 0, %s51
    %s54 = ssub.s32 %s41, %s53
    %s55 = ssub.s32 %s42, %s49
    %s56 = sor.u32 %s54, %s55
    %p57 = scmp.eq.s32.totalorder %s56, 0
    %s59 = sadd.s32 %s58, 1
    %s60 = scalar_select %p57, %s58, %s59
    %p63 = pneg %p57
    %p64 = scmp.eq.s32.totalorder %s34, 1
    %p65 = por %p63, %p64
    %p66 = scmp.ne.s32.totalorder %s58, %s61
    %p67 = scmp.eq.s32.totalorder %s34, 0
    %p68 = por %p66, %p67
    %p69 = scmp.ne.s32.totalorder %s58, %s61
    %p70 = scmp.eq.s32.totalorder %s39, 1
    %p71 = por %p69, %p70
    %p72 = scmp.ne.s32.totalorder %s61, %s62
    %p73 = scmp.eq.s32.totalorder %s39, 0
    %p74 = por %p72, %p73
    %p75 = scmp.ne.s32.totalorder %s61, %s62
    %p76 = scmp.eq.s32.totalorder %s40, 1
    %p77 = por %p75, %p76
    %p79 = scmp.ne.s32.totalorder %s62, %s78
    %p80 = scmp.eq.s32.totalorder %s40, 0
    %p81 = por %p79, %p80
    %s82 = ssub.s32 %s41, %s53
    %s83 = ssub.s32 %s42, %s49
    %s84 = sor.u32 %s82, %s83
    %p85 = scmp.eq.s32.totalorder %s84, 0
    %s87 = sadd.s32 %s86, 1
    %s88 = scalar_select %p85, %s86, %s87
    %p91 = pneg %p85
    %p92 = scmp.eq.s32.totalorder %s34, 1
    %p93 = por %p91, %p92
    %p94 = scmp.ne.s32.totalorder %s86, %s89
    %p95 = scmp.eq.s32.totalorder %s34, 0
    %p96 = por %p94, %p95
    %p97 = scmp.ne.s32.totalorder %s86, %s89
    %p98 = scmp.eq.s32.totalorder %s39, 1
    %p99 = por %p97, %p98
    %p100 = scmp.ne.s32.totalorder %s89, %s90
    %p101 = scmp.eq.s32.totalorder %s39, 0
    %p102 = por %p100, %p101
    %p103 = scmp.ne.s32.totalorder %s89, %s90
    %p104 = scmp.eq.s32.totalorder %s40, 1
    %p105 = por %p103, %p104
    %p107 = scmp.ne.s32.totalorder %s90, %s106
    %p108 = scmp.eq.s32.totalorder %s40, 0
    %p109 = por %p107, %p108
    %s110 = ssub.s32 %s41, %s53
    %s111 = ssub.s32 %s42, %s49
    %s112 = sor.u32 %s110, %s111
    %p113 = scmp.eq.s32.totalorder %s112, 0
    %s115 = sadd.s32 %s114, 1
    %s116 = scalar_select %p113, %s114, %s115
    %p119 = pneg %p113
    %p120 = scmp.eq.s32.totalorder %s34, 1
    %p121 = por %p119, %p120
    %p122 = scmp.ne.s32.totalorder %s114, %s117
    %p123 = scmp.eq.s32.totalorder %s34, 0
    %p124 = por %p122, %p123
    %p125 = scmp.ne.s32.totalorder %s114, %s117
    %p126 = scmp.eq.s32.totalorder %s39, 1
    %p127 = por %p125, %p126
    %p128 = scmp.ne.s32.totalorder %s117, %s118
    %p129 = scmp.eq.s32.totalorder %s39, 0
    %p130 = por %p128, %p129
    %p131 = scmp.ne.s32.totalorder %s117, %s118
    %p132 = scmp.eq.s32.totalorder %s40, 1
    %p133 = por %p131, %p132
    %p135 = scmp.ne.s32.totalorder %s118, %s134
    %p136 = scmp.eq.s32.totalorder %s40, 0
    %p137 = por %p135, %p136
    %s138 = ssub.s32 %s41, %s53
    %p139 = scmp.eq.s32.totalorder %s138, 0
    %s141 = sadd.s32 %s140, 1
    %s142 = scalar_select %p139, %s140, %s141
    %p145 = pneg %p139
    %p146 = scmp.eq.s32.totalorder %s34, 1
    %p147 = por %p145, %p146
    %p148 = scmp.ne.s32.totalorder %s140, %s143
    %p149 = scmp.eq.s32.totalorder %s34, 0
    %p150 = por %p148, %p149
    %p151 = scmp.ne.s32.totalorder %s140, %s143
    %p152 = scmp.eq.s32.totalorder %s39, 1
    %p153 = por %p151, %p152
    %p154 = scmp.ne.s32.totalorder %s143, %s144
    %p155 = scmp.eq.s32.totalorder %s39, 0
    %p156 = por %p154, %p155
    %p157 = scmp.ne.s32.totalorder %s143, %s144
    %p158 = scmp.eq.s32.totalorder %s40, 1
    %p159 = por %p157, %p158
    %p161 = scmp.ne.s32.totalorder %s144, %s160
    %p162 = scmp.eq.s32.totalorder %s40, 0
    %p163 = por %p161, %p162
    %s165 = sadd.s32 %s164, 1
    %p168 = scmp.eq.s32.totalorder %s34, 1
    %p169 = scmp.ne.s32.totalorder %s164, %s166
    %p170 = scmp.eq.s32.totalorder %s34, 0
    %p171 = por %p169, %p170
    %p172 = scmp.ne.s32.totalorder %s164, %s166
    %p173 = scmp.eq.s32.totalorder %s39, 1
    %p174 = por %p172, %p173
    %p175 = scmp.ne.s32.totalorder %s166, %s167
    %p176 = scmp.eq.s32.totalorder %s39, 0
    %p177 = por %p175, %p176
    %p178 = scmp.ne.s32.totalorder %s166, %s167
    %p179 = scmp.eq.s32.totalorder %s40, 1
    %p180 = por %p178, %p179
    %p182 = scmp.ne.s32.totalorder %s167, %s181
    %p183 = scmp.eq.s32.totalorder %s40, 0
    %p184 = por %p182, %p183
    %s185 = ssub.s32 %s41, %s53
    %p186 = scmp.eq.s32.totalorder %s185, 0
    %s188 = sadd.s32 %s187, 1
    %s189 = scalar_select %p186, %s187, %s188
    %p192 = pneg %p186
    %p193 = scmp.eq.s32.totalorder %s34, 1
    %p194 = por %p192, %p193
    %p195 = scmp.ne.s32.totalorder %s187, %s190
    %p196 = scmp.eq.s32.totalorder %s34, 0
    %p197 = por %p195, %p196
    %p198 = scmp.ne.s32.totalorder %s187, %s190
    %p199 = scmp.eq.s32.totalorder %s39, 1
    %p200 = por %p198, %p199
    %p201 = scmp.ne.s32.totalorder %s190, %s191
    %p202 = scmp.eq.s32.totalorder %s39, 0
    %p203 = por %p201, %p202
    %p204 = scmp.ne.s32.totalorder %s190, %s191
    %p205 = scmp.eq.s32.totalorder %s40, 1
    %p206 = por %p204, %p205
    %p208 = scmp.ne.s32.totalorder %s191, %s207
    %p209 = scmp.eq.s32.totalorder %s40, 0
    %p210 = por %p208, %p209
    %s212 = sadd.s32 %s211, 1
    %p215 = scmp.eq.s32.totalorder %s34, 1
    %p216 = scmp.ne.s32.totalorder %s211, %s213
    %p217 = scmp.eq.s32.totalorder %s34, 0
    %p218 = por %p216, %p217
    %p219 = scmp.ne.s32.totalorder %s211, %s213
    %p220 = scmp.eq.s32.totalorder %s39, 1
    %p221 = por %p219, %p220
    %p222 = scmp.ne.s32.totalorder %s213, %s214
    %p223 = scmp.eq.s32.totalorder %s39, 0
    %p224 = por %p222, %p223
    %p225 = scmp.ne.s32.totalorder %s213, %s214
    %p226 = scmp.eq.s32.totalorder %s40, 1
    %p227 = por %p225, %p226
    %p229 = scmp.ne.s32.totalorder %s214, %s228
    %p230 = scmp.eq.s32.totalorder %s40, 0
    %p231 = por %p229, %p230
    %s233 = sadd.s32 %s232, 1
    %p236 = scmp.eq.s32.totalorder %s34, 1
    %p237 = scmp.ne.s32.totalorder %s232, %s234
    %p238 = scmp.eq.s32.totalorder %s34, 0
    %p239 = por %p237, %p238
    %p240 = scmp.ne.s32.totalorder %s232, %s234
    %p241 = scmp.eq.s32.totalorder %s39, 1
    %p242 = por %p240, %p241
    %p243 = scmp.ne.s32.totalorder %s234, %s235
    %p244 = scmp.eq.s32.totalorder %s39, 0
    %p245 = por %p243, %p244
    %p246 = scmp.ne.s32.totalorder %s234, %s235
    %p247 = scmp.eq.s32.totalorder %s40, 1
    %p248 = por %p246, %p247
    %p250 = scmp.ne.s32.totalorder %s235, %s249
    %p251 = scmp.eq.s32.totalorder %s40, 0
    %p252 = por %p250, %p251
    %s253 = ssub.s32 %s41, %s53
    %p254 = scmp.eq.s32.totalorder %s253, 0
    %s256 = sadd.s32 %s255, 1
    %s257 = scalar_select %p254, %s255, %s256
    %p260 = pneg %p254
    %p261 = scmp.eq.s32.totalorder %s34, 1
    %p262 = por %p260, %p261
    %p263 = scmp.ne.s32.totalorder %s255, %s258
    %p264 = scmp.eq.s32.totalorder %s34, 0
    %p265 = por %p263, %p264
    %p266 = scmp.ne.s32.totalorder %s255, %s258
    %p267 = scmp.eq.s32.totalorder %s39, 1
    %p268 = por %p266, %p267
    %p269 = scmp.ne.s32.totalorder %s258, %s259
    %p270 = scmp.eq.s32.totalorder %s39, 0
    %p271 = por %p269, %p270
    %p272 = scmp.ne.s32.totalorder %s258, %s259
    %p273 = scmp.eq.s32.totalorder %s40, 1
    %p274 = por %p272, %p273
    %p276 = scmp.ne.s32.totalorder %s259, %s275
    %p277 = scmp.eq.s32.totalorder %s40, 0
    %p278 = por %p276, %p277
    %s279 = ssub.s32 %s41, %s53
    %p280 = scmp.eq.s32.totalorder %s279, 0
    %s282 = sadd.s32 %s281, 1
    %s283 = scalar_select %p280, %s281, %s282
    %p286 = pneg %p280
    %p287 = scmp.eq.s32.totalorder %s34, 1
    %p288 = por %p286, %p287
    %p289 = scmp.ne.s32.totalorder %s281, %s284
    %p290 = scmp.eq.s32.totalorder %s34, 0
    %p291 = por %p289, %p290
    %p292 = scmp.ne.s32.totalorder %s281, %s284
    %p293 = scmp.eq.s32.totalorder %s39, 1
    %p294 = por %p292, %p293
    %p295 = scmp.ne.s32.totalorder %s284, %s285
    %p296 = scmp.eq.s32.totalorder %s39, 0
    %p297 = por %p295, %p296
    %p298 = scmp.ne.s32.totalorder %s284, %s285
    %p299 = scmp.eq.s32.totalorder %s40, 1
    %p300 = por %p298, %p299
    %p302 = scmp.ne.s32.totalorder %s285, %s301
    %p303 = scmp.eq.s32.totalorder %s40, 0
    %p304 = por %p302, %p303
    %s306 = sadd.s32 %s305, 1
    %p309 = scmp.eq.s32.totalorder %s34, 1
    %p310 = scmp.ne.s32.totalorder %s305, %s307
    %p311 = scmp.eq.s32.totalorder %s34, 0
    %p312 = por %p310, %p311
    %p313 = scmp.ne.s32.totalorder %s305, %s307
    %p314 = scmp.eq.s32.totalorder %s39, 1
    %p315 = por %p313, %p314
    %p316 = scmp.ne.s32.totalorder %s307, %s308
    %p317 = scmp.eq.s32.totalorder %s39, 0
    %p318 = por %p316, %p317
    %p319 = scmp.ne.s32.totalorder %s307, %s308
    %p320 = scmp.eq.s32.totalorder %s40, 1
    %p321 = por %p319, %p320
    %p323 = scmp.ne.s32.totalorder %s308, %s322
    %p324 = scmp.eq.s32.totalorder %s40, 0
    %p325 = por %p323, %p324
    %s326 = ssub.s32 %s41, %s53
    %p327 = scmp.eq.s32.totalorder %s326, 0
    %s329 = sadd.s32 %s328, 1
    %s330 = scalar_select %p327, %s328, %s329
    %p333 = pneg %p327
    %p334 = scmp.eq.s32.totalorder %s34, 1
    %p335 = por %p333, %p334
    %p336 = scmp.ne.s32.totalorder %s328, %s331
    %p337 = scmp.eq.s32.totalorder %s34, 0
    %p338 = por %p336, %p337
    %p339 = scmp.ne.s32.totalorder %s328, %s331
    %p340 = scmp.eq.s32.totalorder %s39, 1
    %p341 = por %p339, %p340
    %p342 = scmp.ne.s32.totalorder %s331, %s332
    %p343 = scmp.eq.s32.totalorder %s39, 0
    %p344 = por %p342, %p343
    %p345 = scmp.ne.s32.totalorder %s331, %s332
    %p346 = scmp.eq.s32.totalorder %s40, 1
    %p347 = por %p345, %p346
    %p349 = scmp.ne.s32.totalorder %s332, %s348
    %p350 = scmp.eq.s32.totalorder %s40, 0
    %p351 = por %p349, %p350
    %s353 = sadd.s32 %s352, 1
    %p356 = scmp.eq.s32.totalorder %s34, 1
    %p357 = scmp.ne.s32.totalorder %s352, %s354
    %p358 = scmp.eq.s32.totalorder %s34, 0
    %p359 = por %p357, %p358
    %p360 = scmp.ne.s32.totalorder %s352, %s354
    %p361 = scmp.eq.s32.totalorder %s39, 1
    %p362 = por %p360, %p361
    %p363 = scmp.ne.s32.totalorder %s354, %s355
    %p364 = scmp.eq.s32.totalorder %s39, 0
    %p365 = por %p363, %p364
    %p366 = scmp.ne.s32.totalorder %s354, %s355
    %p367 = scmp.eq.s32.totalorder %s40, 1
    %p368 = por %p366, %p367
    %p370 = scmp.ne.s32.totalorder %s355, %s369
    %p371 = scmp.eq.s32.totalorder %s40, 0
    %p372 = por %p370, %p371
    %s374 = sadd.s32 %s373, 1
    %p377 = scmp.eq.s32.totalorder %s34, 1
    %p378 = scmp.ne.s32.totalorder %s373, %s375
    %p379 = scmp.eq.s32.totalorder %s34, 0
    %p380 = por %p378, %p379
    %p381 = scmp.ne.s32.totalorder %s373, %s375
    %p382 = scmp.eq.s32.totalorder %s39, 1
    %p383 = por %p381, %p382
    %p384 = scmp.ne.s32.totalorder %s375, %s376
    %p385 = scmp.eq.s32.totalorder %s39, 0
    %p386 = por %p384, %p385
    %p387 = scmp.ne.s32.totalorder %s375, %s376
    %p388 = scmp.eq.s32.totalorder %s40, 1
    %p389 = por %p387, %p388
    %p391 = scmp.ne.s32.totalorder %s376, %s390
    %p392 = scmp.eq.s32.totalorder %s40, 0
    %p393 = por %p391, %p392
    %s395 = sadd.s32 %s394, 1
    %p398 = scmp.eq.s32.totalorder %s34, 1
    %p399 = scmp.ne.s32.totalorder %s394, %s396
    %p400 = scmp.eq.s32.totalorder %s34, 0
    %p401 = por %p399, %p400
    %p402 = scmp.ne.s32.totalorder %s394, %s396
    %p403 = scmp.eq.s32.totalorder %s39, 1
    %p404 = por %p402, %p403
    %p405 = scmp.ne.s32.totalorder %s396, %s397
    %p406 = scmp.eq.s32.totalorder %s39, 0
    %p407 = por %p405, %p406
    %p408 = scmp.ne.s32.totalorder %s396, %s397
    %p409 = scmp.eq.s32.totalorder %s40, 1
    %p410 = por %p408, %p409
    %p412 = scmp.ne.s32.totalorder %s397, %s411
    %p413 = scmp.eq.s32.totalorder %s40, 0
    %p414 = por %p412, %p413
    %s415 = ssub.s32 %s41, %s53
    %p416 = scmp.eq.s32.totalorder %s415, 0
    %s418 = sadd.s32 %s417, 1
    %s419 = scalar_select %p416, %s417, %s418
    %p422 = pneg %p416
    %p423 = scmp.eq.s32.totalorder %s34, 1
    %p424 = por %p422, %p423
    %p425 = scmp.ne.s32.totalorder %s417, %s420
    %p426 = scmp.eq.s32.totalorder %s34, 0
    %p427 = por %p425, %p426
    %p428 = scmp.ne.s32.totalorder %s417, %s420
    %p429 = scmp.eq.s32.totalorder %s39, 1
    %p430 = por %p428, %p429
    %p431 = scmp.ne.s32.totalorder %s420, %s421
    %p432 = scmp.eq.s32.totalorder %s39, 0
    %p433 = por %p431, %p432
    %p434 = scmp.ne.s32.totalorder %s420, %s421
    %p435 = scmp.eq.s32.totalorder %s40, 1
    %p436 = por %p434, %p435
    %p438 = scmp.ne.s32.totalorder %s421, %s437
    %p439 = scmp.eq.s32.totalorder %s40, 0
    %p440 = por %p438, %p439
    %s441 = ssub.s32 %s41, %s53
    %p442 = scmp.eq.s32.totalorder %s441, 0
    %s444 = sadd.s32 %s443, 1
    %s445 = scalar_select %p442, %s443, %s444
    %p448 = pneg %p442
    %p449 = scmp.eq.s32.totalorder %s34, 1
    %p450 = por %p448, %p449
    %p451 = scmp.ne.s32.totalorder %s443, %s446
    %p452 = scmp.eq.s32.totalorder %s34, 0
    %p453 = por %p451, %p452
    %p454 = scmp.ne.s32.totalorder %s443, %s446
    %p455 = scmp.eq.s32.totalorder %s39, 1
    %p456 = por %p454, %p455
    %p457 = scmp.ne.s32.totalorder %s446, %s447
    %p458 = scmp.eq.s32.totalorder %s39, 0
    %p459 = por %p457, %p458
    %p460 = scmp.ne.s32.totalorder %s446, %s447
    %p461 = scmp.eq.s32.totalorder %s40, 1
    %p462 = por %p460, %p461
    %p464 = scmp.ne.s32.totalorder %s447, %s463
    %p465 = scmp.eq.s32.totalorder %s40, 0
    %p466 = por %p464, %p465
    %s468 = sadd.s32 %s467, 1
    %p471 = scmp.eq.s32.totalorder %s34, 1
    %p472 = scmp.ne.s32.totalorder %s467, %s469
    %p473 = scmp.eq.s32.totalorder %s34, 0
    %p474 = por %p472, %p473
    %p475 = scmp.ne.s32.totalorder %s467, %s469
    %p476 = scmp.eq.s32.totalorder %s39, 1
    %p477 = por %p475, %p476
    %p478 = scmp.ne.s32.totalorder %s469, %s470
    %p479 = scmp.eq.s32.totalorder %s39, 0
    %p480 = por %p478, %p479
    %p481 = scmp.ne.s32.totalorder %s469, %s470
    %p482 = scmp.eq.s32.totalorder %s40, 1
    %p483 = por %p481, %p482
    %p485 = scmp.ne.s32.totalorder %s470, %s484
    %p486 = scmp.eq.s32.totalorder %s40, 0
    %p487 = por %p485, %p486
    %s488 = ssub.s32 %s41, %s53
    %p489 = scmp.eq.s32.totalorder %s488, 0
    %s491 = sadd.s32 %s490, 1
    %s492 = scalar_select %p489, %s490, %s491
    %p495 = pneg %p489
    %p496 = scmp.eq.s32.totalorder %s34, 1
    %p497 = por %p495, %p496
    %p498 = scmp.ne.s32.totalorder %s490, %s493
    %p499 = scmp.eq.s32.totalorder %s34, 0
    %p500 = por %p498, %p499
    %p501 = scmp.ne.s32.totalorder %s490, %s493
    %p502 = scmp.eq.s32.totalorder %s39, 1
    %p503 = por %p501, %p502
    %p504 = scmp.ne.s32.totalorder %s493, %s494
    %p505 = scmp.eq.s32.totalorder %s39, 0
    %p506 = por %p504, %p505
    %p507 = scmp.ne.s32.totalorder %s493, %s494
    %p508 = scmp.eq.s32.totalorder %s40, 1
    %p509 = por %p507, %p508
    %p511 = scmp.ne.s32.totalorder %s494, %s510
    %p512 = scmp.eq.s32.totalorder %s40, 0
    %p513 = por %p511, %p512
    %s515 = sadd.s32 %s514, 1
    %p518 = scmp.eq.s32.totalorder %s34, 1
    %p519 = scmp.ne.s32.totalorder %s514, %s516
    %p520 = scmp.eq.s32.totalorder %s34, 0
    %p521 = por %p519, %p520
    %p522 = scmp.ne.s32.totalorder %s514, %s516
    %p523 = scmp.eq.s32.totalorder %s39, 1
    %p524 = por %p522, %p523
    %p525 = scmp.ne.s32.totalorder %s516, %s517
    %p526 = scmp.eq.s32.totalorder %s39, 0
    %p527 = por %p525, %p526
    %p528 = scmp.ne.s32.totalorder %s516, %s517
    %p529 = scmp.eq.s32.totalorder %s40, 1
    %p530 = por %p528, %p529
    %p532 = scmp.ne.s32.totalorder %s517, %s531
    %p533 = scmp.eq.s32.totalorder %s40, 0
    %p534 = por %p532, %p533
    %s536 = sadd.s32 %s535, 1
    %p539 = scmp.eq.s32.totalorder %s34, 1
    %p540 = scmp.ne.s32.totalorder %s535, %s537
    %p541 = scmp.eq.s32.totalorder %s34, 0
    %p542 = por %p540, %p541
    %p543 = scmp.ne.s32.totalorder %s535, %s537
    %p544 = scmp.eq.s32.totalorder %s39, 1
    %p545 = por %p543, %p544
    %p546 = scmp.ne.s32.totalorder %s537, %s538
    %p547 = scmp.eq.s32.totalorder %s39, 0
    %p548 = por %p546, %p547
    %p549 = scmp.ne.s32.totalorder %s537, %s538
    %p550 = scmp.eq.s32.totalorder %s40, 1
    %p551 = por %p549, %p550
    %p553 = scmp.ne.s32.totalorder %s538, %s552
    %p554 = scmp.eq.s32.totalorder %s40, 0
    %p555 = por %p553, %p554
    %s557 = sadd.s32 %s556, 1
    %p560 = scmp.eq.s32.totalorder %s34, 1
    %p561 = scmp.ne.s32.totalorder %s556, %s558
    %p562 = scmp.eq.s32.totalorder %s34, 0
    %p563 = por %p561, %p562
    %p564 = scmp.ne.s32.totalorder %s556, %s558
    %p565 = scmp.eq.s32.totalorder %s39, 1
    %p566 = por %p564, %p565
    %p567 = scmp.ne.s32.totalorder %s558, %s559
    %p568 = scmp.eq.s32.totalorder %s39, 0
    %p569 = por %p567, %p568
    %p570 = scmp.ne.s32.totalorder %s558, %s559
    %p571 = scmp.eq.s32.totalorder %s40, 1
    %p572 = por %p570, %p571
    %p574 = scmp.ne.s32.totalorder %s559, %s573
    %p575 = scmp.eq.s32.totalorder %s40, 0
    %p576 = por %p574, %p575
    %s577 = ssub.s32 %s41, %s53
    %p578 = scmp.eq.s32.totalorder %s577, 0
    %s580 = sadd.s32 %s579, 1
    %s581 = scalar_select %p578, %s579, %s580
    %p584 = pneg %p578
    %p585 = scmp.eq.s32.totalorder %s34, 1
    %p586 = por %p584, %p585
    %p587 = scmp.ne.s32.totalorder %s579, %s582
    %p588 = scmp.eq.s32.totalorder %s34, 0
    %p589 = por %p587, %p588
    %p590 = scmp.ne.s32.totalorder %s579, %s582
    %p591 = scmp.eq.s32.totalorder %s39, 1
    %p592 = por %p590, %p591
    %p593 = scmp.ne.s32.totalorder %s582, %s583
    %p594 = scmp.eq.s32.totalorder %s39, 0
    %p595 = por %p593, %p594
    %p596 = scmp.ne.s32.totalorder %s582, %s583
    %p597 = scmp.eq.s32.totalorder %s40, 1
    %p598 = por %p596, %p597
    %p600 = scmp.ne.s32.totalorder %s583, %s599
    %p601 = scmp.eq.s32.totalorder %s40, 0
    %p602 = por %p600, %p601
    %s604 = sadd.s32 %s603, 1
    %p607 = scmp.eq.s32.totalorder %s34, 1
    %p608 = scmp.ne.s32.totalorder %s603, %s605
    %p609 = scmp.eq.s32.totalorder %s34, 0
    %p610 = por %p608, %p609
    %p611 = scmp.ne.s32.totalorder %s603, %s605
    %p612 = scmp.eq.s32.totalorder %s39, 1
    %p613 = por %p611, %p612
    %p614 = scmp.ne.s32.totalorder %s605, %s606
    %p615 = scmp.eq.s32.totalorder %s39, 0
    %p616 = por %p614, %p615
    %p617 = scmp.ne.s32.totalorder %s605, %s606
    %p618 = scmp.eq.s32.totalorder %s40, 1
    %p619 = por %p617, %p618
    %p621 = scmp.ne.s32.totalorder %s606, %s620
    %p622 = scmp.eq.s32.totalorder %s40, 0
    %p623 = por %p621, %p622
    %s624 = ssub.s32 %s41, %s53
    %p625 = scmp.eq.s32.totalorder %s624, 0
    %s627 = sadd.s32 %s626, 1
    %s628 = scalar_select %p625, %s626, %s627
    %p631 = pneg %p625
    %p632 = scmp.eq.s32.totalorder %s34, 1
    %p633 = por %p631, %p632
    %p634 = scmp.ne.s32.totalorder %s626, %s629
    %p635 = scmp.eq.s32.totalorder %s34, 0
    %p636 = por %p634, %p635
    %p637 = scmp.ne.s32.totalorder %s626, %s629
    %p638 = scmp.eq.s32.totalorder %s39, 1
    %p639 = por %p637, %p638
    %p640 = scmp.ne.s32.totalorder %s629, %s630
    %p641 = scmp.eq.s32.totalorder %s39, 0
    %p642 = por %p640, %p641
    %p643 = scmp.ne.s32.totalorder %s629, %s630
    %p644 = scmp.eq.s32.totalorder %s40, 1
    %p645 = por %p643, %p644
    %p647 = scmp.ne.s32.totalorder %s630, %s646
    %p648 = scmp.eq.s32.totalorder %s40, 0
    %p649 = por %p647, %p648
    %s651 = sadd.s32 %s650, 1
    %p654 = scmp.eq.s32.totalorder %s34, 1
    %p655 = scmp.ne.s32.totalorder %s650, %s652
    %p656 = scmp.eq.s32.totalorder %s34, 0
    %p657 = por %p655, %p656
    %p658 = scmp.ne.s32.totalorder %s650, %s652
    %p659 = scmp.eq.s32.totalorder %s39, 1
    %p660 = por %p658, %p659
    %p661 = scmp.ne.s32.totalorder %s652, %s653
    %p662 = scmp.eq.s32.totalorder %s39, 0
    %p663 = por %p661, %p662
    %p664 = scmp.ne.s32.totalorder %s652, %s653
    %p665 = scmp.eq.s32.totalorder %s40, 1
    %p666 = por %p664, %p665
    %p668 = scmp.ne.s32.totalorder %s653, %s667
    %p669 = scmp.eq.s32.totalorder %s40, 0
    %p670 = por %p668, %p669
    %s671 = ssub.s32 %s41, %s53
    %p672 = scmp.eq.s32.totalorder %s671, 0
    %s674 = sadd.s32 %s673, 1
    %s675 = scalar_select %p672, %s673, %s674
    %p678 = pneg %p672
    %p679 = scmp.eq.s32.totalorder %s34, 1
    %p680 = por %p678, %p679
    %p681 = scmp.ne.s32.totalorder %s673, %s676
    %p682 = scmp.eq.s32.totalorder %s34, 0
    %p683 = por %p681, %p682
    %p684 = scmp.ne.s32.totalorder %s673, %s676
    %p685 = scmp.eq.s32.totalorder %s39, 1
    %p686 = por %p684, %p685
    %p687 = scmp.ne.s32.totalorder %s676, %s677
    %p688 = scmp.eq.s32.totalorder %s39, 0
    %p689 = por %p687, %p688
    %p690 = scmp.ne.s32.totalorder %s676, %s677
    %p691 = scmp.eq.s32.totalorder %s40, 1
    %p692 = por %p690, %p691
    %p694 = scmp.ne.s32.totalorder %s677, %s693
    %p695 = scmp.eq.s32.totalorder %s40, 0
    %p696 = por %p694, %p695
    %s698 = sadd.s32 %s697, 1
    %p701 = scmp.eq.s32.totalorder %s34, 1
    %p702 = scmp.ne.s32.totalorder %s697, %s699
    %p703 = scmp.eq.s32.totalorder %s34, 0
    %p704 = por %p702, %p703
    %p705 = scmp.ne.s32.totalorder %s697, %s699
    %p706 = scmp.eq.s32.totalorder %s39, 1
    %p707 = por %p705, %p706
    %p708 = scmp.ne.s32.totalorder %s699, %s700
    %p709 = scmp.eq.s32.totalorder %s39, 0
    %p710 = por %p708, %p709
    %p711 = scmp.ne.s32.totalorder %s699, %s700
    %p712 = scmp.eq.s32.totalorder %s40, 1
    %p713 = por %p711, %p712
    %p715 = scmp.ne.s32.totalorder %s700, %s714
    %p716 = scmp.eq.s32.totalorder %s40, 0
    %p717 = por %p715, %p716
    %s718 = ssub.s32 %s41, %s53
    %s719 = ssub.s32 %s42, %s49
    %s720 = sor.u32 %s718, %s719
    %p721 = scmp.eq.s32.totalorder %s720, 0
    %s723 = sadd.s32 %s722, 1
    %s724 = scalar_select %p721, %s722, %s723
    %p727 = pneg %p721
    %p728 = scmp.eq.s32.totalorder %s34, 1
    %p729 = por %p727, %p728
    %p730 = scmp.ne.s32.totalorder %s722, %s725
    %p731 = scmp.eq.s32.totalorder %s34, 0
    %p732 = por %p730, %p731
    %p733 = scmp.ne.s32.totalorder %s722, %s725
    %p734 = scmp.eq.s32.totalorder %s39, 1
    %p735 = por %p733, %p734
    %p736 = scmp.ne.s32.totalorder %s725, %s726
    %p737 = scmp.eq.s32.totalorder %s39, 0
    %p738 = por %p736, %p737
    %p739 = scmp.ne.s32.totalorder %s725, %s726
    %p740 = scmp.eq.s32.totalorder %s40, 1
    %p741 = por %p739, %p740
    %p743 = scmp.ne.s32.totalorder %s726, %s742
    %p744 = scmp.eq.s32.totalorder %s40, 0
    %p745 = por %p743, %p744
    %p746 = scmp.le.s32.totalorder 1, %s34
    %p747 = scmp.lt.s32.totalorder %s34, 3
    %p748 = pnand %p746, %p747
    %p749 = pneg %p748
    // Predicated region
    $region9: #{mlp_forward.1} parent=5 // pred_check
      _
    $region10: #{mlp_forward.1} parent=5 // pred_check_branch
      %751 = sbr.rel (%p748) target = $region12
    $region11: #{mlp_forward.1} parent=5 // pred_region
      %s752 = ssub.s32 %s34, 1
      // Predicated region
      $region13: #{mlp_forward.1} parent=11 // pred_check
        %p753 = pneg %p177
      $region14: #{mlp_forward.1} parent=11 // pred_check_branch
        %755 = sbr.rel (%p753) target = $region16
      $region15: #{mlp_forward.1} parent=11 // pred_region
        _
      $region16: #{mlp_forward.1} parent=11 // pred_fallthru
        _
      // Predicated region
      $region17: #{mlp_forward.1} parent=11 // pred_check
        %p756 = pneg %p224
      $region18: #{mlp_forward.1} parent=11 // pred_check_branch
        %758 = sbr.rel (%p756) target = $region20
      $region19: #{mlp_forward.1} parent=11 // pred_region
        _
      $region20: #{mlp_forward.1} parent=11 // pred_fallthru
        _
      // Predicated region
      $region21: #{mlp_forward.1} parent=11 // pred_check
        %p759 = pneg %p245
      $region22: #{mlp_forward.1} parent=11 // pred_check_branch
        %761 = sbr.rel (%p759) target = $region24
      $region23: #{mlp_forward.1} parent=11 // pred_region
        _
      $region24: #{mlp_forward.1} parent=11 // pred_fallthru
        _
      // Predicated region
      $region25: #{mlp_forward.1} parent=11 // pred_check
        %p762 = pneg %p318
      $region26: #{mlp_forward.1} parent=11 // pred_check_branch
        %764 = sbr.rel (%p762) target = $region28
      $region27: #{mlp_forward.1} parent=11 // pred_region
        _
      $region28: #{mlp_forward.1} parent=11 // pred_fallthru
        _
      // Predicated region
      $region29: #{mlp_forward.1} parent=11 // pred_check
        %p765 = pneg %p365
      $region30: #{mlp_forward.1} parent=11 // pred_check_branch
        %767 = sbr.rel (%p765) target = $region32
      $region31: #{mlp_forward.1} parent=11 // pred_region
        _
      $region32: #{mlp_forward.1} parent=11 // pred_fallthru
        _
      // Predicated region
      $region33: #{mlp_forward.1} parent=11 // pred_check
        %p768 = pneg %p386
      $region34: #{mlp_forward.1} parent=11 // pred_check_branch
        %770 = sbr.rel (%p768) target = $region36
      $region35: #{mlp_forward.1} parent=11 // pred_region
        _
      $region36: #{mlp_forward.1} parent=11 // pred_fallthru
        _
      // Predicated region
      $region37: #{mlp_forward.1} parent=11 // pred_check
        %p771 = pneg %p407
      $region38: #{mlp_forward.1} parent=11 // pred_check_branch
        %773 = sbr.rel (%p771) target = $region40
      $region39: #{mlp_forward.1} parent=11 // pred_region
        _
      $region40: #{mlp_forward.1} parent=11 // pred_fallthru
        _
      // Predicated region
      $region41: #{mlp_forward.1} parent=11 // pred_check
        %p774 = pneg %p480
      $region42: #{mlp_forward.1} parent=11 // pred_check_branch
        %776 = sbr.rel (%p774) target = $region44
      $region43: #{mlp_forward.1} parent=11 // pred_region
        _
      $region44: #{mlp_forward.1} parent=11 // pred_fallthru
        _
      // Predicated region
      $region45: #{mlp_forward.1} parent=11 // pred_check
        %p777 = pneg %p527
      $region46: #{mlp_forward.1} parent=11 // pred_check_branch
        %779 = sbr.rel (%p777) target = $region48
      $region47: #{mlp_forward.1} parent=11 // pred_region
        _
      $region48: #{mlp_forward.1} parent=11 // pred_fallthru
        _
      // Predicated region
      $region49: #{mlp_forward.1} parent=11 // pred_check
        %p780 = pneg %p548
      $region50: #{mlp_forward.1} parent=11 // pred_check_branch
        %782 = sbr.rel (%p780) target = $region52
      $region51: #{mlp_forward.1} parent=11 // pred_region
        _
      $region52: #{mlp_forward.1} parent=11 // pred_fallthru
        _
      // Predicated region
      $region53: #{mlp_forward.1} parent=11 // pred_check
        %p783 = pneg %p569
      $region54: #{mlp_forward.1} parent=11 // pred_check_branch
        %785 = sbr.rel (%p783) target = $region56
      $region55: #{mlp_forward.1} parent=11 // pred_region
        _
      $region56: #{mlp_forward.1} parent=11 // pred_fallthru
        _
      // Predicated region
      $region57: #{mlp_forward.1} parent=11 // pred_check
        %p786 = pneg %p616
      $region58: #{mlp_forward.1} parent=11 // pred_check_branch
        %788 = sbr.rel (%p786) target = $region60
      $region59: #{mlp_forward.1} parent=11 // pred_region
        _
      $region60: #{mlp_forward.1} parent=11 // pred_fallthru
        _
      // Predicated region
      $region61: #{mlp_forward.1} parent=11 // pred_check
        %p789 = pneg %p663
      $region62: #{mlp_forward.1} parent=11 // pred_check_branch
        %791 = sbr.rel (%p789) target = $region64
      $region63: #{mlp_forward.1} parent=11 // pred_region
        _
      $region64: #{mlp_forward.1} parent=11 // pred_fallthru
        _
      // Predicated region
      $region65: #{mlp_forward.1} parent=11 // pred_check
        %p792 = pneg %p710
      $region66: #{mlp_forward.1} parent=11 // pred_check_branch
        %794 = sbr.rel (%p792) target = $region68
      $region67: #{mlp_forward.1} parent=11 // pred_region
        _
      $region68: #{mlp_forward.1} parent=11 // pred_fallthru
        _
    $region12: #{mlp_forward.1} parent=5 // pred_fallthru
      _
    %p795 = scmp.lt.s32.totalorder %s34, 2
    // Predicated region
    $region69: #{mlp_forward.1} parent=5 // pred_check
      %p796 = pneg %p795
    $region70: #{mlp_forward.1} parent=5 // pred_check_branch
      %798 = sbr.rel (%p796) target = $region72
    $region71: #{mlp_forward.1} parent=5 // pred_region
      // Predicated region
      $region73: #{mlp_forward.1} parent=71 // pred_check
        %p799 = pneg %p68
      $region74: #{mlp_forward.1} parent=71 // pred_check_branch
        %801 = sbr.rel (%p799) target = $region76
      $region75: #{mlp_forward.1} parent=71 // pred_region
        %s802 = smul.u32 8, %s42
        %p803 = scmp.lt.s32.totalorder %s41, 1
        %s804 = scalar_select %p803, %s41, 1
        %p805 = scmp.lt.s32.totalorder %s802, 7
        %s806 = scalar_select %p805, %s802, 7
        %s807 = smul.addr %s804, 8
        %s808 = sadd.s32 %s806, %s807
        %s809 = smul.addr %s808, 4
        %s810 = scalar_lea.vmem %s0, %s809
        %s811 = smul.u32 8, %s42
      $region76: #{mlp_forward.1} parent=71 // pred_fallthru
        _
      // Predicated region
      $region77: #{mlp_forward.1} parent=71 // pred_check
        %p812 = pneg %p96
      $region78: #{mlp_forward.1} parent=71 // pred_check_branch
        %814 = sbr.rel (%p812) target = $region80
      $region79: #{mlp_forward.1} parent=71 // pred_region
        %s815 = smul.u32 8, %s42
        %p816 = scmp.lt.s32.totalorder %s41, 1
        %s817 = scalar_select %p816, %s41, 1
        %p818 = scmp.lt.s32.totalorder %s815, 7
        %s819 = scalar_select %p818, %s815, 7
        %s820 = smul.addr %s817, 8
        %s821 = sadd.s32 %s819, %s820
        %s822 = smul.addr %s821, 4
        %s823 = scalar_lea.vmem %s1, %s822
        %s824 = smul.u32 8, %s42
      $region80: #{mlp_forward.1} parent=71 // pred_fallthru
        _
      // Predicated region
      $region81: #{mlp_forward.1} parent=71 // pred_check
        %p825 = pneg %p124
      $region82: #{mlp_forward.1} parent=71 // pred_check_branch
        %827 = sbr.rel (%p825) target = $region84
      $region83: #{mlp_forward.1} parent=71 // pred_region
        %s828 = smul.u32 8, %s42
        %p829 = scmp.lt.s32.totalorder %s41, 1
        %s830 = scalar_select %p829, %s41, 1
        %p831 = scmp.lt.s32.totalorder %s828, 7
        %s832 = scalar_select %p831, %s828, 7
        %s833 = smul.addr %s830, 8
        %s834 = sadd.s32 %s832, %s833
        %s835 = smul.addr %s834, 4
        %s836 = scalar_lea.vmem %s2, %s835
        %s837 = smul.u32 8, %s42
      $region84: #{mlp_forward.1} parent=71 // pred_fallthru
        _
      // Predicated region
      $region85: #{mlp_forward.1} parent=71 // pred_check
        %p838 = pneg %p150
      $region86: #{mlp_forward.1} parent=71 // pred_check_branch
        %840 = sbr.rel (%p838) target = $region88
      $region87: #{mlp_forward.1} parent=71 // pred_region
        %p841 = scmp.lt.s32.totalorder %s41, 1
        %s842 = scalar_select %p841, %s41, 1
        %s843 = smul.addr %s842, 32
        %s844 = smul.addr %s843, 4
        %s845 = scalar_lea.vmem %s3, %s844
      $region88: #{mlp_forward.1} parent=71 // pred_fallthru
        _
      // Predicated region
      $region89: #{mlp_forward.1} parent=71 // pred_check
        %p846 = pneg %p197
      $region90: #{mlp_forward.1} parent=71 // pred_check_branch
        %848 = sbr.rel (%p846) target = $region92
      $region91: #{mlp_forward.1} parent=71 // pred_region
        %p849 = scmp.lt.s32.totalorder %s41, 1
        %s850 = scalar_select %p849, %s41, 1
        %s851 = smul.addr %s850, 64
        %s852 = smul.addr %s851, 4
        %s853 = scalar_lea.vmem %s5, %s852
      $region92: #{mlp_forward.1} parent=71 // pred_fallthru
        _
      // Predicated region
      $region93: #{mlp_forward.1} parent=71 // pred_check
        %p854 = pneg %p265
      $region94: #{mlp_forward.1} parent=71 // pred_check_branch
        %856 = sbr.rel (%p854) target = $region96
      $region95: #{mlp_forward.1} parent=71 // pred_region
        %p857 = scmp.lt.s32.totalorder %s41, 1
        %s858 = scalar_select %p857, %s41, 1
        %s859 = smul.addr %s858, 64
        %s860 = smul.addr %s859, 4
        %s861 = scalar_lea.vmem %s8, %s860
      $region96: #{mlp_forward.1} parent=71 // pred_fallthru
        _
      // Predicated region
      $region97: #{mlp_forward.1} parent=71 // pred_check
        %p862 = pneg %p291
      $region98: #{mlp_forward.1} parent=71 // pred_check_branch
        %864 = sbr.rel (%p862) target = $region100
      $region99: #{mlp_forward.1} parent=71 // pred_region
        %p865 = scmp.lt.s32.totalorder %s41, 1
        %s866 = scalar_select %p865, %s41, 1
        %s867 = smul.addr %s866, 32
        %s868 = smul.addr %s867, 4
        %s869 = scalar_lea.vmem %s9, %s868
      $region100: #{mlp_forward.1} parent=71 // pred_fallthru
        _
      // Predicated region
      $region101: #{mlp_forward.1} parent=71 // pred_check
        %p870 = pneg %p338
      $region102: #{mlp_forward.1} parent=71 // pred_check_branch
        %872 = sbr.rel (%p870) target = $region104
      $region103: #{mlp_forward.1} parent=71 // pred_region
        %p873 = scmp.lt.s32.totalorder %s41, 1
        %s874 = scalar_select %p873, %s41, 1
        %s875 = smul.addr %s874, 64
        %s876 = smul.addr %s875, 4
        %s877 = scalar_lea.vmem %s11, %s876
      $region104: #{mlp_forward.1} parent=71 // pred_fallthru
        _
      // Predicated region
      $region105: #{mlp_forward.1} parent=71 // pred_check
        %p878 = pneg %p427
      $region106: #{mlp_forward.1} parent=71 // pred_check_branch
        %880 = sbr.rel (%p878) target = $region108
      $region107: #{mlp_forward.1} parent=71 // pred_region
        %p881 = scmp.lt.s32.totalorder %s41, 1
        %s882 = scalar_select %p881, %s41, 1
        %s883 = smul.addr %s882, 64
        %s884 = smul.addr %s883, 4
        %s885 = scalar_lea.vmem %s15, %s884
      $region108: #{mlp_forward.1} parent=71 // pred_fallthru
        _
      // Predicated region
      $region109: #{mlp_forward.1} parent=71 // pred_check
        %p886 = pneg %p453
      $region110: #{mlp_forward.1} parent=71 // pred_check_branch
        %888 = sbr.rel (%p886) target = $region112
      $region111: #{mlp_forward.1} parent=71 // pred_region
        %p889 = scmp.lt.s32.totalorder %s41, 1
        %s890 = scalar_select %p889, %s41, 1
        %s891 = smul.addr %s890, 32
        %s892 = smul.addr %s891, 4
        %s893 = scalar_lea.vmem %s16, %s892
      $region112: #{mlp_forward.1} parent=71 // pred_fallthru
        _
      // Predicated region
      $region113: #{mlp_forward.1} parent=71 // pred_check
        %p894 = pneg %p500
      $region114: #{mlp_forward.1} parent=71 // pred_check_branch
        %896 = sbr.rel (%p894) target = $region116
      $region115: #{mlp_forward.1} parent=71 // pred_region
        %p897 = scmp.lt.s32.totalorder %s41, 1
        %s898 = scalar_select %p897, %s41, 1
        %s899 = smul.addr %s898, 64
        %s900 = smul.addr %s899, 4
        %s901 = scalar_lea.vmem %s18, %s900
      $region116: #{mlp_forward.1} parent=71 // pred_fallthru
        _
      // Predicated region
      $region117: #{mlp_forward.1} parent=71 // pred_check
        %p902 = pneg %p589
      $region118: #{mlp_forward.1} parent=71 // pred_check_branch
        %904 = sbr.rel (%p902) target = $region120
      $region119: #{mlp_forward.1} parent=71 // pred_region
        %p905 = scmp.lt.s32.totalorder %s41, 1
        %s906 = scalar_select %p905, %s41, 1
        %s907 = smul.addr %s906, 64
        %s908 = smul.addr %s907, 4
        %s909 = scalar_lea.vmem %s22, %s908
      $region120: #{mlp_forward.1} parent=71 // pred_fallthru
        _
      // Predicated region
      $region121: #{mlp_forward.1} parent=71 // pred_check
        %p910 = pneg %p636
      $region122: #{mlp_forward.1} parent=71 // pred_check_branch
        %912 = sbr.rel (%p910) target = $region124
      $region123: #{mlp_forward.1} parent=71 // pred_region
        %p913 = scmp.lt.s32.totalorder %s41, 1
        %s914 = scalar_select %p913, %s41, 1
        %s915 = smul.addr %s914, 64
        %s916 = smul.addr %s915, 4
        %s917 = scalar_lea.vmem %s24, %s916
      $region124: #{mlp_forward.1} parent=71 // pred_fallthru
        _
      // Predicated region
      $region125: #{mlp_forward.1} parent=71 // pred_check
        %p918 = pneg %p683
      $region126: #{mlp_forward.1} parent=71 // pred_check_branch
        %920 = sbr.rel (%p918) target = $region128
      $region127: #{mlp_forward.1} parent=71 // pred_region
        %p921 = scmp.lt.s32.totalorder %s41, 1
        %s922 = scalar_select %p921, %s41, 1
        %s923 = smul.addr %s922, 32
        %s924 = smul.addr %s923, 4
        %s925 = scalar_lea.vmem %s26, %s924
      $region128: #{mlp_forward.1} parent=71 // pred_fallthru
        _
    $region72: #{mlp_forward.1} parent=5 // pred_fallthru
      _
    %p926 = scmp.le.s32.totalorder 1, %s34
    %p927 = scmp.lt.s32.totalorder %s34, 3
    %p928 = pnand %p926, %p927
    %p929 = pneg %p928
    // Predicated region
    $region129: #{mlp_forward.1} parent=5 // pred_check
      _
    $region130: #{mlp_forward.1} parent=5 // pred_check_branch
      %931 = sbr.rel (%p928) target = $region132
    $region131: #{mlp_forward.1} parent=5 // pred_region
      %s932 = ssub.s32 %s34, 1
      %s933 = smul.u32 8, %s44
      %p934 = scmp.lt.s32.totalorder %s43, 1
      %s935 = scalar_select %p934, %s43, 1
      %p936 = scmp.lt.s32.totalorder %s933, 7
      %s937 = scalar_select %p936, %s933, 7
      %s938 = smul.addr %s935, 8
      %s939 = sadd.s32 %s937, %s938
      %s940 = smul.addr %s939, 4
      %s941 = scalar_lea.vmem %s0, %s940
      %p942 = pneg %p74
      %p943 = pneg %p71
      %s944 = smul.u32 8, %s44
      %p945 = scmp.lt.s32.totalorder %s43, 1
      %s946 = scalar_select %p945, %s43, 1
      %p947 = scmp.lt.s32.totalorder %s944, 7
      %s948 = scalar_select %p947, %s944, 7
      %s949 = smul.addr %s946, 8
      %s950 = sadd.s32 %s948, %s949
      %s951 = smul.addr %s950, 4
      %s952 = scalar_lea.vmem %s1, %s951
      %p953 = pneg %p102
      %p954 = pneg %p99
      %s955 = smul.u32 8, %s44
      %p956 = scmp.lt.s32.totalorder %s43, 1
      %s957 = scalar_select %p956, %s43, 1
      %p958 = scmp.lt.s32.totalorder %s955, 7
      %s959 = scalar_select %p958, %s955, 7
      %s960 = smul.addr %s957, 8
      %s961 = sadd.s32 %s959, %s960
      %s962 = smul.addr %s961, 4
      %s963 = scalar_lea.vmem %s2, %s962
      %p964 = pneg %p130
      %p965 = pneg %p127
      %p966 = scmp.lt.s32.totalorder %s43, 1
      %s967 = scalar_select %p966, %s43, 1
      %s968 = smul.addr %s967, 32
      %s969 = smul.addr %s968, 4
      %s970 = scalar_lea.vmem %s3, %s969
      %p971 = pneg %p156
      %p972 = pneg %p153
      %p973 = pneg %p177
      %p974 = pneg %p174
      %p975 = scmp.lt.s32.totalorder %s43, 1
      %s976 = scalar_select %p975, %s43, 1
      %s977 = smul.addr %s976, 64
      %s978 = smul.addr %s977, 4
      %s979 = scalar_lea.vmem %s5, %s978
      %p980 = pneg %p203
      %p981 = pneg %p200
      %p982 = pneg %p224
      %p983 = pneg %p221
      %p984 = pneg %p245
      %p985 = pneg %p242
      %p986 = scmp.lt.s32.totalorder %s43, 1
      %s987 = scalar_select %p986, %s43, 1
      %s988 = smul.addr %s987, 64
      %s989 = smul.addr %s988, 4
      %s990 = scalar_lea.vmem %s8, %s989
      %p991 = pneg %p271
      %p992 = pneg %p268
      %p993 = scmp.lt.s32.totalorder %s43, 1
      %s994 = scalar_select %p993, %s43, 1
      %s995 = smul.addr %s994, 32
      %s996 = smul.addr %s995, 4
      %s997 = scalar_lea.vmem %s9, %s996
      %p998 = pneg %p297
      %p999 = pneg %p294
      %p1000 = pneg %p318
      %p1001 = pneg %p315
      %p1002 = scmp.lt.s32.totalorder %s43, 1
      %s1003 = scalar_select %p1002, %s43, 1
      %s1004 = smul.addr %s1003, 64
      %s1005 = smul.addr %s1004, 4
      %s1006 = scalar_lea.vmem %s11, %s1005
      %p1007 = pneg %p344
      %p1008 = pneg %p341
      %p1009 = pneg %p365
      %p1010 = pneg %p362
      %p1011 = pneg %p386
      %p1012 = pneg %p383
      %p1013 = pneg %p407
      %p1014 = pneg %p404
      %p1015 = scmp.lt.s32.totalorder %s43, 1
      %s1016 = scalar_select %p1015, %s43, 1
      %s1017 = smul.addr %s1016, 64
      %s1018 = smul.addr %s1017, 4
      %s1019 = scalar_lea.vmem %s15, %s1018
      %p1020 = pneg %p433
      %p1021 = pneg %p430
      %p1022 = scmp.lt.s32.totalorder %s43, 1
      %s1023 = scalar_select %p1022, %s43, 1
      %s1024 = smul.addr %s1023, 32
      %s1025 = smul.addr %s1024, 4
      %s1026 = scalar_lea.vmem %s16, %s1025
      %p1027 = pneg %p459
      %p1028 = pneg %p456
      %p1029 = pneg %p480
      %p1030 = pneg %p477
      %p1031 = scmp.lt.s32.totalorder %s43, 1
      %s1032 = scalar_select %p1031, %s43, 1
      %s1033 = smul.addr %s1032, 64
      %s1034 = smul.addr %s1033, 4
      %s1035 = scalar_lea.vmem %s18, %s1034
      %p1036 = pneg %p506
      %p1037 = pneg %p503
      %p1038 = pneg %p527
      %p1039 = pneg %p524
      %p1040 = pneg %p548
      %p1041 = pneg %p545
      %p1042 = pneg %p569
      %p1043 = pneg %p566
      %p1044 = scmp.lt.s32.totalorder %s43, 1
      %s1045 = scalar_select %p1044, %s43, 1
      %s1046 = smul.addr %s1045, 64
      %s1047 = smul.addr %s1046, 4
      %s1048 = scalar_lea.vmem %s22, %s1047
      %p1049 = pneg %p595
      %p1050 = pneg %p592
      %p1051 = pneg %p616
      %p1052 = pneg %p613
      %p1053 = scmp.lt.s32.totalorder %s43, 1
      %s1054 = scalar_select %p1053, %s43, 1
      %s1055 = smul.addr %s1054, 64
      %s1056 = smul.addr %s1055, 4
      %s1057 = scalar_lea.vmem %s24, %s1056
      %p1058 = pneg %p642
      %p1059 = pneg %p639
      %p1060 = pneg %p663
      %p1061 = pneg %p660
      %p1062 = scmp.lt.s32.totalorder %s43, 1
      %s1063 = scalar_select %p1062, %s43, 1
      %s1064 = smul.addr %s1063, 32
      %s1065 = smul.addr %s1064, 4
      %s1066 = scalar_lea.vmem %s26, %s1065
      %p1067 = pneg %p689
      %p1068 = pneg %p686
      %p1069 = pneg %p710
      %p1070 = pneg %p707
      %p1071 = pneg %p738
      %p1072 = pneg %p735
      %s1073 = smul.u32 8, %s44
      %p1074 = scmp.lt.s32.totalorder %s43, 1
      %s1075 = scalar_select %p1074, %s43, 1
      %p1076 = scmp.lt.s32.totalorder %s1073, 7
      %s1077 = scalar_select %p1076, %s1073, 7
      %s1078 = smul.addr %s1075, 8
      %s1079 = sadd.s32 %s1077, %s1078
      %s1080 = smul.addr %s1079, 4
      %s1081 = scalar_lea.vmem %s28, %s1080
      %s1082 = smul.u32 8, %s44
      %p1083 = scmp.lt.s32.totalorder %s43, 1
      %s1084 = scalar_select %p1083, %s43, 1
      %p1085 = scmp.lt.s32.totalorder %s1082, 7
      %s1086 = scalar_select %p1085, %s1082, 7
      %s1087 = smul.addr %s1084, 8
      %s1088 = sadd.s32 %s1086, %s1087
      %s1089 = smul.addr %s1088, 4
      %s1090 = scalar_lea.vmem %s0, %s1089
      %s1091 = smul.u32 8, %s44
      %s1092 = smul.u32 8, %s44
      %p1093 = scmp.lt.s32.totalorder %s43, 1
      %s1094 = scalar_select %p1093, %s43, 1
      %p1095 = scmp.lt.s32.totalorder %s1092, 7
      %s1096 = scalar_select %p1095, %s1092, 7
      %s1097 = smul.addr %s1094, 8
      %s1098 = sadd.s32 %s1096, %s1097
      %s1099 = smul.addr %s1098, 4
      %s1100 = scalar_lea.vmem %s1, %s1099
      %s1101 = smul.u32 8, %s44
      %s1102 = smul.u32 8, %s44
      %p1103 = scmp.lt.s32.totalorder %s43, 1
      %s1104 = scalar_select %p1103, %s43, 1
      %p1105 = scmp.lt.s32.totalorder %s1102, 7
      %s1106 = scalar_select %p1105, %s1102, 7
      %s1107 = smul.addr %s1104, 8
      %s1108 = sadd.s32 %s1106, %s1107
      %s1109 = smul.addr %s1108, 4
      %s1110 = scalar_lea.vmem %s2, %s1109
      %s1111 = smul.u32 8, %s44
      %p1112 = scmp.lt.s32.totalorder %s43, 1
      %s1113 = scalar_select %p1112, %s43, 1
      %s1114 = smul.addr %s1113, 32
      %s1115 = smul.addr %s1114, 4
      %s1116 = scalar_lea.vmem %s3, %s1115
      %p1117 = scmp.lt.s32.totalorder %s43, 1
      %s1118 = scalar_select %p1117, %s43, 1
      %s1119 = smul.addr %s1118, 64
      %s1120 = smul.addr %s1119, 4
      %s1121 = scalar_lea.vmem %s5, %s1120
      %p1122 = scmp.lt.s32.totalorder %s43, 1
      %s1123 = scalar_select %p1122, %s43, 1
      %s1124 = smul.addr %s1123, 64
      %s1125 = smul.addr %s1124, 4
      %s1126 = scalar_lea.vmem %s8, %s1125
      %p1127 = scmp.lt.s32.totalorder %s43, 1
      %s1128 = scalar_select %p1127, %s43, 1
      %s1129 = smul.addr %s1128, 32
      %s1130 = smul.addr %s1129, 4
      %s1131 = scalar_lea.vmem %s9, %s1130
      %p1132 = scmp.lt.s32.totalorder %s43, 1
      %s1133 = scalar_select %p1132, %s43, 1
      %s1134 = smul.addr %s1133, 64
      %s1135 = smul.addr %s1134, 4
      %s1136 = scalar_lea.vmem %s11, %s1135
      %p1137 = scmp.lt.s32.totalorder %s43, 1
      %s1138 = scalar_select %p1137, %s43, 1
      %s1139 = smul.addr %s1138, 64
      %s1140 = smul.addr %s1139, 4
      %s1141 = scalar_lea.vmem %s15, %s1140
      %p1142 = scmp.lt.s32.totalorder %s43, 1
      %s1143 = scalar_select %p1142, %s43, 1
      %s1144 = smul.addr %s1143, 32
      %s1145 = smul.addr %s1144, 4
      %s1146 = scalar_lea.vmem %s16, %s1145
      %p1147 = scmp.lt.s32.totalorder %s43, 1
      %s1148 = scalar_select %p1147, %s43, 1
      %s1149 = smul.addr %s1148, 64
      %s1150 = smul.addr %s1149, 4
      %s1151 = scalar_lea.vmem %s18, %s1150
      %p1152 = scmp.lt.s32.totalorder %s43, 1
      %s1153 = scalar_select %p1152, %s43, 1
      %s1154 = smul.addr %s1153, 64
      %s1155 = smul.addr %s1154, 4
      %s1156 = scalar_lea.vmem %s22, %s1155
      %p1157 = scmp.lt.s32.totalorder %s43, 1
      %s1158 = scalar_select %p1157, %s43, 1
      %s1159 = smul.addr %s1158, 64
      %s1160 = smul.addr %s1159, 4
      %s1161 = scalar_lea.vmem %s24, %s1160
      %p1162 = scmp.lt.s32.totalorder %s43, 1
      %s1163 = scalar_select %p1162, %s43, 1
      %s1164 = smul.addr %s1163, 32
      %s1165 = smul.addr %s1164, 4
      %s1166 = scalar_lea.vmem %s26, %s1165
      %s1167 = smul.u32 8, %s44
      %p1168 = scmp.lt.s32.totalorder %s43, 1
      %s1169 = scalar_select %p1168, %s43, 1
      %p1170 = scmp.lt.s32.totalorder %s1167, 7
      %s1171 = scalar_select %p1170, %s1167, 7
      %s1172 = smul.addr %s1169, 8
      %s1173 = sadd.s32 %s1171, %s1172
      %s1174 = smul.addr %s1173, 4
      %s1175 = scalar_lea.vmem %s28, %s1174
      %s1176 = smul.u32 8, %s44
      %v1177 = vld [vmem:[%s1090] sm:$0xf]
      %v1178 = vld [vmem:[%s1090 + $0x4] sm:$0xf]
      %v1179 = vld [vmem:[%s1090 + $0x8] sm:$0xf]
      %v1180 = vld [vmem:[%s1090 + $0xc] sm:$0xf]
      %v1181 = vld [vmem:[%s1090 + $0x10] sm:$0xf]
      %v1182 = vld [vmem:[%s1090 + $0x14] sm:$0xf]
      %v1183 = vld [vmem:[%s1090 + $0x18] sm:$0xf]
      %v1184 = vld [vmem:[%s1090 + $0x1c] sm:$0xf]
      %v1185 = vld [vmem:[%s1100] sm:$0xf]
      %v1186 = vld [vmem:[%s1100 + $0x4] sm:$0xf]
      %v1187 = vld [vmem:[%s1100 + $0x8] sm:$0xf]
      %v1188 = vld [vmem:[%s1100 + $0xc] sm:$0xf]
      %v1189 = vld [vmem:[%s1100 + $0x10] sm:$0xf]
      %v1190 = vld [vmem:[%s1100 + $0x14] sm:$0xf]
      %v1191 = vld [vmem:[%s1100 + $0x18] sm:$0xf]
      %v1192 = vld [vmem:[%s1100 + $0x1c] sm:$0xf]
      %v1193 = vld [vmem:[%s1110] sm:$0xf]
      %v1194 = vld [vmem:[%s1110 + $0x4] sm:$0xf]
      %v1195 = vld [vmem:[%s1110 + $0x8] sm:$0xf]
      %v1196 = vld [vmem:[%s1110 + $0xc] sm:$0xf]
      %v1197 = vld [vmem:[%s1110 + $0x10] sm:$0xf]
      %v1198 = vld [vmem:[%s1110 + $0x14] sm:$0xf]
      %v1199 = vld [vmem:[%s1110 + $0x18] sm:$0xf]
      %v1200 = vld [vmem:[%s1110 + $0x1c] sm:$0xf]
      %v1201 = vld [vmem:[%s1116] sm:$0xff]
      %v1202 = vld [vmem:[%s1116 + $0x8] sm:$0xff]
      %v1203 = vld [vmem:[%s1116 + $0x10] sm:$0xff]
      %v1204 = vld [vmem:[%s1116 + $0x18] sm:$0xff]
      %v1205 = vld [vmem:[%s1116 + $0x20] sm:$0xff]
      %v1206 = vld [vmem:[%s1116 + $0x28] sm:$0xff]
      %v1207 = vld [vmem:[%s1116 + $0x30] sm:$0xff]
      %v1208 = vld [vmem:[%s1116 + $0x38] sm:$0xff]
      %v1209 = vld [vmem:[%s1116 + $0x40] sm:$0xff]
      %v1210 = vld [vmem:[%s1116 + $0x48] sm:$0xff]
      %v1211 = vld [vmem:[%s1116 + $0x50] sm:$0xff]
      %v1212 = vld [vmem:[%s1116 + $0x58] sm:$0xff]
      %v1213 = vld [vmem:[%s1116 + $0x60] sm:$0xff]
      %v1214 = vld [vmem:[%s1116 + $0x68] sm:$0xff]
      %v1215 = vld [vmem:[%s1116 + $0x70] sm:$0xff]
      %v1216 = vld [vmem:[%s1116 + $0x78] sm:$0xff]
      %v1217 = vld [vmem:[%s4] sm:$0x3]
      %v1219 = vperm.slane %v1217, 0
      %v1220 = vperm.slane %v1217, 1
      %v1231 = vunpack.c.l.b16 %v1177
      %v1232 = vunpack.c.l.b16 %v1178
      %v1233 = vunpack.c.l.b16 %v1179
      %v1234 = vunpack.c.l.b16 %v1180
      %v1235 = vunpack.c.l.b16 %v1181
      %v1236 = vunpack.c.l.b16 %v1182
      %v1237 = vunpack.c.l.b16 %v1183
      %v1238 = vunpack.c.l.b16 %v1184
      %v1239 = vpack.c.b16 %v1232, %v1231
      %v1240 = vpack.c.b16 %v1234, %v1233
      %v1241 = vpack.c.b16 %v1236, %v1235
      %v1242 = vpack.c.b16 %v1238, %v1237
      %v1263 = vunpack.c.l.b16 %v1201
      %v1264 = vunpack.c.h.b16 %v1201
      %v1265 = vunpack.c.l.b16 %v1202
      %v1266 = vunpack.c.h.b16 %v1202
      %v1267 = vunpack.c.l.b16 %v1203
      %v1268 = vunpack.c.h.b16 %v1203
      %v1269 = vunpack.c.l.b16 %v1204
      %v1270 = vunpack.c.h.b16 %v1204
      %v1271 = vunpack.c.l.b16 %v1205
      %v1272 = vunpack.c.h.b16 %v1205
      %v1273 = vunpack.c.l.b16 %v1206
      %v1274 = vunpack.c.h.b16 %v1206
      %v1275 = vunpack.c.l.b16 %v1207
      %v1276 = vunpack.c.h.b16 %v1207
      %v1277 = vunpack.c.l.b16 %v1208
      %v1278 = vunpack.c.h.b16 %v1208
      %v1279 = vunpack.c.l.b16 %v1209
      %v1280 = vunpack.c.h.b16 %v1209
      %v1281 = vunpack.c.l.b16 %v1210
      %v1282 = vunpack.c.h.b16 %v1210
      %v1283 = vunpack.c.l.b16 %v1211
      %v1284 = vunpack.c.h.b16 %v1211
      %v1285 = vunpack.c.l.b16 %v1212
      %v1286 = vunpack.c.h.b16 %v1212
      %v1287 = vunpack.c.l.b16 %v1213
      %v1288 = vunpack.c.h.b16 %v1213
      %v1289 = vunpack.c.l.b16 %v1214
      %v1290 = vunpack.c.h.b16 %v1214
      %v1291 = vunpack.c.l.b16 %v1215
      %v1292 = vunpack.c.h.b16 %v1215
      %v1293 = vunpack.c.l.b16 %v1216
      %v1294 = vunpack.c.h.b16 %v1216
      %v1295 = vpack.c.b16 %v1265, %v1263
      %v1296 = vpack.c.b16 %v1266, %v1264
      %v1297 = vpack.c.b16 %v1269, %v1267
      %v1298 = vpack.c.b16 %v1270, %v1268
      %v1299 = vpack.c.b16 %v1273, %v1271
      %v1300 = vpack.c.b16 %v1274, %v1272
      %v1301 = vpack.c.b16 %v1277, %v1275
      %v1302 = vpack.c.b16 %v1278, %v1276
      %v1303 = vpack.c.b16 %v1281, %v1279
      %v1304 = vpack.c.b16 %v1282, %v1280
      %v1305 = vpack.c.b16 %v1285, %v1283
      %v1306 = vpack.c.b16 %v1286, %v1284
      %v1307 = vpack.c.b16 %v1289, %v1287
      %v1308 = vpack.c.b16 %v1290, %v1288
      %v1309 = vpack.c.b16 %v1293, %v1291
      %v1310 = vpack.c.b16 %v1294, %v1292
      %1327 = vmatpush.bf16.msra.mxu0 %v1309
      %1328 = vmatpush.bf16.msra.mxu0 %v1307
      %1329 = vmatpush.bf16.msra.mxu0 %v1305
      %1330 = vmatpush.bf16.msra.mxu0 %v1303
      %1331 = vmatpush.bf16.msra.mxu0 %v1301
      %1332 = vmatpush.bf16.msra.mxu0 %v1299
      %1333 = vmatpush.bf16.msra.mxu0 %v1297
      %1334 = vmatpush.bf16.msra.mxu0 %v1295
      %1335 = vmatmul.bf16.gmra.mxu0 %v1239
      %v1336 = vpop.f32.mrf.mxu0
      %v1337 = vadd.f32 %v1219, %v1336
      %v1338 = vpop.f32.mrf.mxu0
      %v1339 = vadd.f32 %v1219, %v1338
      %1340 = vmatmul.bf16.gmra.mxu0 %v1240
      %v1341 = vpop.f32.mrf.mxu0
      %v1342 = vadd.f32 %v1219, %v1341
      %v1343 = vpop.f32.mrf.mxu0
      %v1344 = vadd.f32 %v1219, %v1343
      %1345 = vmatmul.bf16.gmra.mxu0 %v1241
      %v1346 = vpop.f32.mrf.mxu0
      %v1347 = vadd.f32 %v1219, %v1346
      %v1348 = vpop.f32.mrf.mxu0
      %v1349 = vadd.f32 %v1219, %v1348
      %1350 = vmatmul.bf16.gmra.mxu0 %v1242
      %v1351 = vpop.f32.mrf.mxu0
      %v1352 = vadd.f32 %v1219, %v1351
      %v1353 = vpop.f32.mrf.mxu0
      %v1354 = vadd.f32 %v1219, %v1353
      %1355 = vdwg.mxu0
      %1356 = vmatpush.bf16.msra.mxu0 %v1310
      %1357 = vmatpush.bf16.msra.mxu0 %v1308
      %1358 = vmatpush.bf16.msra.mxu0 %v1306
      %1359 = vmatpush.bf16.msra.mxu0 %v1304
      %1360 = vmatpush.bf16.msra.mxu0 %v1302
      %1361 = vmatpush.bf16.msra.mxu0 %v1300
      %1362 = vmatpush.bf16.msra.mxu0 %v1298
      %1363 = vmatpush.bf16.msra.mxu0 %v1296
      %1364 = vmatmul.bf16.gmra.mxu0 %v1239
      %v1365 = vpop.f32.mrf.mxu0
      %v1366 = vadd.f32 %v1220, %v1365
      %v1367 = vpop.f32.mrf.mxu0
      %v1368 = vadd.f32 %v1220, %v1367
      %1369 = vmatmul.bf16.gmra.mxu0 %v1240
      %v1370 = vpop.f32.mrf.mxu0
      %v1371 = vadd.f32 %v1220, %v1370
      %v1372 = vpop.f32.mrf.mxu0
      %v1373 = vadd.f32 %v1220, %v1372
      %1374 = vmatmul.bf16.gmra.mxu0 %v1241
      %v1375 = vpop.f32.mrf.mxu0
      %v1376 = vadd.f32 %v1220, %v1375
      %v1377 = vpop.f32.mrf.mxu0
      %v1378 = vadd.f32 %v1220, %v1377
      %1379 = vmatmul.bf16.gmra.mxu0 %v1242
      %v1380 = vpop.f32.mrf.mxu0
      %v1381 = vadd.f32 %v1220, %v1380
      %v1382 = vpop.f32.mrf.mxu0
      %v1383 = vadd.f32 %v1220, %v1382
      %1384 = vdwg.mxu0
      %v1385 = vpack.c.bf16 %v1366, %v1337
      %v1386 = vpack.c.bf16 %v1368, %v1339
      %v1387 = vpack.c.bf16 %v1371, %v1342
      %v1388 = vpack.c.bf16 %v1373, %v1344
      %v1389 = vpack.c.bf16 %v1376, %v1347
      %v1390 = vpack.c.bf16 %v1378, %v1349
      %v1391 = vpack.c.bf16 %v1381, %v1352
      %v1392 = vpack.c.bf16 %v1383, %v1354
      %v1393 = vunpack.c.l.bf16 %v1385
      %v1394 = vunpack.c.h.bf16 %v1385
      %v1395 = vunpack.c.l.bf16 %v1386
      %v1396 = vunpack.c.h.bf16 %v1386
      %v1397 = vunpack.c.l.bf16 %v1387
      %v1398 = vunpack.c.h.bf16 %v1387
      %v1399 = vunpack.c.l.bf16 %v1388
      %v1400 = vunpack.c.h.bf16 %v1388
      %v1401 = vunpack.c.l.bf16 %v1389
      %v1402 = vunpack.c.h.bf16 %v1389
      %v1403 = vunpack.c.l.bf16 %v1390
      %v1404 = vunpack.c.h.bf16 %v1390
      %v1405 = vunpack.c.l.bf16 %v1391
      %v1406 = vunpack.c.h.bf16 %v1391
      %v1407 = vunpack.c.l.bf16 %v1392
      %v1408 = vunpack.c.h.bf16 %v1392
      %v1409 = vmul.f32 %v1393, 0.20019531
      %v1410 = vmul.f32 %v1394, 0.20019531
      %v1411 = vmul.f32 %v1395, 0.20019531
      %v1412 = vmul.f32 %v1396, 0.20019531
      %v1413 = vmul.f32 %v1397, 0.20019531
      %v1414 = vmul.f32 %v1398, 0.20019531
      %v1415 = vmul.f32 %v1399, 0.20019531
      %v1416 = vmul.f32 %v1400, 0.20019531
      %v1417 = vmul.f32 %v1401, 0.20019531
      %v1418 = vmul.f32 %v1402, 0.20019531
      %v1419 = vmul.f32 %v1403, 0.20019531
      %v1420 = vmul.f32 %v1404, 0.20019531
      %v1421 = vmul.f32 %v1405, 0.20019531
      %v1422 = vmul.f32 %v1406, 0.20019531
      %v1423 = vmul.f32 %v1407, 0.20019531
      %v1424 = vmul.f32 %v1408, 0.20019531
      %v1425 = vpack.c.bf16 %v1410, %v1409
      %v1426 = vpack.c.bf16 %v1412, %v1411
      %v1427 = vpack.c.bf16 %v1414, %v1413
      %v1428 = vpack.c.bf16 %v1416, %v1415
      %v1429 = vpack.c.bf16 %v1418, %v1417
      %v1430 = vpack.c.bf16 %v1420, %v1419
      %v1431 = vpack.c.bf16 %v1422, %v1421
      %v1432 = vpack.c.bf16 %v1424, %v1423
      %v1433 = vunpack.c.l.bf16 %v1425
      %v1434 = vunpack.c.h.bf16 %v1425
      %v1435 = vunpack.c.l.bf16 %v1426
      %v1436 = vunpack.c.h.bf16 %v1426
      %v1437 = vunpack.c.l.bf16 %v1427
      %v1438 = vunpack.c.h.bf16 %v1427
      %v1439 = vunpack.c.l.bf16 %v1428
      %v1440 = vunpack.c.h.bf16 %v1428
      %v1441 = vunpack.c.l.bf16 %v1429
      %v1442 = vunpack.c.h.bf16 %v1429
      %v1443 = vunpack.c.l.bf16 %v1430
      %v1444 = vunpack.c.h.bf16 %v1430
      %v1445 = vunpack.c.l.bf16 %v1431
      %v1446 = vunpack.c.h.bf16 %v1431
      %v1447 = vunpack.c.l.bf16 %v1432
      %v1448 = vunpack.c.h.bf16 %v1432
      %v1449 = vmax.f32 %v1393, %v1433
      %v1450 = vmax.f32 %v1394, %v1434
      %v1451 = vmax.f32 %v1395, %v1435
      %v1452 = vmax.f32 %v1396, %v1436
      %v1453 = vmax.f32 %v1397, %v1437
      %v1454 = vmax.f32 %v1398, %v1438
      %v1455 = vmax.f32 %v1399, %v1439
      %v1456 = vmax.f32 %v1400, %v1440
      %v1457 = vmax.f32 %v1401, %v1441
      %v1458 = vmax.f32 %v1402, %v1442
      %v1459 = vmax.f32 %v1403, %v1443
      %v1460 = vmax.f32 %v1404, %v1444
      %v1461 = vmax.f32 %v1405, %v1445
      %v1462 = vmax.f32 %v1406, %v1446
      %v1463 = vmax.f32 %v1407, %v1447
      %v1464 = vmax.f32 %v1408, %v1448
      %v1465 = vpack.c.bf16 %v1451, %v1449
      %v1466 = vpack.c.bf16 %v1452, %v1450
      %v1467 = vpack.c.bf16 %v1455, %v1453
      %v1468 = vpack.c.bf16 %v1456, %v1454
      %v1469 = vpack.c.bf16 %v1459, %v1457
      %v1470 = vpack.c.bf16 %v1460, %v1458
      %v1471 = vpack.c.bf16 %v1463, %v1461
      %v1472 = vpack.c.bf16 %v1464, %v1462
      %v1473 = vld [vmem:[%s1121] sm:$0xff]
      %v1474 = vld [vmem:[%s1121 + $0x8] sm:$0xff]
      %v1475 = vld [vmem:[%s1121 + $0x10] sm:$0xff]
      %v1476 = vld [vmem:[%s1121 + $0x18] sm:$0xff]
      %v1477 = vld [vmem:[%s1121 + $0x20] sm:$0xff]
      %v1478 = vld [vmem:[%s1121 + $0x28] sm:$0xff]
      %v1479 = vld [vmem:[%s1121 + $0x30] sm:$0xff]
      %v1480 = vld [vmem:[%s1121 + $0x38] sm:$0xff]
      %v1481 = vld [vmem:[%s1121 + $0x40] sm:$0xff]
      %v1482 = vld [vmem:[%s1121 + $0x48] sm:$0xff]
      %v1483 = vld [vmem:[%s1121 + $0x50] sm:$0xff]
      %v1484 = vld [vmem:[%s1121 + $0x58] sm:$0xff]
      %v1485 = vld [vmem:[%s1121 + $0x60] sm:$0xff]
      %v1486 = vld [vmem:[%s1121 + $0x68] sm:$0xff]
      %v1487 = vld [vmem:[%s1121 + $0x70] sm:$0xff]
      %v1488 = vld [vmem:[%s1121 + $0x78] sm:$0xff]
      %v1489 = vld [vmem:[%s1121 + $0x80] sm:$0xff]
      %v1490 = vld [vmem:[%s1121 + $0x88] sm:$0xff]
      %v1491 = vld [vmem:[%s1121 + $0x90] sm:$0xff]
      %v1492 = vld [vmem:[%s1121 + $0x98] sm:$0xff]
      %v1493 = vld [vmem:[%s1121 + $0xa0] sm:$0xff]
      %v1494 = vld [vmem:[%s1121 + $0xa8] sm:$0xff]
      %v1495 = vld [vmem:[%s1121 + $0xb0] sm:$0xff]
      %v1496 = vld [vmem:[%s1121 + $0xb8] sm:$0xff]
      %v1497 = vld [vmem:[%s1121 + $0xc0] sm:$0xff]
      %v1498 = vld [vmem:[%s1121 + $0xc8] sm:$0xff]
      %v1499 = vld [vmem:[%s1121 + $0xd0] sm:$0xff]
      %v1500 = vld [vmem:[%s1121 + $0xd8] sm:$0xff]
      %v1501 = vld [vmem:[%s1121 + $0xe0] sm:$0xff]
      %v1502 = vld [vmem:[%s1121 + $0xe8] sm:$0xff]
      %v1503 = vld [vmem:[%s1121 + $0xf0] sm:$0xff]
      %v1504 = vld [vmem:[%s1121 + $0xf8] sm:$0xff]
      %v1505 = vld [vmem:[%s6] sm:$0x3]
      %v1507 = vperm.slane %v1505, 0
      %v1508 = vperm.slane %v1505, 1
      %v1543 = vunpack.c.l.b16 %v1473
      %v1544 = vunpack.c.h.b16 %v1473
      %v1545 = vunpack.c.l.b16 %v1474
      %v1546 = vunpack.c.h.b16 %v1474
      %v1547 = vunpack.c.l.b16 %v1475
      %v1548 = vunpack.c.h.b16 %v1475
      %v1549 = vunpack.c.l.b16 %v1476
      %v1550 = vunpack.c.h.b16 %v1476
      %v1551 = vunpack.c.l.b16 %v1477
      %v1552 = vunpack.c.h.b16 %v1477
      %v1553 = vunpack.c.l.b16 %v1478
      %v1554 = vunpack.c.h.b16 %v1478
      %v1555 = vunpack.c.l.b16 %v1479
      %v1556 = vunpack.c.h.b16 %v1479
      %v1557 = vunpack.c.l.b16 %v1480
      %v1558 = vunpack.c.h.b16 %v1480
      %v1559 = vunpack.c.l.b16 %v1481
      %v1560 = vunpack.c.h.b16 %v1481
      %v1561 = vunpack.c.l.b16 %v1482
      %v1562 = vunpack.c.h.b16 %v1482
      %v1563 = vunpack.c.l.b16 %v1483
      %v1564 = vunpack.c.h.b16 %v1483
      %v1565 = vunpack.c.l.b16 %v1484
      %v1566 = vunpack.c.h.b16 %v1484
      %v1567 = vunpack.c.l.b16 %v1485
      %v1568 = vunpack.c.h.b16 %v1485
      %v1569 = vunpack.c.l.b16 %v1486
      %v1570 = vunpack.c.h.b16 %v1486
      %v1571 = vunpack.c.l.b16 %v1487
      %v1572 = vunpack.c.h.b16 %v1487
      %v1573 = vunpack.c.l.b16 %v1488
      %v1574 = vunpack.c.h.b16 %v1488
      %v1575 = vunpack.c.l.b16 %v1489
      %v1576 = vunpack.c.h.b16 %v1489
      %v1577 = vunpack.c.l.b16 %v1490
      %v1578 = vunpack.c.h.b16 %v1490
      %v1579 = vunpack.c.l.b16 %v1491
      %v1580 = vunpack.c.h.b16 %v1491
      %v1581 = vunpack.c.l.b16 %v1492
      %v1582 = vunpack.c.h.b16 %v1492
      %v1583 = vunpack.c.l.b16 %v1493
      %v1584 = vunpack.c.h.b16 %v1493
      %v1585 = vunpack.c.l.b16 %v1494
      %v1586 = vunpack.c.h.b16 %v1494
      %v1587 = vunpack.c.l.b16 %v1495
      %v1588 = vunpack.c.h.b16 %v1495
      %v1589 = vunpack.c.l.b16 %v1496
      %v1590 = vunpack.c.h.b16 %v1496
      %v1591 = vunpack.c.l.b16 %v1497
      %v1592 = vunpack.c.h.b16 %v1497
      %v1593 = vunpack.c.l.b16 %v1498
      %v1594 = vunpack.c.h.b16 %v1498
      %v1595 = vunpack.c.l.b16 %v1499
      %v1596 = vunpack.c.h.b16 %v1499
      %v1597 = vunpack.c.l.b16 %v1500
      %v1598 = vunpack.c.h.b16 %v1500
      %v1599 = vunpack.c.l.b16 %v1501
      %v1600 = vunpack.c.h.b16 %v1501
      %v1601 = vunpack.c.l.b16 %v1502
      %v1602 = vunpack.c.h.b16 %v1502
      %v1603 = vunpack.c.l.b16 %v1503
      %v1604 = vunpack.c.h.b16 %v1503
      %v1605 = vunpack.c.l.b16 %v1504
      %v1606 = vunpack.c.h.b16 %v1504
      %v1607 = vpack.c.b16 %v1545, %v1543
      %v1608 = vpack.c.b16 %v1546, %v1544
      %v1609 = vpack.c.b16 %v1549, %v1547
      %v1610 = vpack.c.b16 %v1550, %v1548
      %v1611 = vpack.c.b16 %v1553, %v1551
      %v1612 = vpack.c.b16 %v1554, %v1552
      %v1613 = vpack.c.b16 %v1557, %v1555
      %v1614 = vpack.c.b16 %v1558, %v1556
      %v1615 = vpack.c.b16 %v1561, %v1559
      %v1616 = vpack.c.b16 %v1562, %v1560
      %v1617 = vpack.c.b16 %v1565, %v1563
      %v1618 = vpack.c.b16 %v1566, %v1564
      %v1619 = vpack.c.b16 %v1569, %v1567
      %v1620 = vpack.c.b16 %v1570, %v1568
      %v1621 = vpack.c.b16 %v1573, %v1571
      %v1622 = vpack.c.b16 %v1574, %v1572
      %v1623 = vpack.c.b16 %v1577, %v1575
      %v1624 = vpack.c.b16 %v1578, %v1576
      %v1625 = vpack.c.b16 %v1581, %v1579
      %v1626 = vpack.c.b16 %v1582, %v1580
      %v1627 = vpack.c.b16 %v1585, %v1583
      %v1628 = vpack.c.b16 %v1586, %v1584
      %v1629 = vpack.c.b16 %v1589, %v1587
      %v1630 = vpack.c.b16 %v1590, %v1588
      %v1631 = vpack.c.b16 %v1593, %v1591
      %v1632 = vpack.c.b16 %v1594, %v1592
      %v1633 = vpack.c.b16 %v1597, %v1595
      %v1634 = vpack.c.b16 %v1598, %v1596
      %v1635 = vpack.c.b16 %v1601, %v1599
      %v1636 = vpack.c.b16 %v1602, %v1600
      %v1637 = vpack.c.b16 %v1605, %v1603
      %v1638 = vpack.c.b16 %v1606, %v1604
      %1671 = vmatpush.bf16.msra.mxu0 %v1621
      %1672 = vmatpush.bf16.msra.mxu0 %v1619
      %1673 = vmatpush.bf16.msra.mxu0 %v1617
      %1674 = vmatpush.bf16.msra.mxu0 %v1615
      %1675 = vmatpush.bf16.msra.mxu0 %v1613
      %1676 = vmatpush.bf16.msra.mxu0 %v1611
      %1677 = vmatpush.bf16.msra.mxu0 %v1609
      %1678 = vmatpush.bf16.msra.mxu0 %v1607
      %1679 = vmatmul.bf16.gmra.mxu0 %v1465
      %v1680 = vpop.f32.mrf.mxu0
      %v1681 = vadd.f32 %v1507, %v1680
      %v1682 = vpop.f32.mrf.mxu0
      %v1683 = vadd.f32 %v1507, %v1682
      %1684 = vmatmul.bf16.gmra.mxu0 %v1467
      %v1685 = vpop.f32.mrf.mxu0
      %v1686 = vadd.f32 %v1507, %v1685
      %v1687 = vpop.f32.mrf.mxu0
      %v1688 = vadd.f32 %v1507, %v1687
      %1689 = vmatmul.bf16.gmra.mxu0 %v1469
      %v1690 = vpop.f32.mrf.mxu0
      %v1691 = vadd.f32 %v1507, %v1690
      %v1692 = vpop.f32.mrf.mxu0
      %v1693 = vadd.f32 %v1507, %v1692
      %1694 = vmatmul.bf16.gmra.mxu0 %v1471
      %v1695 = vpop.f32.mrf.mxu0
      %v1696 = vadd.f32 %v1507, %v1695
      %v1697 = vpop.f32.mrf.mxu0
      %v1698 = vadd.f32 %v1507, %v1697
      %1699 = vdwg.mxu0
      %1700 = vmatpush.bf16.msra.mxu0 %v1637
      %1701 = vmatpush.bf16.msra.mxu0 %v1635
      %1702 = vmatpush.bf16.msra.mxu0 %v1633
      %1703 = vmatpush.bf16.msra.mxu0 %v1631
      %1704 = vmatpush.bf16.msra.mxu0 %v1629
      %1705 = vmatpush.bf16.msra.mxu0 %v1627
      %1706 = vmatpush.bf16.msra.mxu0 %v1625
      %1707 = vmatpush.bf16.msra.mxu0 %v1623
      %1708 = vmatmul.bf16.gmra.mxu0 %v1466
      %v1709 = vpop.f32.mrf.mxu0
      %v1710 = vadd.f32 %v1681, %v1709
      %v1711 = vpop.f32.mrf.mxu0
      %v1712 = vadd.f32 %v1683, %v1711
      %1713 = vmatmul.bf16.gmra.mxu0 %v1468
      %v1714 = vpop.f32.mrf.mxu0
      %v1715 = vadd.f32 %v1686, %v1714
      %v1716 = vpop.f32.mrf.mxu0
      %v1717 = vadd.f32 %v1688, %v1716
      %1718 = vmatmul.bf16.gmra.mxu0 %v1470
      %v1719 = vpop.f32.mrf.mxu0
      %v1720 = vadd.f32 %v1691, %v1719
      %v1721 = vpop.f32.mrf.mxu0
      %v1722 = vadd.f32 %v1693, %v1721
      %1723 = vmatmul.bf16.gmra.mxu0 %v1472
      %v1724 = vpop.f32.mrf.mxu0
      %v1725 = vadd.f32 %v1696, %v1724
      %v1726 = vpop.f32.mrf.mxu0
      %v1727 = vadd.f32 %v1698, %v1726
      %1728 = vdwg.mxu0
      %1729 = vmatpush.bf16.msra.mxu0 %v1622
      %1730 = vmatpush.bf16.msra.mxu0 %v1620
      %1731 = vmatpush.bf16.msra.mxu0 %v1618
      %1732 = vmatpush.bf16.msra.mxu0 %v1616
      %1733 = vmatpush.bf16.msra.mxu0 %v1614
      %1734 = vmatpush.bf16.msra.mxu0 %v1612
      %1735 = vmatpush.bf16.msra.mxu0 %v1610
      %1736 = vmatpush.bf16.msra.mxu0 %v1608
      %1737 = vmatmul.bf16.gmra.mxu0 %v1465
      %v1738 = vpop.f32.mrf.mxu0
      %v1739 = vadd.f32 %v1508, %v1738
      %v1740 = vpop.f32.mrf.mxu0
      %v1741 = vadd.f32 %v1508, %v1740
      %1742 = vmatmul.bf16.gmra.mxu0 %v1467
      %v1743 = vpop.f32.mrf.mxu0
      %v1744 = vadd.f32 %v1508, %v1743
      %v1745 = vpop.f32.mrf.mxu0
      %v1746 = vadd.f32 %v1508, %v1745
      %1747 = vmatmul.bf16.gmra.mxu0 %v1469
      %v1748 = vpop.f32.mrf.mxu0
      %v1749 = vadd.f32 %v1508, %v1748
      %v1750 = vpop.f32.mrf.mxu0
      %v1751 = vadd.f32 %v1508, %v1750
      %1752 = vmatmul.bf16.gmra.mxu0 %v1471
      %v1753 = vpop.f32.mrf.mxu0
      %v1754 = vadd.f32 %v1508, %v1753
      %v1755 = vpop.f32.mrf.mxu0
      %v1756 = vadd.f32 %v1508, %v1755
      %1757 = vdwg.mxu0
      %1758 = vmatpush.bf16.msra.mxu0 %v1638
      %1759 = vmatpush.bf16.msra.mxu0 %v1636
      %1760 = vmatpush.bf16.msra.mxu0 %v1634
      %1761 = vmatpush.bf16.msra.mxu0 %v1632
      %1762 = vmatpush.bf16.msra.mxu0 %v1630
      %1763 = vmatpush.bf16.msra.mxu0 %v1628
      %1764 = vmatpush.bf16.msra.mxu0 %v1626
      %1765 = vmatpush.bf16.msra.mxu0 %v1624
      %1766 = vmatmul.bf16.gmra.mxu0 %v1466
      %v1767 = vpop.f32.mrf.mxu0
      %v1768 = vadd.f32 %v1739, %v1767
      %v1769 = vpop.f32.mrf.mxu0
      %v1770 = vadd.f32 %v1741, %v1769
      %1771 = vmatmul.bf16.gmra.mxu0 %v1468
      %v1772 = vpop.f32.mrf.mxu0
      %v1773 = vadd.f32 %v1744, %v1772
      %v1774 = vpop.f32.mrf.mxu0
      %v1775 = vadd.f32 %v1746, %v1774
      %1776 = vmatmul.bf16.gmra.mxu0 %v1470
      %v1777 = vpop.f32.mrf.mxu0
      %v1778 = vadd.f32 %v1749, %v1777
      %v1779 = vpop.f32.mrf.mxu0
      %v1780 = vadd.f32 %v1751, %v1779
      %1781 = vmatmul.bf16.gmra.mxu0 %v1472
      %v1782 = vpop.f32.mrf.mxu0
      %v1783 = vadd.f32 %v1754, %v1782
      %v1784 = vpop.f32.mrf.mxu0
      %v1785 = vadd.f32 %v1756, %v1784
      %1786 = vdwg.mxu0
      %v1787 = vpack.c.bf16 %v1768, %v1710
      %v1788 = vpack.c.bf16 %v1770, %v1712
      %v1789 = vpack.c.bf16 %v1773, %v1715
      %v1790 = vpack.c.bf16 %v1775, %v1717
      %v1791 = vpack.c.bf16 %v1778, %v1720
      %v1792 = vpack.c.bf16 %v1780, %v1722
      %v1793 = vpack.c.bf16 %v1783, %v1725
      %v1794 = vpack.c.bf16 %v1785, %v1727
      %v1795 = vunpack.c.l.bf16 %v1787
      %v1796 = vunpack.c.h.bf16 %v1787
      %v1797 = vunpack.c.l.bf16 %v1788
      %v1798 = vunpack.c.h.bf16 %v1788
      %v1799 = vunpack.c.l.bf16 %v1789
      %v1800 = vunpack.c.h.bf16 %v1789
      %v1801 = vunpack.c.l.bf16 %v1790
      %v1802 = vunpack.c.h.bf16 %v1790
      %v1803 = vunpack.c.l.bf16 %v1791
      %v1804 = vunpack.c.h.bf16 %v1791
      %v1805 = vunpack.c.l.bf16 %v1792
      %v1806 = vunpack.c.h.bf16 %v1792
      %v1807 = vunpack.c.l.bf16 %v1793
      %v1808 = vunpack.c.h.bf16 %v1793
      %v1809 = vunpack.c.l.bf16 %v1794
      %v1810 = vunpack.c.h.bf16 %v1794
      %v1811 = vmul.f32 %v1795, 0.20019531
      %v1812 = vmul.f32 %v1796, 0.20019531
      %v1813 = vmul.f32 %v1797, 0.20019531
      %v1814 = vmul.f32 %v1798, 0.20019531
      %v1815 = vmul.f32 %v1799, 0.20019531
      %v1816 = vmul.f32 %v1800, 0.20019531
      %v1817 = vmul.f32 %v1801, 0.20019531
      %v1818 = vmul.f32 %v1802, 0.20019531
      %v1819 = vmul.f32 %v1803, 0.20019531
      %v1820 = vmul.f32 %v1804, 0.20019531
      %v1821 = vmul.f32 %v1805, 0.20019531
      %v1822 = vmul.f32 %v1806, 0.20019531
      %v1823 = vmul.f32 %v1807, 0.20019531
      %v1824 = vmul.f32 %v1808, 0.20019531
      %v1825 = vmul.f32 %v1809, 0.20019531
      %v1826 = vmul.f32 %v1810, 0.20019531
      %v1827 = vpack.c.bf16 %v1812, %v1811
      %v1828 = vpack.c.bf16 %v1814, %v1813
      %v1829 = vpack.c.bf16 %v1816, %v1815
      %v1830 = vpack.c.bf16 %v1818, %v1817
      %v1831 = vpack.c.bf16 %v1820, %v1819
      %v1832 = vpack.c.bf16 %v1822, %v1821
      %v1833 = vpack.c.bf16 %v1824, %v1823
      %v1834 = vpack.c.bf16 %v1826, %v1825
      %v1835 = vunpack.c.l.bf16 %v1827
      %v1836 = vunpack.c.h.bf16 %v1827
      %v1837 = vunpack.c.l.bf16 %v1828
      %v1838 = vunpack.c.h.bf16 %v1828
      %v1839 = vunpack.c.l.bf16 %v1829
      %v1840 = vunpack.c.h.bf16 %v1829
      %v1841 = vunpack.c.l.bf16 %v1830
      %v1842 = vunpack.c.h.bf16 %v1830
      %v1843 = vunpack.c.l.bf16 %v1831
      %v1844 = vunpack.c.h.bf16 %v1831
      %v1845 = vunpack.c.l.bf16 %v1832
      %v1846 = vunpack.c.h.bf16 %v1832
      %v1847 = vunpack.c.l.bf16 %v1833
      %v1848 = vunpack.c.h.bf16 %v1833
      %v1849 = vunpack.c.l.bf16 %v1834
      %v1850 = vunpack.c.h.bf16 %v1834
      %v1851 = vmax.f32 %v1795, %v1835
      %v1852 = vmax.f32 %v1796, %v1836
      %v1853 = vmax.f32 %v1797, %v1837
      %v1854 = vmax.f32 %v1798, %v1838
      %v1855 = vmax.f32 %v1799, %v1839
      %v1856 = vmax.f32 %v1800, %v1840
      %v1857 = vmax.f32 %v1801, %v1841
      %v1858 = vmax.f32 %v1802, %v1842
      %v1859 = vmax.f32 %v1803, %v1843
      %v1860 = vmax.f32 %v1804, %v1844
      %v1861 = vmax.f32 %v1805, %v1845
      %v1862 = vmax.f32 %v1806, %v1846
      %v1863 = vmax.f32 %v1807, %v1847
      %v1864 = vmax.f32 %v1808, %v1848
      %v1865 = vmax.f32 %v1809, %v1849
      %v1866 = vmax.f32 %v1810, %v1850
      %v1867 = vpack.c.bf16 %v1852, %v1851
      %v1868 = vpack.c.bf16 %v1854, %v1853
      %v1869 = vpack.c.bf16 %v1856, %v1855
      %v1870 = vpack.c.bf16 %v1858, %v1857
      %v1871 = vpack.c.bf16 %v1860, %v1859
      %v1872 = vpack.c.bf16 %v1862, %v1861
      %v1873 = vpack.c.bf16 %v1864, %v1863
      %v1874 = vpack.c.bf16 %v1866, %v1865
      %v1875 = vld [vmem:[%s7] sm:$0xff]
      %v1876 = vld [vmem:[%s7 + $0x8] sm:$0xff]
      %v1877 = vld [vmem:[%s7 + $0x10] sm:$0xff]
      %v1878 = vld [vmem:[%s7 + $0x18] sm:$0xff]
      %v1879 = vld [vmem:[%s7 + $0x20] sm:$0xff]
      %v1880 = vld [vmem:[%s7 + $0x28] sm:$0xff]
      %v1881 = vld [vmem:[%s7 + $0x30] sm:$0xff]
      %v1882 = vld [vmem:[%s7 + $0x38] sm:$0xff]
      %v1883 = vld [vmem:[%s7 + $0x40] sm:$0xff]
      %v1884 = vld [vmem:[%s7 + $0x48] sm:$0xff]
      %v1885 = vld [vmem:[%s7 + $0x50] sm:$0xff]
      %v1886 = vld [vmem:[%s7 + $0x58] sm:$0xff]
      %v1887 = vld [vmem:[%s7 + $0x60] sm:$0xff]
      %v1888 = vld [vmem:[%s7 + $0x68] sm:$0xff]
      %v1889 = vld [vmem:[%s7 + $0x70] sm:$0xff]
      %v1890 = vld [vmem:[%s7 + $0x78] sm:$0xff]
      %v1907 = vunpack.c.l.b16 %v1875
      %v1908 = vunpack.c.h.b16 %v1875
      %v1909 = vunpack.c.l.b16 %v1876
      %v1910 = vunpack.c.h.b16 %v1876
      %v1911 = vunpack.c.l.b16 %v1877
      %v1912 = vunpack.c.h.b16 %v1877
      %v1913 = vunpack.c.l.b16 %v1878
      %v1914 = vunpack.c.h.b16 %v1878
      %v1915 = vunpack.c.l.b16 %v1879
      %v1916 = vunpack.c.h.b16 %v1879
      %v1917 = vunpack.c.l.b16 %v1880
      %v1918 = vunpack.c.h.b16 %v1880
      %v1919 = vunpack.c.l.b16 %v1881
      %v1920 = vunpack.c.h.b16 %v1881
      %v1921 = vunpack.c.l.b16 %v1882
      %v1922 = vunpack.c.h.b16 %v1882
      %v1923 = vunpack.c.l.b16 %v1883
      %v1924 = vunpack.c.h.b16 %v1883
      %v1925 = vunpack.c.l.b16 %v1884
      %v1926 = vunpack.c.h.b16 %v1884
      %v1927 = vunpack.c.l.b16 %v1885
      %v1928 = vunpack.c.h.b16 %v1885
      %v1929 = vunpack.c.l.b16 %v1886
      %v1930 = vunpack.c.h.b16 %v1886
      %v1931 = vunpack.c.l.b16 %v1887
      %v1932 = vunpack.c.h.b16 %v1887
      %v1933 = vunpack.c.l.b16 %v1888
      %v1934 = vunpack.c.h.b16 %v1888
      %v1935 = vunpack.c.l.b16 %v1889
      %v1936 = vunpack.c.h.b16 %v1889
      %v1937 = vunpack.c.l.b16 %v1890
      %v1938 = vunpack.c.h.b16 %v1890
      %v1939 = vpack.c.b16 %v1909, %v1907
      %v1940 = vpack.c.b16 %v1910, %v1908
      %v1941 = vpack.c.b16 %v1913, %v1911
      %v1942 = vpack.c.b16 %v1914, %v1912
      %v1943 = vpack.c.b16 %v1917, %v1915
      %v1944 = vpack.c.b16 %v1918, %v1916
      %v1945 = vpack.c.b16 %v1921, %v1919
      %v1946 = vpack.c.b16 %v1922, %v1920
      %v1947 = vpack.c.b16 %v1925, %v1923
      %v1948 = vpack.c.b16 %v1926, %v1924
      %v1949 = vpack.c.b16 %v1929, %v1927
      %v1950 = vpack.c.b16 %v1930, %v1928
      %v1951 = vpack.c.b16 %v1933, %v1931
      %v1952 = vpack.c.b16 %v1934, %v1932
      %v1953 = vpack.c.b16 %v1937, %v1935
      %v1954 = vpack.c.b16 %v1938, %v1936
      %1971 = vmatpush.bf16.msra.mxu0 %v1953
      %1972 = vmatpush.bf16.msra.mxu0 %v1951
      %1973 = vmatpush.bf16.msra.mxu0 %v1949
      %1974 = vmatpush.bf16.msra.mxu0 %v1947
      %1975 = vmatpush.bf16.msra.mxu0 %v1945
      %1976 = vmatpush.bf16.msra.mxu0 %v1943
      %1977 = vmatpush.bf16.msra.mxu0 %v1941
      %1978 = vmatpush.bf16.msra.mxu0 %v1939
      %1979 = vmatmul.bf16.gmra.mxu0 %v1239
      %v1980 = vpop.f32.mrf.mxu0
      %v1981 = vadd.f32 0.0, %v1980
      %v1982 = vpop.f32.mrf.mxu0
      %v1983 = vadd.f32 0.0, %v1982
      %1984 = vmatmul.bf16.gmra.mxu0 %v1240
      %v1985 = vpop.f32.mrf.mxu0
      %v1986 = vadd.f32 0.0, %v1985
      %v1987 = vpop.f32.mrf.mxu0
      %v1988 = vadd.f32 0.0, %v1987
      %1989 = vmatmul.bf16.gmra.mxu0 %v1241
      %v1990 = vpop.f32.mrf.mxu0
      %v1991 = vadd.f32 0.0, %v1990
      %v1992 = vpop.f32.mrf.mxu0
      %v1993 = vadd.f32 0.0, %v1992
      %1994 = vmatmul.bf16.gmra.mxu0 %v1242
      %v1995 = vpop.f32.mrf.mxu0
      %v1996 = vadd.f32 0.0, %v1995
      %v1997 = vpop.f32.mrf.mxu0
      %v1998 = vadd.f32 0.0, %v1997
      %1999 = vdwg.mxu0
      %2000 = vmatpush.bf16.msra.mxu0 %v1954
      %2001 = vmatpush.bf16.msra.mxu0 %v1952
      %2002 = vmatpush.bf16.msra.mxu0 %v1950
      %2003 = vmatpush.bf16.msra.mxu0 %v1948
      %2004 = vmatpush.bf16.msra.mxu0 %v1946
      %2005 = vmatpush.bf16.msra.mxu0 %v1944
      %2006 = vmatpush.bf16.msra.mxu0 %v1942
      %2007 = vmatpush.bf16.msra.mxu0 %v1940
      %2008 = vmatmul.bf16.gmra.mxu0 %v1239
      %v2009 = vpop.f32.mrf.mxu0
      %v2010 = vadd.f32 0.0, %v2009
      %v2011 = vpop.f32.mrf.mxu0
      %v2012 = vadd.f32 0.0, %v2011
      %2013 = vmatmul.bf16.gmra.mxu0 %v1240
      %v2014 = vpop.f32.mrf.mxu0
      %v2015 = vadd.f32 0.0, %v2014
      %v2016 = vpop.f32.mrf.mxu0
      %v2017 = vadd.f32 0.0, %v2016
      %2018 = vmatmul.bf16.gmra.mxu0 %v1241
      %v2019 = vpop.f32.mrf.mxu0
      %v2020 = vadd.f32 0.0, %v2019
      %v2021 = vpop.f32.mrf.mxu0
      %v2022 = vadd.f32 0.0, %v2021
      %2023 = vmatmul.bf16.gmra.mxu0 %v1242
      %v2024 = vpop.f32.mrf.mxu0
      %v2025 = vadd.f32 0.0, %v2024
      %v2026 = vpop.f32.mrf.mxu0
      %v2027 = vadd.f32 0.0, %v2026
      %2028 = vdwg.mxu0
      %v2029 = vpack.c.bf16 %v2010, %v1981
      %v2030 = vpack.c.bf16 %v2012, %v1983
      %v2031 = vpack.c.bf16 %v2015, %v1986
      %v2032 = vpack.c.bf16 %v2017, %v1988
      %v2033 = vpack.c.bf16 %v2020, %v1991
      %v2034 = vpack.c.bf16 %v2022, %v1993
      %v2035 = vpack.c.bf16 %v2025, %v1996
      %v2036 = vpack.c.bf16 %v2027, %v1998
      %v2037 = vunpack.c.l.bf16 %v1867
      %v2038 = vunpack.c.h.bf16 %v1867
      %v2039 = vunpack.c.l.bf16 %v1868
      %v2040 = vunpack.c.h.bf16 %v1868
      %v2041 = vunpack.c.l.bf16 %v1869
      %v2042 = vunpack.c.h.bf16 %v1869
      %v2043 = vunpack.c.l.bf16 %v1870
      %v2044 = vunpack.c.h.bf16 %v1870
      %v2045 = vunpack.c.l.bf16 %v1871
      %v2046 = vunpack.c.h.bf16 %v1871
      %v2047 = vunpack.c.l.bf16 %v1872
      %v2048 = vunpack.c.h.bf16 %v1872
      %v2049 = vunpack.c.l.bf16 %v1873
      %v2050 = vunpack.c.h.bf16 %v1873
      %v2051 = vunpack.c.l.bf16 %v1874
      %v2052 = vunpack.c.h.bf16 %v1874
      %v2053 = vunpack.c.l.bf16 %v2029
      %v2054 = vunpack.c.h.bf16 %v2029
      %v2055 = vunpack.c.l.bf16 %v2030
      %v2056 = vunpack.c.h.bf16 %v2030
      %v2057 = vunpack.c.l.bf16 %v2031
      %v2058 = vunpack.c.h.bf16 %v2031
      %v2059 = vunpack.c.l.bf16 %v2032
      %v2060 = vunpack.c.h.bf16 %v2032
      %v2061 = vunpack.c.l.bf16 %v2033
      %v2062 = vunpack.c.h.bf16 %v2033
      %v2063 = vunpack.c.l.bf16 %v2034
      %v2064 = vunpack.c.h.bf16 %v2034
      %v2065 = vunpack.c.l.bf16 %v2035
      %v2066 = vunpack.c.h.bf16 %v2035
      %v2067 = vunpack.c.l.bf16 %v2036
      %v2068 = vunpack.c.h.bf16 %v2036
      %v2069 = vadd.f32 %v2037, %v2053
      %v2070 = vadd.f32 %v2038, %v2054
      %v2071 = vadd.f32 %v2039, %v2055
      %v2072 = vadd.f32 %v2040, %v2056
      %v2073 = vadd.f32 %v2041, %v2057
      %v2074 = vadd.f32 %v2042, %v2058
      %v2075 = vadd.f32 %v2043, %v2059
      %v2076 = vadd.f32 %v2044, %v2060
      %v2077 = vadd.f32 %v2045, %v2061
      %v2078 = vadd.f32 %v2046, %v2062
      %v2079 = vadd.f32 %v2047, %v2063
      %v2080 = vadd.f32 %v2048, %v2064
      %v2081 = vadd.f32 %v2049, %v2065
      %v2082 = vadd.f32 %v2050, %v2066
      %v2083 = vadd.f32 %v2051, %v2067
      %v2084 = vadd.f32 %v2052, %v2068
      %v2085 = vpack.c.bf16 %v2071, %v2069
      %v2086 = vpack.c.bf16 %v2072, %v2070
      %v2087 = vpack.c.bf16 %v2075, %v2073
      %v2088 = vpack.c.bf16 %v2076, %v2074
      %v2089 = vpack.c.bf16 %v2079, %v2077
      %v2090 = vpack.c.bf16 %v2080, %v2078
      %v2091 = vpack.c.bf16 %v2083, %v2081
      %v2092 = vpack.c.bf16 %v2084, %v2082
      %v2093 = vld [vmem:[%s1126] sm:$0xff]
      %v2094 = vld [vmem:[%s1126 + $0x8] sm:$0xff]
      %v2095 = vld [vmem:[%s1126 + $0x10] sm:$0xff]
      %v2096 = vld [vmem:[%s1126 + $0x18] sm:$0xff]
      %v2097 = vld [vmem:[%s1126 + $0x20] sm:$0xff]
      %v2098 = vld [vmem:[%s1126 + $0x28] sm:$0xff]
      %v2099 = vld [vmem:[%s1126 + $0x30] sm:$0xff]
      %v2100 = vld [vmem:[%s1126 + $0x38] sm:$0xff]
      %v2101 = vld [vmem:[%s1126 + $0x40] sm:$0xff]
      %v2102 = vld [vmem:[%s1126 + $0x48] sm:$0xff]
      %v2103 = vld [vmem:[%s1126 + $0x50] sm:$0xff]
      %v2104 = vld [vmem:[%s1126 + $0x58] sm:$0xff]
      %v2105 = vld [vmem:[%s1126 + $0x60] sm:$0xff]
      %v2106 = vld [vmem:[%s1126 + $0x68] sm:$0xff]
      %v2107 = vld [vmem:[%s1126 + $0x70] sm:$0xff]
      %v2108 = vld [vmem:[%s1126 + $0x78] sm:$0xff]
      %v2109 = vld [vmem:[%s1126 + $0x80] sm:$0xff]
      %v2110 = vld [vmem:[%s1126 + $0x88] sm:$0xff]
      %v2111 = vld [vmem:[%s1126 + $0x90] sm:$0xff]
      %v2112 = vld [vmem:[%s1126 + $0x98] sm:$0xff]
      %v2113 = vld [vmem:[%s1126 + $0xa0] sm:$0xff]
      %v2114 = vld [vmem:[%s1126 + $0xa8] sm:$0xff]
      %v2115 = vld [vmem:[%s1126 + $0xb0] sm:$0xff]
      %v2116 = vld [vmem:[%s1126 + $0xb8] sm:$0xff]
      %v2117 = vld [vmem:[%s1126 + $0xc0] sm:$0xff]
      %v2118 = vld [vmem:[%s1126 + $0xc8] sm:$0xff]
      %v2119 = vld [vmem:[%s1126 + $0xd0] sm:$0xff]
      %v2120 = vld [vmem:[%s1126 + $0xd8] sm:$0xff]
      %v2121 = vld [vmem:[%s1126 + $0xe0] sm:$0xff]
      %v2122 = vld [vmem:[%s1126 + $0xe8] sm:$0xff]
      %v2123 = vld [vmem:[%s1126 + $0xf0] sm:$0xff]
      %v2124 = vld [vmem:[%s1126 + $0xf8] sm:$0xff]
      %v2125 = vld [vmem:[%s1131] sm:$0xff]
      %v2126 = vld [vmem:[%s1131 + $0x8] sm:$0xff]
      %v2127 = vld [vmem:[%s1131 + $0x10] sm:$0xff]
      %v2128 = vld [vmem:[%s1131 + $0x18] sm:$0xff]
      %v2129 = vld [vmem:[%s1131 + $0x20] sm:$0xff]
      %v2130 = vld [vmem:[%s1131 + $0x28] sm:$0xff]
      %v2131 = vld [vmem:[%s1131 + $0x30] sm:$0xff]
      %v2132 = vld [vmem:[%s1131 + $0x38] sm:$0xff]
      %v2133 = vld [vmem:[%s1131 + $0x40] sm:$0xff]
      %v2134 = vld [vmem:[%s1131 + $0x48] sm:$0xff]
      %v2135 = vld [vmem:[%s1131 + $0x50] sm:$0xff]
      %v2136 = vld [vmem:[%s1131 + $0x58] sm:$0xff]
      %v2137 = vld [vmem:[%s1131 + $0x60] sm:$0xff]
      %v2138 = vld [vmem:[%s1131 + $0x68] sm:$0xff]
      %v2139 = vld [vmem:[%s1131 + $0x70] sm:$0xff]
      %v2140 = vld [vmem:[%s1131 + $0x78] sm:$0xff]
      %v2149 = vunpack.c.l.b16 %v1185
      %v2150 = vunpack.c.l.b16 %v1186
      %v2151 = vunpack.c.l.b16 %v1187
      %v2152 = vunpack.c.l.b16 %v1188
      %v2153 = vunpack.c.l.b16 %v1189
      %v2154 = vunpack.c.l.b16 %v1190
      %v2155 = vunpack.c.l.b16 %v1191
      %v2156 = vunpack.c.l.b16 %v1192
      %v2157 = vpack.c.b16 %v2150, %v2149
      %v2158 = vpack.c.b16 %v2152, %v2151
      %v2159 = vpack.c.b16 %v2154, %v2153
      %v2160 = vpack.c.b16 %v2156, %v2155
      %v2181 = vunpack.c.l.b16 %v2125
      %v2182 = vunpack.c.h.b16 %v2125
      %v2183 = vunpack.c.l.b16 %v2126
      %v2184 = vunpack.c.h.b16 %v2126
      %v2185 = vunpack.c.l.b16 %v2127
      %v2186 = vunpack.c.h.b16 %v2127
      %v2187 = vunpack.c.l.b16 %v2128
      %v2188 = vunpack.c.h.b16 %v2128
      %v2189 = vunpack.c.l.b16 %v2129
      %v2190 = vunpack.c.h.b16 %v2129
      %v2191 = vunpack.c.l.b16 %v2130
      %v2192 = vunpack.c.h.b16 %v2130
      %v2193 = vunpack.c.l.b16 %v2131
      %v2194 = vunpack.c.h.b16 %v2131
      %v2195 = vunpack.c.l.b16 %v2132
      %v2196 = vunpack.c.h.b16 %v2132
      %v2197 = vunpack.c.l.b16 %v2133
      %v2198 = vunpack.c.h.b16 %v2133
      %v2199 = vunpack.c.l.b16 %v2134
      %v2200 = vunpack.c.h.b16 %v2134
      %v2201 = vunpack.c.l.b16 %v2135
      %v2202 = vunpack.c.h.b16 %v2135
      %v2203 = vunpack.c.l.b16 %v2136
      %v2204 = vunpack.c.h.b16 %v2136
      %v2205 = vunpack.c.l.b16 %v2137
      %v2206 = vunpack.c.h.b16 %v2137
      %v2207 = vunpack.c.l.b16 %v2138
      %v2208 = vunpack.c.h.b16 %v2138
      %v2209 = vunpack.c.l.b16 %v2139
      %v2210 = vunpack.c.h.b16 %v2139
      %v2211 = vunpack.c.l.b16 %v2140
      %v2212 = vunpack.c.h.b16 %v2140
      %v2213 = vpack.c.b16 %v2183, %v2181
      %v2214 = vpack.c.b16 %v2184, %v2182
      %v2215 = vpack.c.b16 %v2187, %v2185
      %v2216 = vpack.c.b16 %v2188, %v2186
      %v2217 = vpack.c.b16 %v2191, %v2189
      %v2218 = vpack.c.b16 %v2192, %v2190
      %v2219 = vpack.c.b16 %v2195, %v2193
      %v2220 = vpack.c.b16 %v2196, %v2194
      %v2221 = vpack.c.b16 %v2199, %v2197
      %v2222 = vpack.c.b16 %v2200, %v2198
      %v2223 = vpack.c.b16 %v2203, %v2201
      %v2224 = vpack.c.b16 %v2204, %v2202
      %v2225 = vpack.c.b16 %v2207, %v2205
      %v2226 = vpack.c.b16 %v2208, %v2206
      %v2227 = vpack.c.b16 %v2211, %v2209
      %v2228 = vpack.c.b16 %v2212, %v2210
      %2245 = vmatpush.bf16.msra.mxu0 %v2227
      %2246 = vmatpush.bf16.msra.mxu0 %v2225
      %2247 = vmatpush.bf16.msra.mxu0 %v2223
      %2248 = vmatpush.bf16.msra.mxu0 %v2221
      %2249 = vmatpush.bf16.msra.mxu0 %v2219
      %2250 = vmatpush.bf16.msra.mxu0 %v2217
      %2251 = vmatpush.bf16.msra.mxu0 %v2215
      %2252 = vmatpush.bf16.msra.mxu0 %v2213
      %2253 = vmatmul.bf16.gmra.mxu0 %v2157
      %v2254 = vpop.f32.mrf.mxu0
      %v2255 = vadd.f32 0.0, %v2254
      %v2256 = vpop.f32.mrf.mxu0
      %v2257 = vadd.f32 0.0, %v2256
      %2258 = vmatmul.bf16.gmra.mxu0 %v2158
      %v2259 = vpop.f32.mrf.mxu0
      %v2260 = vadd.f32 0.0, %v2259
      %v2261 = vpop.f32.mrf.mxu0
      %v2262 = vadd.f32 0.0, %v2261
      %2263 = vmatmul.bf16.gmra.mxu0 %v2159
      %v2264 = vpop.f32.mrf.mxu0
      %v2265 = vadd.f32 0.0, %v2264
      %v2266 = vpop.f32.mrf.mxu0
      %v2267 = vadd.f32 0.0, %v2266
      %2268 = vmatmul.bf16.gmra.mxu0 %v2160
      %v2269 = vpop.f32.mrf.mxu0
      %v2270 = vadd.f32 0.0, %v2269
      %v2271 = vpop.f32.mrf.mxu0
      %v2272 = vadd.f32 0.0, %v2271
      %2273 = vdwg.mxu0
      %2274 = vmatpush.bf16.msra.mxu0 %v2228
      %2275 = vmatpush.bf16.msra.mxu0 %v2226
      %2276 = vmatpush.bf16.msra.mxu0 %v2224
      %2277 = vmatpush.bf16.msra.mxu0 %v2222
      %2278 = vmatpush.bf16.msra.mxu0 %v2220
      %2279 = vmatpush.bf16.msra.mxu0 %v2218
      %2280 = vmatpush.bf16.msra.mxu0 %v2216
      %2281 = vmatpush.bf16.msra.mxu0 %v2214
      %2282 = vmatmul.bf16.gmra.mxu0 %v2157
      %v2283 = vpop.f32.mrf.mxu0
      %v2284 = vadd.f32 0.0, %v2283
      %v2285 = vpop.f32.mrf.mxu0
      %v2286 = vadd.f32 0.0, %v2285
      %2287 = vmatmul.bf16.gmra.mxu0 %v2158
      %v2288 = vpop.f32.mrf.mxu0
      %v2289 = vadd.f32 0.0, %v2288
      %v2290 = vpop.f32.mrf.mxu0
      %v2291 = vadd.f32 0.0, %v2290
      %2292 = vmatmul.bf16.gmra.mxu0 %v2159
      %v2293 = vpop.f32.mrf.mxu0
      %v2294 = vadd.f32 0.0, %v2293
      %v2295 = vpop.f32.mrf.mxu0
      %v2296 = vadd.f32 0.0, %v2295
      %2297 = vmatmul.bf16.gmra.mxu0 %v2160
      %v2298 = vpop.f32.mrf.mxu0
      %v2299 = vadd.f32 0.0, %v2298
      %v2300 = vpop.f32.mrf.mxu0
      %v2301 = vadd.f32 0.0, %v2300
      %2302 = vdwg.mxu0
      %v2335 = vunpack.c.l.b16 %v2093
      %v2336 = vunpack.c.h.b16 %v2093
      %v2337 = vunpack.c.l.b16 %v2094
      %v2338 = vunpack.c.h.b16 %v2094
      %v2339 = vunpack.c.l.b16 %v2095
      %v2340 = vunpack.c.h.b16 %v2095
      %v2341 = vunpack.c.l.b16 %v2096
      %v2342 = vunpack.c.h.b16 %v2096
      %v2343 = vunpack.c.l.b16 %v2097
      %v2344 = vunpack.c.h.b16 %v2097
      %v2345 = vunpack.c.l.b16 %v2098
      %v2346 = vunpack.c.h.b16 %v2098
      %v2347 = vunpack.c.l.b16 %v2099
      %v2348 = vunpack.c.h.b16 %v2099
      %v2349 = vunpack.c.l.b16 %v2100
      %v2350 = vunpack.c.h.b16 %v2100
      %v2351 = vunpack.c.l.b16 %v2101
      %v2352 = vunpack.c.h.b16 %v2101
      %v2353 = vunpack.c.l.b16 %v2102
      %v2354 = vunpack.c.h.b16 %v2102
      %v2355 = vunpack.c.l.b16 %v2103
      %v2356 = vunpack.c.h.b16 %v2103
      %v2357 = vunpack.c.l.b16 %v2104
      %v2358 = vunpack.c.h.b16 %v2104
      %v2359 = vunpack.c.l.b16 %v2105
      %v2360 = vunpack.c.h.b16 %v2105
      %v2361 = vunpack.c.l.b16 %v2106
      %v2362 = vunpack.c.h.b16 %v2106
      %v2363 = vunpack.c.l.b16 %v2107
      %v2364 = vunpack.c.h.b16 %v2107
      %v2365 = vunpack.c.l.b16 %v2108
      %v2366 = vunpack.c.h.b16 %v2108
      %v2367 = vunpack.c.l.b16 %v2109
      %v2368 = vunpack.c.h.b16 %v2109
      %v2369 = vunpack.c.l.b16 %v2110
      %v2370 = vunpack.c.h.b16 %v2110
      %v2371 = vunpack.c.l.b16 %v2111
      %v2372 = vunpack.c.h.b16 %v2111
      %v2373 = vunpack.c.l.b16 %v2112
      %v2374 = vunpack.c.h.b16 %v2112
      %v2375 = vunpack.c.l.b16 %v2113
      %v2376 = vunpack.c.h.b16 %v2113
      %v2377 = vunpack.c.l.b16 %v2114
      %v2378 = vunpack.c.h.b16 %v2114
      %v2379 = vunpack.c.l.b16 %v2115
      %v2380 = vunpack.c.h.b16 %v2115
      %v2381 = vunpack.c.l.b16 %v2116
      %v2382 = vunpack.c.h.b16 %v2116
      %v2383 = vunpack.c.l.b16 %v2117
      %v2384 = vunpack.c.h.b16 %v2117
      %v2385 = vunpack.c.l.b16 %v2118
      %v2386 = vunpack.c.h.b16 %v2118
      %v2387 = vunpack.c.l.b16 %v2119
      %v2388 = vunpack.c.h.b16 %v2119
      %v2389 = vunpack.c.l.b16 %v2120
      %v2390 = vunpack.c.h.b16 %v2120
      %v2391 = vunpack.c.l.b16 %v2121
      %v2392 = vunpack.c.h.b16 %v2121
      %v2393 = vunpack.c.l.b16 %v2122
      %v2394 = vunpack.c.h.b16 %v2122
      %v2395 = vunpack.c.l.b16 %v2123
      %v2396 = vunpack.c.h.b16 %v2123
      %v2397 = vunpack.c.l.b16 %v2124
      %v2398 = vunpack.c.h.b16 %v2124
      %v2399 = vpack.c.b16 %v2337, %v2335
      %v2400 = vpack.c.b16 %v2338, %v2336
      %v2401 = vpack.c.b16 %v2341, %v2339
      %v2402 = vpack.c.b16 %v2342, %v2340
      %v2403 = vpack.c.b16 %v2345, %v2343
      %v2404 = vpack.c.b16 %v2346, %v2344
      %v2405 = vpack.c.b16 %v2349, %v2347
      %v2406 = vpack.c.b16 %v2350, %v2348
      %v2407 = vpack.c.b16 %v2353, %v2351
      %v2408 = vpack.c.b16 %v2354, %v2352
      %v2409 = vpack.c.b16 %v2357, %v2355
      %v2410 = vpack.c.b16 %v2358, %v2356
      %v2411 = vpack.c.b16 %v2361, %v2359
      %v2412 = vpack.c.b16 %v2362, %v2360
      %v2413 = vpack.c.b16 %v2365, %v2363
      %v2414 = vpack.c.b16 %v2366, %v2364
      %v2415 = vpack.c.b16 %v2369, %v2367
      %v2416 = vpack.c.b16 %v2370, %v2368
      %v2417 = vpack.c.b16 %v2373, %v2371
      %v2418 = vpack.c.b16 %v2374, %v2372
      %v2419 = vpack.c.b16 %v2377, %v2375
      %v2420 = vpack.c.b16 %v2378, %v2376
      %v2421 = vpack.c.b16 %v2381, %v2379
      %v2422 = vpack.c.b16 %v2382, %v2380
      %v2423 = vpack.c.b16 %v2385, %v2383
      %v2424 = vpack.c.b16 %v2386, %v2384
      %v2425 = vpack.c.b16 %v2389, %v2387
      %v2426 = vpack.c.b16 %v2390, %v2388
      %v2427 = vpack.c.b16 %v2393, %v2391
      %v2428 = vpack.c.b16 %v2394, %v2392
      %v2429 = vpack.c.b16 %v2397, %v2395
      %v2430 = vpack.c.b16 %v2398, %v2396
      %2463 = vmatpush.bf16.msra.mxu0 %v2413
      %2464 = vmatpush.bf16.msra.mxu0 %v2411
      %2465 = vmatpush.bf16.msra.mxu0 %v2409
      %2466 = vmatpush.bf16.msra.mxu0 %v2407
      %2467 = vmatpush.bf16.msra.mxu0 %v2405
      %2468 = vmatpush.bf16.msra.mxu0 %v2403
      %2469 = vmatpush.bf16.msra.mxu0 %v2401
      %2470 = vmatpush.bf16.msra.mxu0 %v2399
      %2471 = vmatmul.bf16.gmra.mxu0 %v2085
      %v2472 = vpop.f32.mrf.mxu0
      %v2473 = vadd.f32 %v2255, %v2472
      %v2474 = vpop.f32.mrf.mxu0
      %v2475 = vadd.f32 %v2257, %v2474
      %2476 = vmatmul.bf16.gmra.mxu0 %v2087
      %v2477 = vpop.f32.mrf.mxu0
      %v2478 = vadd.f32 %v2260, %v2477
      %v2479 = vpop.f32.mrf.mxu0
      %v2480 = vadd.f32 %v2262, %v2479
      %2481 = vmatmul.bf16.gmra.mxu0 %v2089
      %v2482 = vpop.f32.mrf.mxu0
      %v2483 = vadd.f32 %v2265, %v2482
      %v2484 = vpop.f32.mrf.mxu0
      %v2485 = vadd.f32 %v2267, %v2484
      %2486 = vmatmul.bf16.gmra.mxu0 %v2091
      %v2487 = vpop.f32.mrf.mxu0
      %v2488 = vadd.f32 %v2270, %v2487
      %v2489 = vpop.f32.mrf.mxu0
      %v2490 = vadd.f32 %v2272, %v2489
      %2491 = vdwg.mxu0
      %2492 = vmatpush.bf16.msra.mxu0 %v2429
      %2493 = vmatpush.bf16.msra.mxu0 %v2427
      %2494 = vmatpush.bf16.msra.mxu0 %v2425
      %2495 = vmatpush.bf16.msra.mxu0 %v2423
      %2496 = vmatpush.bf16.msra.mxu0 %v2421
      %2497 = vmatpush.bf16.msra.mxu0 %v2419
      %2498 = vmatpush.bf16.msra.mxu0 %v2417
      %2499 = vmatpush.bf16.msra.mxu0 %v2415
      %2500 = vmatmul.bf16.gmra.mxu0 %v2086
      %v2501 = vpop.f32.mrf.mxu0
      %v2502 = vadd.f32 %v2473, %v2501
      %v2503 = vpop.f32.mrf.mxu0
      %v2504 = vadd.f32 %v2475, %v2503
      %2505 = vmatmul.bf16.gmra.mxu0 %v2088
      %v2506 = vpop.f32.mrf.mxu0
      %v2507 = vadd.f32 %v2478, %v2506
      %v2508 = vpop.f32.mrf.mxu0
      %v2509 = vadd.f32 %v2480, %v2508
      %2510 = vmatmul.bf16.gmra.mxu0 %v2090
      %v2511 = vpop.f32.mrf.mxu0
      %v2512 = vadd.f32 %v2483, %v2511
      %v2513 = vpop.f32.mrf.mxu0
      %v2514 = vadd.f32 %v2485, %v2513
      %2515 = vmatmul.bf16.gmra.mxu0 %v2092
      %v2516 = vpop.f32.mrf.mxu0
      %v2517 = vadd.f32 %v2488, %v2516
      %v2518 = vpop.f32.mrf.mxu0
      %v2519 = vadd.f32 %v2490, %v2518
      %2520 = vdwg.mxu0
      %2521 = vmatpush.bf16.msra.mxu0 %v2414
      %2522 = vmatpush.bf16.msra.mxu0 %v2412
      %2523 = vmatpush.bf16.msra.mxu0 %v2410
      %2524 = vmatpush.bf16.msra.mxu0 %v2408
      %2525 = vmatpush.bf16.msra.mxu0 %v2406
      %2526 = vmatpush.bf16.msra.mxu0 %v2404
      %2527 = vmatpush.bf16.msra.mxu0 %v2402
      %2528 = vmatpush.bf16.msra.mxu0 %v2400
      %2529 = vmatmul.bf16.gmra.mxu0 %v2085
      %v2530 = vpop.f32.mrf.mxu0
      %v2531 = vadd.f32 %v2284, %v2530
      %v2532 = vpop.f32.mrf.mxu0
      %v2533 = vadd.f32 %v2286, %v2532
      %2534 = vmatmul.bf16.gmra.mxu0 %v2087
      %v2535 = vpop.f32.mrf.mxu0
      %v2536 = vadd.f32 %v2289, %v2535
      %v2537 = vpop.f32.mrf.mxu0
      %v2538 = vadd.f32 %v2291, %v2537
      %2539 = vmatmul.bf16.gmra.mxu0 %v2089
      %v2540 = vpop.f32.mrf.mxu0
      %v2541 = vadd.f32 %v2294, %v2540
      %v2542 = vpop.f32.mrf.mxu0
      %v2543 = vadd.f32 %v2296, %v2542
      %2544 = vmatmul.bf16.gmra.mxu0 %v2091
      %v2545 = vpop.f32.mrf.mxu0
      %v2546 = vadd.f32 %v2299, %v2545
      %v2547 = vpop.f32.mrf.mxu0
      %v2548 = vadd.f32 %v2301, %v2547
      %2549 = vdwg.mxu0
      %2550 = vmatpush.bf16.msra.mxu0 %v2430
      %2551 = vmatpush.bf16.msra.mxu0 %v2428
      %2552 = vmatpush.bf16.msra.mxu0 %v2426
      %2553 = vmatpush.bf16.msra.mxu0 %v2424
      %2554 = vmatpush.bf16.msra.mxu0 %v2422
      %2555 = vmatpush.bf16.msra.mxu0 %v2420
      %2556 = vmatpush.bf16.msra.mxu0 %v2418
      %2557 = vmatpush.bf16.msra.mxu0 %v2416
      %2558 = vmatmul.bf16.gmra.mxu0 %v2086
      %v2559 = vpop.f32.mrf.mxu0
      %v2560 = vadd.f32 %v2531, %v2559
      %v2561 = vpop.f32.mrf.mxu0
      %v2562 = vadd.f32 %v2533, %v2561
      %2563 = vmatmul.bf16.gmra.mxu0 %v2088
      %v2564 = vpop.f32.mrf.mxu0
      %v2565 = vadd.f32 %v2536, %v2564
      %v2566 = vpop.f32.mrf.mxu0
      %v2567 = vadd.f32 %v2538, %v2566
      %2568 = vmatmul.bf16.gmra.mxu0 %v2090
      %v2569 = vpop.f32.mrf.mxu0
      %v2570 = vadd.f32 %v2541, %v2569
      %v2571 = vpop.f32.mrf.mxu0
      %v2572 = vadd.f32 %v2543, %v2571
      %2573 = vmatmul.bf16.gmra.mxu0 %v2092
      %v2574 = vpop.f32.mrf.mxu0
      %v2575 = vadd.f32 %v2546, %v2574
      %v2576 = vpop.f32.mrf.mxu0
      %v2577 = vadd.f32 %v2548, %v2576
      %2578 = vdwg.mxu0
      %v2579 = vld [vmem:[%s10] sm:$0x3]
      %v2581 = vperm.slane %v2579, 0
      %v2582 = vperm.slane %v2579, 1
      %v2585 = vadd.f32 %v2502, %v2581
      %v2586 = vadd.f32 %v2560, %v2582
      %v2587 = vadd.f32 %v2504, %v2581
      %v2588 = vadd.f32 %v2562, %v2582
      %v2589 = vadd.f32 %v2507, %v2581
      %v2590 = vadd.f32 %v2565, %v2582
      %v2591 = vadd.f32 %v2509, %v2581
      %v2592 = vadd.f32 %v2567, %v2582
      %v2593 = vadd.f32 %v2512, %v2581
      %v2594 = vadd.f32 %v2570, %v2582
      %v2595 = vadd.f32 %v2514, %v2581
      %v2596 = vadd.f32 %v2572, %v2582
      %v2597 = vadd.f32 %v2517, %v2581
      %v2598 = vadd.f32 %v2575, %v2582
      %v2599 = vadd.f32 %v2519, %v2581
      %v2600 = vadd.f32 %v2577, %v2582
      %v2601 = vpack.c.bf16 %v2586, %v2585
      %v2602 = vpack.c.bf16 %v2588, %v2587
      %v2603 = vpack.c.bf16 %v2590, %v2589
      %v2604 = vpack.c.bf16 %v2592, %v2591
      %v2605 = vpack.c.bf16 %v2594, %v2593
      %v2606 = vpack.c.bf16 %v2596, %v2595
      %v2607 = vpack.c.bf16 %v2598, %v2597
      %v2608 = vpack.c.bf16 %v2600, %v2599
      %v2609 = vunpack.c.l.bf16 %v2601
      %v2610 = vunpack.c.h.bf16 %v2601
      %v2611 = vunpack.c.l.bf16 %v2602
      %v2612 = vunpack.c.h.bf16 %v2602
      %v2613 = vunpack.c.l.bf16 %v2603
      %v2614 = vunpack.c.h.bf16 %v2603
      %v2615 = vunpack.c.l.bf16 %v2604
      %v2616 = vunpack.c.h.bf16 %v2604
      %v2617 = vunpack.c.l.bf16 %v2605
      %v2618 = vunpack.c.h.bf16 %v2605
      %v2619 = vunpack.c.l.bf16 %v2606
      %v2620 = vunpack.c.h.bf16 %v2606
      %v2621 = vunpack.c.l.bf16 %v2607
      %v2622 = vunpack.c.h.bf16 %v2607
      %v2623 = vunpack.c.l.bf16 %v2608
      %v2624 = vunpack.c.h.bf16 %v2608
      %v2625 = vmul.f32 %v2609, 0.20019531
      %v2626 = vmul.f32 %v2610, 0.20019531
      %v2627 = vmul.f32 %v2611, 0.20019531
      %v2628 = vmul.f32 %v2612, 0.20019531
      %v2629 = vmul.f32 %v2613, 0.20019531
      %v2630 = vmul.f32 %v2614, 0.20019531
      %v2631 = vmul.f32 %v2615, 0.20019531
      %v2632 = vmul.f32 %v2616, 0.20019531
      %v2633 = vmul.f32 %v2617, 0.20019531
      %v2634 = vmul.f32 %v2618, 0.20019531
      %v2635 = vmul.f32 %v2619, 0.20019531
      %v2636 = vmul.f32 %v2620, 0.20019531
      %v2637 = vmul.f32 %v2621, 0.20019531
      %v2638 = vmul.f32 %v2622, 0.20019531
      %v2639 = vmul.f32 %v2623, 0.20019531
      %v2640 = vmul.f32 %v2624, 0.20019531
      %v2641 = vpack.c.bf16 %v2626, %v2625
      %v2642 = vpack.c.bf16 %v2628, %v2627
      %v2643 = vpack.c.bf16 %v2630, %v2629
      %v2644 = vpack.c.bf16 %v2632, %v2631
      %v2645 = vpack.c.bf16 %v2634, %v2633
      %v2646 = vpack.c.bf16 %v2636, %v2635
      %v2647 = vpack.c.bf16 %v2638, %v2637
      %v2648 = vpack.c.bf16 %v2640, %v2639
      %v2649 = vunpack.c.l.bf16 %v2641
      %v2650 = vunpack.c.h.bf16 %v2641
      %v2651 = vunpack.c.l.bf16 %v2642
      %v2652 = vunpack.c.h.bf16 %v2642
      %v2653 = vunpack.c.l.bf16 %v2643
      %v2654 = vunpack.c.h.bf16 %v2643
      %v2655 = vunpack.c.l.bf16 %v2644
      %v2656 = vunpack.c.h.bf16 %v2644
      %v2657 = vunpack.c.l.bf16 %v2645
      %v2658 = vunpack.c.h.bf16 %v2645
      %v2659 = vunpack.c.l.bf16 %v2646
      %v2660 = vunpack.c.h.bf16 %v2646
      %v2661 = vunpack.c.l.bf16 %v2647
      %v2662 = vunpack.c.h.bf16 %v2647
      %v2663 = vunpack.c.l.bf16 %v2648
      %v2664 = vunpack.c.h.bf16 %v2648
      %v2665 = vmax.f32 %v2609, %v2649
      %v2666 = vmax.f32 %v2610, %v2650
      %v2667 = vmax.f32 %v2611, %v2651
      %v2668 = vmax.f32 %v2612, %v2652
      %v2669 = vmax.f32 %v2613, %v2653
      %v2670 = vmax.f32 %v2614, %v2654
      %v2671 = vmax.f32 %v2615, %v2655
      %v2672 = vmax.f32 %v2616, %v2656
      %v2673 = vmax.f32 %v2617, %v2657
      %v2674 = vmax.f32 %v2618, %v2658
      %v2675 = vmax.f32 %v2619, %v2659
      %v2676 = vmax.f32 %v2620, %v2660
      %v2677 = vmax.f32 %v2621, %v2661
      %v2678 = vmax.f32 %v2622, %v2662
      %v2679 = vmax.f32 %v2623, %v2663
      %v2680 = vmax.f32 %v2624, %v2664
      %v2681 = vpack.c.bf16 %v2667, %v2665
      %v2682 = vpack.c.bf16 %v2668, %v2666
      %v2683 = vpack.c.bf16 %v2671, %v2669
      %v2684 = vpack.c.bf16 %v2672, %v2670
      %v2685 = vpack.c.bf16 %v2675, %v2673
      %v2686 = vpack.c.bf16 %v2676, %v2674
      %v2687 = vpack.c.bf16 %v2679, %v2677
      %v2688 = vpack.c.bf16 %v2680, %v2678
      %v2689 = vld [vmem:[%s1136] sm:$0xff]
      %v2690 = vld [vmem:[%s1136 + $0x8] sm:$0xff]
      %v2691 = vld [vmem:[%s1136 + $0x10] sm:$0xff]
      %v2692 = vld [vmem:[%s1136 + $0x18] sm:$0xff]
      %v2693 = vld [vmem:[%s1136 + $0x20] sm:$0xff]
      %v2694 = vld [vmem:[%s1136 + $0x28] sm:$0xff]
      %v2695 = vld [vmem:[%s1136 + $0x30] sm:$0xff]
      %v2696 = vld [vmem:[%s1136 + $0x38] sm:$0xff]
      %v2697 = vld [vmem:[%s1136 + $0x40] sm:$0xff]
      %v2698 = vld [vmem:[%s1136 + $0x48] sm:$0xff]
      %v2699 = vld [vmem:[%s1136 + $0x50] sm:$0xff]
      %v2700 = vld [vmem:[%s1136 + $0x58] sm:$0xff]
      %v2701 = vld [vmem:[%s1136 + $0x60] sm:$0xff]
      %v2702 = vld [vmem:[%s1136 + $0x68] sm:$0xff]
      %v2703 = vld [vmem:[%s1136 + $0x70] sm:$0xff]
      %v2704 = vld [vmem:[%s1136 + $0x78] sm:$0xff]
      %v2705 = vld [vmem:[%s1136 + $0x80] sm:$0xff]
      %v2706 = vld [vmem:[%s1136 + $0x88] sm:$0xff]
      %v2707 = vld [vmem:[%s1136 + $0x90] sm:$0xff]
      %v2708 = vld [vmem:[%s1136 + $0x98] sm:$0xff]
      %v2709 = vld [vmem:[%s1136 + $0xa0] sm:$0xff]
      %v2710 = vld [vmem:[%s1136 + $0xa8] sm:$0xff]
      %v2711 = vld [vmem:[%s1136 + $0xb0] sm:$0xff]
      %v2712 = vld [vmem:[%s1136 + $0xb8] sm:$0xff]
      %v2713 = vld [vmem:[%s1136 + $0xc0] sm:$0xff]
      %v2714 = vld [vmem:[%s1136 + $0xc8] sm:$0xff]
      %v2715 = vld [vmem:[%s1136 + $0xd0] sm:$0xff]
      %v2716 = vld [vmem:[%s1136 + $0xd8] sm:$0xff]
      %v2717 = vld [vmem:[%s1136 + $0xe0] sm:$0xff]
      %v2718 = vld [vmem:[%s1136 + $0xe8] sm:$0xff]
      %v2719 = vld [vmem:[%s1136 + $0xf0] sm:$0xff]
      %v2720 = vld [vmem:[%s1136 + $0xf8] sm:$0xff]
      %v2721 = vld [vmem:[%s12] sm:$0x3]
      %v2723 = vperm.slane %v2721, 0
      %v2724 = vperm.slane %v2721, 1
      %v2759 = vunpack.c.l.b16 %v2689
      %v2760 = vunpack.c.h.b16 %v2689
      %v2761 = vunpack.c.l.b16 %v2690
      %v2762 = vunpack.c.h.b16 %v2690
      %v2763 = vunpack.c.l.b16 %v2691
      %v2764 = vunpack.c.h.b16 %v2691
      %v2765 = vunpack.c.l.b16 %v2692
      %v2766 = vunpack.c.h.b16 %v2692
      %v2767 = vunpack.c.l.b16 %v2693
      %v2768 = vunpack.c.h.b16 %v2693
      %v2769 = vunpack.c.l.b16 %v2694
      %v2770 = vunpack.c.h.b16 %v2694
      %v2771 = vunpack.c.l.b16 %v2695
      %v2772 = vunpack.c.h.b16 %v2695
      %v2773 = vunpack.c.l.b16 %v2696
      %v2774 = vunpack.c.h.b16 %v2696
      %v2775 = vunpack.c.l.b16 %v2697
      %v2776 = vunpack.c.h.b16 %v2697
      %v2777 = vunpack.c.l.b16 %v2698
      %v2778 = vunpack.c.h.b16 %v2698
      %v2779 = vunpack.c.l.b16 %v2699
      %v2780 = vunpack.c.h.b16 %v2699
      %v2781 = vunpack.c.l.b16 %v2700
      %v2782 = vunpack.c.h.b16 %v2700
      %v2783 = vunpack.c.l.b16 %v2701
      %v2784 = vunpack.c.h.b16 %v2701
      %v2785 = vunpack.c.l.b16 %v2702
      %v2786 = vunpack.c.h.b16 %v2702
      %v2787 = vunpack.c.l.b16 %v2703
      %v2788 = vunpack.c.h.b16 %v2703
      %v2789 = vunpack.c.l.b16 %v2704
      %v2790 = vunpack.c.h.b16 %v2704
      %v2791 = vunpack.c.l.b16 %v2705
      %v2792 = vunpack.c.h.b16 %v2705
      %v2793 = vunpack.c.l.b16 %v2706
      %v2794 = vunpack.c.h.b16 %v2706
      %v2795 = vunpack.c.l.b16 %v2707
      %v2796 = vunpack.c.h.b16 %v2707
      %v2797 = vunpack.c.l.b16 %v2708
      %v2798 = vunpack.c.h.b16 %v2708
      %v2799 = vunpack.c.l.b16 %v2709
      %v2800 = vunpack.c.h.b16 %v2709
      %v2801 = vunpack.c.l.b16 %v2710
      %v2802 = vunpack.c.h.b16 %v2710
      %v2803 = vunpack.c.l.b16 %v2711
      %v2804 = vunpack.c.h.b16 %v2711
      %v2805 = vunpack.c.l.b16 %v2712
      %v2806 = vunpack.c.h.b16 %v2712
      %v2807 = vunpack.c.l.b16 %v2713
      %v2808 = vunpack.c.h.b16 %v2713
      %v2809 = vunpack.c.l.b16 %v2714
      %v2810 = vunpack.c.h.b16 %v2714
      %v2811 = vunpack.c.l.b16 %v2715
      %v2812 = vunpack.c.h.b16 %v2715
      %v2813 = vunpack.c.l.b16 %v2716
      %v2814 = vunpack.c.h.b16 %v2716
      %v2815 = vunpack.c.l.b16 %v2717
      %v2816 = vunpack.c.h.b16 %v2717
      %v2817 = vunpack.c.l.b16 %v2718
      %v2818 = vunpack.c.h.b16 %v2718
      %v2819 = vunpack.c.l.b16 %v2719
      %v2820 = vunpack.c.h.b16 %v2719
      %v2821 = vunpack.c.l.b16 %v2720
      %v2822 = vunpack.c.h.b16 %v2720
      %v2823 = vpack.c.b16 %v2761, %v2759
      %v2824 = vpack.c.b16 %v2762, %v2760
      %v2825 = vpack.c.b16 %v2765, %v2763
      %v2826 = vpack.c.b16 %v2766, %v2764
      %v2827 = vpack.c.b16 %v2769, %v2767
      %v2828 = vpack.c.b16 %v2770, %v2768
      %v2829 = vpack.c.b16 %v2773, %v2771
      %v2830 = vpack.c.b16 %v2774, %v2772
      %v2831 = vpack.c.b16 %v2777, %v2775
      %v2832 = vpack.c.b16 %v2778, %v2776
      %v2833 = vpack.c.b16 %v2781, %v2779
      %v2834 = vpack.c.b16 %v2782, %v2780
      %v2835 = vpack.c.b16 %v2785, %v2783
      %v2836 = vpack.c.b16 %v2786, %v2784
      %v2837 = vpack.c.b16 %v2789, %v2787
      %v2838 = vpack.c.b16 %v2790, %v2788
      %v2839 = vpack.c.b16 %v2793, %v2791
      %v2840 = vpack.c.b16 %v2794, %v2792
      %v2841 = vpack.c.b16 %v2797, %v2795
      %v2842 = vpack.c.b16 %v2798, %v2796
      %v2843 = vpack.c.b16 %v2801, %v2799
      %v2844 = vpack.c.b16 %v2802, %v2800
      %v2845 = vpack.c.b16 %v2805, %v2803
      %v2846 = vpack.c.b16 %v2806, %v2804
      %v2847 = vpack.c.b16 %v2809, %v2807
      %v2848 = vpack.c.b16 %v2810, %v2808
      %v2849 = vpack.c.b16 %v2813, %v2811
      %v2850 = vpack.c.b16 %v2814, %v2812
      %v2851 = vpack.c.b16 %v2817, %v2815
      %v2852 = vpack.c.b16 %v2818, %v2816
      %v2853 = vpack.c.b16 %v2821, %v2819
      %v2854 = vpack.c.b16 %v2822, %v2820
      %2887 = vmatpush.bf16.msra.mxu0 %v2837
      %2888 = vmatpush.bf16.msra.mxu0 %v2835
      %2889 = vmatpush.bf16.msra.mxu0 %v2833
      %2890 = vmatpush.bf16.msra.mxu0 %v2831
      %2891 = vmatpush.bf16.msra.mxu0 %v2829
      %2892 = vmatpush.bf16.msra.mxu0 %v2827
      %2893 = vmatpush.bf16.msra.mxu0 %v2825
      %2894 = vmatpush.bf16.msra.mxu0 %v2823
      %2895 = vmatmul.bf16.gmra.mxu0 %v2681
      %v2896 = vpop.f32.mrf.mxu0
      %v2897 = vadd.f32 %v2723, %v2896
      %v2898 = vpop.f32.mrf.mxu0
      %v2899 = vadd.f32 %v2723, %v2898
      %2900 = vmatmul.bf16.gmra.mxu0 %v2683
      %v2901 = vpop.f32.mrf.mxu0
      %v2902 = vadd.f32 %v2723, %v2901
      %v2903 = vpop.f32.mrf.mxu0
      %v2904 = vadd.f32 %v2723, %v2903
      %2905 = vmatmul.bf16.gmra.mxu0 %v2685
      %v2906 = vpop.f32.mrf.mxu0
      %v2907 = vadd.f32 %v2723, %v2906
      %v2908 = vpop.f32.mrf.mxu0
      %v2909 = vadd.f32 %v2723, %v2908
      %2910 = vmatmul.bf16.gmra.mxu0 %v2687
      %v2911 = vpop.f32.mrf.mxu0
      %v2912 = vadd.f32 %v2723, %v2911
      %v2913 = vpop.f32.mrf.mxu0
      %v2914 = vadd.f32 %v2723, %v2913
      %2915 = vdwg.mxu0
      %2916 = vmatpush.bf16.msra.mxu0 %v2853
      %2917 = vmatpush.bf16.msra.mxu0 %v2851
      %2918 = vmatpush.bf16.msra.mxu0 %v2849
      %2919 = vmatpush.bf16.msra.mxu0 %v2847
      %2920 = vmatpush.bf16.msra.mxu0 %v2845
      %2921 = vmatpush.bf16.msra.mxu0 %v2843
      %2922 = vmatpush.bf16.msra.mxu0 %v2841
      %2923 = vmatpush.bf16.msra.mxu0 %v2839
      %2924 = vmatmul.bf16.gmra.mxu0 %v2682
      %v2925 = vpop.f32.mrf.mxu0
      %v2926 = vadd.f32 %v2897, %v2925
      %v2927 = vpop.f32.mrf.mxu0
      %v2928 = vadd.f32 %v2899, %v2927
      %2929 = vmatmul.bf16.gmra.mxu0 %v2684
      %v2930 = vpop.f32.mrf.mxu0
      %v2931 = vadd.f32 %v2902, %v2930
      %v2932 = vpop.f32.mrf.mxu0
      %v2933 = vadd.f32 %v2904, %v2932
      %2934 = vmatmul.bf16.gmra.mxu0 %v2686
      %v2935 = vpop.f32.mrf.mxu0
      %v2936 = vadd.f32 %v2907, %v2935
      %v2937 = vpop.f32.mrf.mxu0
      %v2938 = vadd.f32 %v2909, %v2937
      %2939 = vmatmul.bf16.gmra.mxu0 %v2688
      %v2940 = vpop.f32.mrf.mxu0
      %v2941 = vadd.f32 %v2912, %v2940
      %v2942 = vpop.f32.mrf.mxu0
      %v2943 = vadd.f32 %v2914, %v2942
      %2944 = vdwg.mxu0
      %2945 = vmatpush.bf16.msra.mxu0 %v2838
      %2946 = vmatpush.bf16.msra.mxu0 %v2836
      %2947 = vmatpush.bf16.msra.mxu0 %v2834
      %2948 = vmatpush.bf16.msra.mxu0 %v2832
      %2949 = vmatpush.bf16.msra.mxu0 %v2830
      %2950 = vmatpush.bf16.msra.mxu0 %v2828
      %2951 = vmatpush.bf16.msra.mxu0 %v2826
      %2952 = vmatpush.bf16.msra.mxu0 %v2824
      %2953 = vmatmul.bf16.gmra.mxu0 %v2681
      %v2954 = vpop.f32.mrf.mxu0
      %v2955 = vadd.f32 %v2724, %v2954
      %v2956 = vpop.f32.mrf.mxu0
      %v2957 = vadd.f32 %v2724, %v2956
      %2958 = vmatmul.bf16.gmra.mxu0 %v2683
      %v2959 = vpop.f32.mrf.mxu0
      %v2960 = vadd.f32 %v2724, %v2959
      %v2961 = vpop.f32.mrf.mxu0
      %v2962 = vadd.f32 %v2724, %v2961
      %2963 = vmatmul.bf16.gmra.mxu0 %v2685
      %v2964 = vpop.f32.mrf.mxu0
      %v2965 = vadd.f32 %v2724, %v2964
      %v2966 = vpop.f32.mrf.mxu0
      %v2967 = vadd.f32 %v2724, %v2966
      %2968 = vmatmul.bf16.gmra.mxu0 %v2687
      %v2969 = vpop.f32.mrf.mxu0
      %v2970 = vadd.f32 %v2724, %v2969
      %v2971 = vpop.f32.mrf.mxu0
      %v2972 = vadd.f32 %v2724, %v2971
      %2973 = vdwg.mxu0
      %2974 = vmatpush.bf16.msra.mxu0 %v2854
      %2975 = vmatpush.bf16.msra.mxu0 %v2852
      %2976 = vmatpush.bf16.msra.mxu0 %v2850
      %2977 = vmatpush.bf16.msra.mxu0 %v2848
      %2978 = vmatpush.bf16.msra.mxu0 %v2846
      %2979 = vmatpush.bf16.msra.mxu0 %v2844
      %2980 = vmatpush.bf16.msra.mxu0 %v2842
      %2981 = vmatpush.bf16.msra.mxu0 %v2840
      %2982 = vmatmul.bf16.gmra.mxu0 %v2682
      %v2983 = vpop.f32.mrf.mxu0
      %v2984 = vadd.f32 %v2955, %v2983
      %v2985 = vpop.f32.mrf.mxu0
      %v2986 = vadd.f32 %v2957, %v2985
      %2987 = vmatmul.bf16.gmra.mxu0 %v2684
      %v2988 = vpop.f32.mrf.mxu0
      %v2989 = vadd.f32 %v2960, %v2988
      %v2990 = vpop.f32.mrf.mxu0
      %v2991 = vadd.f32 %v2962, %v2990
      %2992 = vmatmul.bf16.gmra.mxu0 %v2686
      %v2993 = vpop.f32.mrf.mxu0
      %v2994 = vadd.f32 %v2965, %v2993
      %v2995 = vpop.f32.mrf.mxu0
      %v2996 = vadd.f32 %v2967, %v2995
      %2997 = vmatmul.bf16.gmra.mxu0 %v2688
      %v2998 = vpop.f32.mrf.mxu0
      %v2999 = vadd.f32 %v2970, %v2998
      %v3000 = vpop.f32.mrf.mxu0
      %v3001 = vadd.f32 %v2972, %v3000
      %3002 = vdwg.mxu0
      %v3003 = vpack.c.bf16 %v2984, %v2926
      %v3004 = vpack.c.bf16 %v2986, %v2928
      %v3005 = vpack.c.bf16 %v2989, %v2931
      %v3006 = vpack.c.bf16 %v2991, %v2933
      %v3007 = vpack.c.bf16 %v2994, %v2936
      %v3008 = vpack.c.bf16 %v2996, %v2938
      %v3009 = vpack.c.bf16 %v2999, %v2941
      %v3010 = vpack.c.bf16 %v3001, %v2943
      %v3011 = vunpack.c.l.bf16 %v3003
      %v3012 = vunpack.c.h.bf16 %v3003
      %v3013 = vunpack.c.l.bf16 %v3004
      %v3014 = vunpack.c.h.bf16 %v3004
      %v3015 = vunpack.c.l.bf16 %v3005
      %v3016 = vunpack.c.h.bf16 %v3005
      %v3017 = vunpack.c.l.bf16 %v3006
      %v3018 = vunpack.c.h.bf16 %v3006
      %v3019 = vunpack.c.l.bf16 %v3007
      %v3020 = vunpack.c.h.bf16 %v3007
      %v3021 = vunpack.c.l.bf16 %v3008
      %v3022 = vunpack.c.h.bf16 %v3008
      %v3023 = vunpack.c.l.bf16 %v3009
      %v3024 = vunpack.c.h.bf16 %v3009
      %v3025 = vunpack.c.l.bf16 %v3010
      %v3026 = vunpack.c.h.bf16 %v3010
      %v3027 = vmul.f32 %v3011, 0.20019531
      %v3028 = vmul.f32 %v3012, 0.20019531
      %v3029 = vmul.f32 %v3013, 0.20019531
      %v3030 = vmul.f32 %v3014, 0.20019531
      %v3031 = vmul.f32 %v3015, 0.20019531
      %v3032 = vmul.f32 %v3016, 0.20019531
      %v3033 = vmul.f32 %v3017, 0.20019531
      %v3034 = vmul.f32 %v3018, 0.20019531
      %v3035 = vmul.f32 %v3019, 0.20019531
      %v3036 = vmul.f32 %v3020, 0.20019531
      %v3037 = vmul.f32 %v3021, 0.20019531
      %v3038 = vmul.f32 %v3022, 0.20019531
      %v3039 = vmul.f32 %v3023, 0.20019531
      %v3040 = vmul.f32 %v3024, 0.20019531
      %v3041 = vmul.f32 %v3025, 0.20019531
      %v3042 = vmul.f32 %v3026, 0.20019531
      %v3043 = vpack.c.bf16 %v3028, %v3027
      %v3044 = vpack.c.bf16 %v3030, %v3029
      %v3045 = vpack.c.bf16 %v3032, %v3031
      %v3046 = vpack.c.bf16 %v3034, %v3033
      %v3047 = vpack.c.bf16 %v3036, %v3035
      %v3048 = vpack.c.bf16 %v3038, %v3037
      %v3049 = vpack.c.bf16 %v3040, %v3039
      %v3050 = vpack.c.bf16 %v3042, %v3041
      %v3051 = vunpack.c.l.bf16 %v3043
      %v3052 = vunpack.c.h.bf16 %v3043
      %v3053 = vunpack.c.l.bf16 %v3044
      %v3054 = vunpack.c.h.bf16 %v3044
      %v3055 = vunpack.c.l.bf16 %v3045
      %v3056 = vunpack.c.h.bf16 %v3045
      %v3057 = vunpack.c.l.bf16 %v3046
      %v3058 = vunpack.c.h.bf16 %v3046
      %v3059 = vunpack.c.l.bf16 %v3047
      %v3060 = vunpack.c.h.bf16 %v3047
      %v3061 = vunpack.c.l.bf16 %v3048
      %v3062 = vunpack.c.h.bf16 %v3048
      %v3063 = vunpack.c.l.bf16 %v3049
      %v3064 = vunpack.c.h.bf16 %v3049
      %v3065 = vunpack.c.l.bf16 %v3050
      %v3066 = vunpack.c.h.bf16 %v3050
      %v3067 = vmax.f32 %v3011, %v3051
      %v3068 = vmax.f32 %v3012, %v3052
      %v3069 = vmax.f32 %v3013, %v3053
      %v3070 = vmax.f32 %v3014, %v3054
      %v3071 = vmax.f32 %v3015, %v3055
      %v3072 = vmax.f32 %v3016, %v3056
      %v3073 = vmax.f32 %v3017, %v3057
      %v3074 = vmax.f32 %v3018, %v3058
      %v3075 = vmax.f32 %v3019, %v3059
      %v3076 = vmax.f32 %v3020, %v3060
      %v3077 = vmax.f32 %v3021, %v3061
      %v3078 = vmax.f32 %v3022, %v3062
      %v3079 = vmax.f32 %v3023, %v3063
      %v3080 = vmax.f32 %v3024, %v3064
      %v3081 = vmax.f32 %v3025, %v3065
      %v3082 = vmax.f32 %v3026, %v3066
      %v3083 = vpack.c.bf16 %v3068, %v3067
      %v3084 = vpack.c.bf16 %v3070, %v3069
      %v3085 = vpack.c.bf16 %v3072, %v3071
      %v3086 = vpack.c.bf16 %v3074, %v3073
      %v3087 = vpack.c.bf16 %v3076, %v3075
      %v3088 = vpack.c.bf16 %v3078, %v3077
      %v3089 = vpack.c.bf16 %v3080, %v3079
      %v3090 = vpack.c.bf16 %v3082, %v3081
      %v3091 = vld [vmem:[%s13] sm:$0xff]
      %v3092 = vld [vmem:[%s13 + $0x8] sm:$0xff]
      %v3093 = vld [vmem:[%s13 + $0x10] sm:$0xff]
      %v3094 = vld [vmem:[%s13 + $0x18] sm:$0xff]
      %v3095 = vld [vmem:[%s13 + $0x20] sm:$0xff]
      %v3096 = vld [vmem:[%s13 + $0x28] sm:$0xff]
      %v3097 = vld [vmem:[%s13 + $0x30] sm:$0xff]
      %v3098 = vld [vmem:[%s13 + $0x38] sm:$0xff]
      %v3099 = vld [vmem:[%s13 + $0x40] sm:$0xff]
      %v3100 = vld [vmem:[%s13 + $0x48] sm:$0xff]
      %v3101 = vld [vmem:[%s13 + $0x50] sm:$0xff]
      %v3102 = vld [vmem:[%s13 + $0x58] sm:$0xff]
      %v3103 = vld [vmem:[%s13 + $0x60] sm:$0xff]
      %v3104 = vld [vmem:[%s13 + $0x68] sm:$0xff]
      %v3105 = vld [vmem:[%s13 + $0x70] sm:$0xff]
      %v3106 = vld [vmem:[%s13 + $0x78] sm:$0xff]
      %v3107 = vld [vmem:[%s13 + $0x80] sm:$0xff]
      %v3108 = vld [vmem:[%s13 + $0x88] sm:$0xff]
      %v3109 = vld [vmem:[%s13 + $0x90] sm:$0xff]
      %v3110 = vld [vmem:[%s13 + $0x98] sm:$0xff]
      %v3111 = vld [vmem:[%s13 + $0xa0] sm:$0xff]
      %v3112 = vld [vmem:[%s13 + $0xa8] sm:$0xff]
      %v3113 = vld [vmem:[%s13 + $0xb0] sm:$0xff]
      %v3114 = vld [vmem:[%s13 + $0xb8] sm:$0xff]
      %v3115 = vld [vmem:[%s13 + $0xc0] sm:$0xff]
      %v3116 = vld [vmem:[%s13 + $0xc8] sm:$0xff]
      %v3117 = vld [vmem:[%s13 + $0xd0] sm:$0xff]
      %v3118 = vld [vmem:[%s13 + $0xd8] sm:$0xff]
      %v3119 = vld [vmem:[%s13 + $0xe0] sm:$0xff]
      %v3120 = vld [vmem:[%s13 + $0xe8] sm:$0xff]
      %v3121 = vld [vmem:[%s13 + $0xf0] sm:$0xff]
      %v3122 = vld [vmem:[%s13 + $0xf8] sm:$0xff]
      %v3123 = vld [vmem:[%s14] sm:$0xff]
      %v3124 = vld [vmem:[%s14 + $0x8] sm:$0xff]
      %v3125 = vld [vmem:[%s14 + $0x10] sm:$0xff]
      %v3126 = vld [vmem:[%s14 + $0x18] sm:$0xff]
      %v3127 = vld [vmem:[%s14 + $0x20] sm:$0xff]
      %v3128 = vld [vmem:[%s14 + $0x28] sm:$0xff]
      %v3129 = vld [vmem:[%s14 + $0x30] sm:$0xff]
      %v3130 = vld [vmem:[%s14 + $0x38] sm:$0xff]
      %v3131 = vld [vmem:[%s14 + $0x40] sm:$0xff]
      %v3132 = vld [vmem:[%s14 + $0x48] sm:$0xff]
      %v3133 = vld [vmem:[%s14 + $0x50] sm:$0xff]
      %v3134 = vld [vmem:[%s14 + $0x58] sm:$0xff]
      %v3135 = vld [vmem:[%s14 + $0x60] sm:$0xff]
      %v3136 = vld [vmem:[%s14 + $0x68] sm:$0xff]
      %v3137 = vld [vmem:[%s14 + $0x70] sm:$0xff]
      %v3138 = vld [vmem:[%s14 + $0x78] sm:$0xff]
      %v3155 = vunpack.c.l.b16 %v3123
      %v3156 = vunpack.c.h.b16 %v3123
      %v3157 = vunpack.c.l.b16 %v3124
      %v3158 = vunpack.c.h.b16 %v3124
      %v3159 = vunpack.c.l.b16 %v3125
      %v3160 = vunpack.c.h.b16 %v3125
      %v3161 = vunpack.c.l.b16 %v3126
      %v3162 = vunpack.c.h.b16 %v3126
      %v3163 = vunpack.c.l.b16 %v3127
      %v3164 = vunpack.c.h.b16 %v3127
      %v3165 = vunpack.c.l.b16 %v3128
      %v3166 = vunpack.c.h.b16 %v3128
      %v3167 = vunpack.c.l.b16 %v3129
      %v3168 = vunpack.c.h.b16 %v3129
      %v3169 = vunpack.c.l.b16 %v3130
      %v3170 = vunpack.c.h.b16 %v3130
      %v3171 = vunpack.c.l.b16 %v3131
      %v3172 = vunpack.c.h.b16 %v3131
      %v3173 = vunpack.c.l.b16 %v3132
      %v3174 = vunpack.c.h.b16 %v3132
      %v3175 = vunpack.c.l.b16 %v3133
      %v3176 = vunpack.c.h.b16 %v3133
      %v3177 = vunpack.c.l.b16 %v3134
      %v3178 = vunpack.c.h.b16 %v3134
      %v3179 = vunpack.c.l.b16 %v3135
      %v3180 = vunpack.c.h.b16 %v3135
      %v3181 = vunpack.c.l.b16 %v3136
      %v3182 = vunpack.c.h.b16 %v3136
      %v3183 = vunpack.c.l.b16 %v3137
      %v3184 = vunpack.c.h.b16 %v3137
      %v3185 = vunpack.c.l.b16 %v3138
      %v3186 = vunpack.c.h.b16 %v3138
      %v3187 = vpack.c.b16 %v3157, %v3155
      %v3188 = vpack.c.b16 %v3158, %v3156
      %v3189 = vpack.c.b16 %v3161, %v3159
      %v3190 = vpack.c.b16 %v3162, %v3160
      %v3191 = vpack.c.b16 %v3165, %v3163
      %v3192 = vpack.c.b16 %v3166, %v3164
      %v3193 = vpack.c.b16 %v3169, %v3167
      %v3194 = vpack.c.b16 %v3170, %v3168
      %v3195 = vpack.c.b16 %v3173, %v3171
      %v3196 = vpack.c.b16 %v3174, %v3172
      %v3197 = vpack.c.b16 %v3177, %v3175
      %v3198 = vpack.c.b16 %v3178, %v3176
      %v3199 = vpack.c.b16 %v3181, %v3179
      %v3200 = vpack.c.b16 %v3182, %v3180
      %v3201 = vpack.c.b16 %v3185, %v3183
      %v3202 = vpack.c.b16 %v3186, %v3184
      %3219 = vmatpush.bf16.msra.mxu0 %v3201
      %3220 = vmatpush.bf16.msra.mxu0 %v3199
      %3221 = vmatpush.bf16.msra.mxu0 %v3197
      %3222 = vmatpush.bf16.msra.mxu0 %v3195
      %3223 = vmatpush.bf16.msra.mxu0 %v3193
      %3224 = vmatpush.bf16.msra.mxu0 %v3191
      %3225 = vmatpush.bf16.msra.mxu0 %v3189
      %3226 = vmatpush.bf16.msra.mxu0 %v3187
      %3227 = vmatmul.bf16.gmra.mxu0 %v2157
      %v3228 = vpop.f32.mrf.mxu0
      %v3229 = vadd.f32 0.0, %v3228
      %v3230 = vpop.f32.mrf.mxu0
      %v3231 = vadd.f32 0.0, %v3230
      %3232 = vmatmul.bf16.gmra.mxu0 %v2158
      %v3233 = vpop.f32.mrf.mxu0
      %v3234 = vadd.f32 0.0, %v3233
      %v3235 = vpop.f32.mrf.mxu0
      %v3236 = vadd.f32 0.0, %v3235
      %3237 = vmatmul.bf16.gmra.mxu0 %v2159
      %v3238 = vpop.f32.mrf.mxu0
      %v3239 = vadd.f32 0.0, %v3238
      %v3240 = vpop.f32.mrf.mxu0
      %v3241 = vadd.f32 0.0, %v3240
      %3242 = vmatmul.bf16.gmra.mxu0 %v2160
      %v3243 = vpop.f32.mrf.mxu0
      %v3244 = vadd.f32 0.0, %v3243
      %v3245 = vpop.f32.mrf.mxu0
      %v3246 = vadd.f32 0.0, %v3245
      %3247 = vdwg.mxu0
      %3248 = vmatpush.bf16.msra.mxu0 %v3202
      %3249 = vmatpush.bf16.msra.mxu0 %v3200
      %3250 = vmatpush.bf16.msra.mxu0 %v3198
      %3251 = vmatpush.bf16.msra.mxu0 %v3196
      %3252 = vmatpush.bf16.msra.mxu0 %v3194
      %3253 = vmatpush.bf16.msra.mxu0 %v3192
      %3254 = vmatpush.bf16.msra.mxu0 %v3190
      %3255 = vmatpush.bf16.msra.mxu0 %v3188
      %3256 = vmatmul.bf16.gmra.mxu0 %v2157
      %v3257 = vpop.f32.mrf.mxu0
      %v3258 = vadd.f32 0.0, %v3257
      %v3259 = vpop.f32.mrf.mxu0
      %v3260 = vadd.f32 0.0, %v3259
      %3261 = vmatmul.bf16.gmra.mxu0 %v2158
      %v3262 = vpop.f32.mrf.mxu0
      %v3263 = vadd.f32 0.0, %v3262
      %v3264 = vpop.f32.mrf.mxu0
      %v3265 = vadd.f32 0.0, %v3264
      %3266 = vmatmul.bf16.gmra.mxu0 %v2159
      %v3267 = vpop.f32.mrf.mxu0
      %v3268 = vadd.f32 0.0, %v3267
      %v3269 = vpop.f32.mrf.mxu0
      %v3270 = vadd.f32 0.0, %v3269
      %3271 = vmatmul.bf16.gmra.mxu0 %v2160
      %v3272 = vpop.f32.mrf.mxu0
      %v3273 = vadd.f32 0.0, %v3272
      %v3274 = vpop.f32.mrf.mxu0
      %v3275 = vadd.f32 0.0, %v3274
      %3276 = vdwg.mxu0
      %v3309 = vunpack.c.l.b16 %v3091
      %v3310 = vunpack.c.h.b16 %v3091
      %v3311 = vunpack.c.l.b16 %v3092
      %v3312 = vunpack.c.h.b16 %v3092
      %v3313 = vunpack.c.l.b16 %v3093
      %v3314 = vunpack.c.h.b16 %v3093
      %v3315 = vunpack.c.l.b16 %v3094
      %v3316 = vunpack.c.h.b16 %v3094
      %v3317 = vunpack.c.l.b16 %v3095
      %v3318 = vunpack.c.h.b16 %v3095
      %v3319 = vunpack.c.l.b16 %v3096
      %v3320 = vunpack.c.h.b16 %v3096
      %v3321 = vunpack.c.l.b16 %v3097
      %v3322 = vunpack.c.h.b16 %v3097
      %v3323 = vunpack.c.l.b16 %v3098
      %v3324 = vunpack.c.h.b16 %v3098
      %v3325 = vunpack.c.l.b16 %v3099
      %v3326 = vunpack.c.h.b16 %v3099
      %v3327 = vunpack.c.l.b16 %v3100
      %v3328 = vunpack.c.h.b16 %v3100
      %v3329 = vunpack.c.l.b16 %v3101
      %v3330 = vunpack.c.h.b16 %v3101
      %v3331 = vunpack.c.l.b16 %v3102
      %v3332 = vunpack.c.h.b16 %v3102
      %v3333 = vunpack.c.l.b16 %v3103
      %v3334 = vunpack.c.h.b16 %v3103
      %v3335 = vunpack.c.l.b16 %v3104
      %v3336 = vunpack.c.h.b16 %v3104
      %v3337 = vunpack.c.l.b16 %v3105
      %v3338 = vunpack.c.h.b16 %v3105
      %v3339 = vunpack.c.l.b16 %v3106
      %v3340 = vunpack.c.h.b16 %v3106
      %v3341 = vunpack.c.l.b16 %v3107
      %v3342 = vunpack.c.h.b16 %v3107
      %v3343 = vunpack.c.l.b16 %v3108
      %v3344 = vunpack.c.h.b16 %v3108
      %v3345 = vunpack.c.l.b16 %v3109
      %v3346 = vunpack.c.h.b16 %v3109
      %v3347 = vunpack.c.l.b16 %v3110
      %v3348 = vunpack.c.h.b16 %v3110
      %v3349 = vunpack.c.l.b16 %v3111
      %v3350 = vunpack.c.h.b16 %v3111
      %v3351 = vunpack.c.l.b16 %v3112
      %v3352 = vunpack.c.h.b16 %v3112
      %v3353 = vunpack.c.l.b16 %v3113
      %v3354 = vunpack.c.h.b16 %v3113
      %v3355 = vunpack.c.l.b16 %v3114
      %v3356 = vunpack.c.h.b16 %v3114
      %v3357 = vunpack.c.l.b16 %v3115
      %v3358 = vunpack.c.h.b16 %v3115
      %v3359 = vunpack.c.l.b16 %v3116
      %v3360 = vunpack.c.h.b16 %v3116
      %v3361 = vunpack.c.l.b16 %v3117
      %v3362 = vunpack.c.h.b16 %v3117
      %v3363 = vunpack.c.l.b16 %v3118
      %v3364 = vunpack.c.h.b16 %v3118
      %v3365 = vunpack.c.l.b16 %v3119
      %v3366 = vunpack.c.h.b16 %v3119
      %v3367 = vunpack.c.l.b16 %v3120
      %v3368 = vunpack.c.h.b16 %v3120
      %v3369 = vunpack.c.l.b16 %v3121
      %v3370 = vunpack.c.h.b16 %v3121
      %v3371 = vunpack.c.l.b16 %v3122
      %v3372 = vunpack.c.h.b16 %v3122
      %v3373 = vpack.c.b16 %v3311, %v3309
      %v3374 = vpack.c.b16 %v3312, %v3310
      %v3375 = vpack.c.b16 %v3315, %v3313
      %v3376 = vpack.c.b16 %v3316, %v3314
      %v3377 = vpack.c.b16 %v3319, %v3317
      %v3378 = vpack.c.b16 %v3320, %v3318
      %v3379 = vpack.c.b16 %v3323, %v3321
      %v3380 = vpack.c.b16 %v3324, %v3322
      %v3381 = vpack.c.b16 %v3327, %v3325
      %v3382 = vpack.c.b16 %v3328, %v3326
      %v3383 = vpack.c.b16 %v3331, %v3329
      %v3384 = vpack.c.b16 %v3332, %v3330
      %v3385 = vpack.c.b16 %v3335, %v3333
      %v3386 = vpack.c.b16 %v3336, %v3334
      %v3387 = vpack.c.b16 %v3339, %v3337
      %v3388 = vpack.c.b16 %v3340, %v3338
      %v3389 = vpack.c.b16 %v3343, %v3341
      %v3390 = vpack.c.b16 %v3344, %v3342
      %v3391 = vpack.c.b16 %v3347, %v3345
      %v3392 = vpack.c.b16 %v3348, %v3346
      %v3393 = vpack.c.b16 %v3351, %v3349
      %v3394 = vpack.c.b16 %v3352, %v3350
      %v3395 = vpack.c.b16 %v3355, %v3353
      %v3396 = vpack.c.b16 %v3356, %v3354
      %v3397 = vpack.c.b16 %v3359, %v3357
      %v3398 = vpack.c.b16 %v3360, %v3358
      %v3399 = vpack.c.b16 %v3363, %v3361
      %v3400 = vpack.c.b16 %v3364, %v3362
      %v3401 = vpack.c.b16 %v3367, %v3365
      %v3402 = vpack.c.b16 %v3368, %v3366
      %v3403 = vpack.c.b16 %v3371, %v3369
      %v3404 = vpack.c.b16 %v3372, %v3370
      %3437 = vmatpush.bf16.msra.mxu0 %v3387
      %3438 = vmatpush.bf16.msra.mxu0 %v3385
      %3439 = vmatpush.bf16.msra.mxu0 %v3383
      %3440 = vmatpush.bf16.msra.mxu0 %v3381
      %3441 = vmatpush.bf16.msra.mxu0 %v3379
      %3442 = vmatpush.bf16.msra.mxu0 %v3377
      %3443 = vmatpush.bf16.msra.mxu0 %v3375
      %3444 = vmatpush.bf16.msra.mxu0 %v3373
      %3445 = vmatmul.bf16.gmra.mxu0 %v2085
      %v3446 = vpop.f32.mrf.mxu0
      %v3447 = vadd.f32 %v3229, %v3446
      %v3448 = vpop.f32.mrf.mxu0
      %v3449 = vadd.f32 %v3231, %v3448
      %3450 = vmatmul.bf16.gmra.mxu0 %v2087
      %v3451 = vpop.f32.mrf.mxu0
      %v3452 = vadd.f32 %v3234, %v3451
      %v3453 = vpop.f32.mrf.mxu0
      %v3454 = vadd.f32 %v3236, %v3453
      %3455 = vmatmul.bf16.gmra.mxu0 %v2089
      %v3456 = vpop.f32.mrf.mxu0
      %v3457 = vadd.f32 %v3239, %v3456
      %v3458 = vpop.f32.mrf.mxu0
      %v3459 = vadd.f32 %v3241, %v3458
      %3460 = vmatmul.bf16.gmra.mxu0 %v2091
      %v3461 = vpop.f32.mrf.mxu0
      %v3462 = vadd.f32 %v3244, %v3461
      %v3463 = vpop.f32.mrf.mxu0
      %v3464 = vadd.f32 %v3246, %v3463
      %3465 = vdwg.mxu0
      %3466 = vmatpush.bf16.msra.mxu0 %v3403
      %3467 = vmatpush.bf16.msra.mxu0 %v3401
      %3468 = vmatpush.bf16.msra.mxu0 %v3399
      %3469 = vmatpush.bf16.msra.mxu0 %v3397
      %3470 = vmatpush.bf16.msra.mxu0 %v3395
      %3471 = vmatpush.bf16.msra.mxu0 %v3393
      %3472 = vmatpush.bf16.msra.mxu0 %v3391
      %3473 = vmatpush.bf16.msra.mxu0 %v3389
      %3474 = vmatmul.bf16.gmra.mxu0 %v2086
      %v3475 = vpop.f32.mrf.mxu0
      %v3476 = vadd.f32 %v3447, %v3475
      %v3477 = vpop.f32.mrf.mxu0
      %v3478 = vadd.f32 %v3449, %v3477
      %3479 = vmatmul.bf16.gmra.mxu0 %v2088
      %v3480 = vpop.f32.mrf.mxu0
      %v3481 = vadd.f32 %v3452, %v3480
      %v3482 = vpop.f32.mrf.mxu0
      %v3483 = vadd.f32 %v3454, %v3482
      %3484 = vmatmul.bf16.gmra.mxu0 %v2090
      %v3485 = vpop.f32.mrf.mxu0
      %v3486 = vadd.f32 %v3457, %v3485
      %v3487 = vpop.f32.mrf.mxu0
      %v3488 = vadd.f32 %v3459, %v3487
      %3489 = vmatmul.bf16.gmra.mxu0 %v2092
      %v3490 = vpop.f32.mrf.mxu0
      %v3491 = vadd.f32 %v3462, %v3490
      %v3492 = vpop.f32.mrf.mxu0
      %v3493 = vadd.f32 %v3464, %v3492
      %3494 = vdwg.mxu0
      %3495 = vmatpush.bf16.msra.mxu0 %v3388
      %3496 = vmatpush.bf16.msra.mxu0 %v3386
      %3497 = vmatpush.bf16.msra.mxu0 %v3384
      %3498 = vmatpush.bf16.msra.mxu0 %v3382
      %3499 = vmatpush.bf16.msra.mxu0 %v3380
      %3500 = vmatpush.bf16.msra.mxu0 %v3378
      %3501 = vmatpush.bf16.msra.mxu0 %v3376
      %3502 = vmatpush.bf16.msra.mxu0 %v3374
      %3503 = vmatmul.bf16.gmra.mxu0 %v2085
      %v3504 = vpop.f32.mrf.mxu0
      %v3505 = vadd.f32 %v3258, %v3504
      %v3506 = vpop.f32.mrf.mxu0
      %v3507 = vadd.f32 %v3260, %v3506
      %3508 = vmatmul.bf16.gmra.mxu0 %v2087
      %v3509 = vpop.f32.mrf.mxu0
      %v3510 = vadd.f32 %v3263, %v3509
      %v3511 = vpop.f32.mrf.mxu0
      %v3512 = vadd.f32 %v3265, %v3511
      %3513 = vmatmul.bf16.gmra.mxu0 %v2089
      %v3514 = vpop.f32.mrf.mxu0
      %v3515 = vadd.f32 %v3268, %v3514
      %v3516 = vpop.f32.mrf.mxu0
      %v3517 = vadd.f32 %v3270, %v3516
      %3518 = vmatmul.bf16.gmra.mxu0 %v2091
      %v3519 = vpop.f32.mrf.mxu0
      %v3520 = vadd.f32 %v3273, %v3519
      %v3521 = vpop.f32.mrf.mxu0
      %v3522 = vadd.f32 %v3275, %v3521
      %3523 = vdwg.mxu0
      %3524 = vmatpush.bf16.msra.mxu0 %v3404
      %3525 = vmatpush.bf16.msra.mxu0 %v3402
      %3526 = vmatpush.bf16.msra.mxu0 %v3400
      %3527 = vmatpush.bf16.msra.mxu0 %v3398
      %3528 = vmatpush.bf16.msra.mxu0 %v3396
      %3529 = vmatpush.bf16.msra.mxu0 %v3394
      %3530 = vmatpush.bf16.msra.mxu0 %v3392
      %3531 = vmatpush.bf16.msra.mxu0 %v3390
      %3532 = vmatmul.bf16.gmra.mxu0 %v2086
      %v3533 = vpop.f32.mrf.mxu0
      %v3534 = vadd.f32 %v3505, %v3533
      %v3535 = vpop.f32.mrf.mxu0
      %v3536 = vadd.f32 %v3507, %v3535
      %3537 = vmatmul.bf16.gmra.mxu0 %v2088
      %v3538 = vpop.f32.mrf.mxu0
      %v3539 = vadd.f32 %v3510, %v3538
      %v3540 = vpop.f32.mrf.mxu0
      %v3541 = vadd.f32 %v3512, %v3540
      %3542 = vmatmul.bf16.gmra.mxu0 %v2090
      %v3543 = vpop.f32.mrf.mxu0
      %v3544 = vadd.f32 %v3515, %v3543
      %v3545 = vpop.f32.mrf.mxu0
      %v3546 = vadd.f32 %v3517, %v3545
      %3547 = vmatmul.bf16.gmra.mxu0 %v2092
      %v3548 = vpop.f32.mrf.mxu0
      %v3549 = vadd.f32 %v3520, %v3548
      %v3550 = vpop.f32.mrf.mxu0
      %v3551 = vadd.f32 %v3522, %v3550
      %3552 = vdwg.mxu0
      %v3553 = vpack.c.bf16 %v3534, %v3476
      %v3554 = vpack.c.bf16 %v3536, %v3478
      %v3555 = vpack.c.bf16 %v3539, %v3481
      %v3556 = vpack.c.bf16 %v3541, %v3483
      %v3557 = vpack.c.bf16 %v3544, %v3486
      %v3558 = vpack.c.bf16 %v3546, %v3488
      %v3559 = vpack.c.bf16 %v3549, %v3491
      %v3560 = vpack.c.bf16 %v3551, %v3493
      %v3561 = vunpack.c.l.bf16 %v3083
      %v3562 = vunpack.c.h.bf16 %v3083
      %v3563 = vunpack.c.l.bf16 %v3084
      %v3564 = vunpack.c.h.bf16 %v3084
      %v3565 = vunpack.c.l.bf16 %v3085
      %v3566 = vunpack.c.h.bf16 %v3085
      %v3567 = vunpack.c.l.bf16 %v3086
      %v3568 = vunpack.c.h.bf16 %v3086
      %v3569 = vunpack.c.l.bf16 %v3087
      %v3570 = vunpack.c.h.bf16 %v3087
      %v3571 = vunpack.c.l.bf16 %v3088
      %v3572 = vunpack.c.h.bf16 %v3088
      %v3573 = vunpack.c.l.bf16 %v3089
      %v3574 = vunpack.c.h.bf16 %v3089
      %v3575 = vunpack.c.l.bf16 %v3090
      %v3576 = vunpack.c.h.bf16 %v3090
      %v3577 = vunpack.c.l.bf16 %v3553
      %v3578 = vunpack.c.h.bf16 %v3553
      %v3579 = vunpack.c.l.bf16 %v3554
      %v3580 = vunpack.c.h.bf16 %v3554
      %v3581 = vunpack.c.l.bf16 %v3555
      %v3582 = vunpack.c.h.bf16 %v3555
      %v3583 = vunpack.c.l.bf16 %v3556
      %v3584 = vunpack.c.h.bf16 %v3556
      %v3585 = vunpack.c.l.bf16 %v3557
      %v3586 = vunpack.c.h.bf16 %v3557
      %v3587 = vunpack.c.l.bf16 %v3558
      %v3588 = vunpack.c.h.bf16 %v3558
      %v3589 = vunpack.c.l.bf16 %v3559
      %v3590 = vunpack.c.h.bf16 %v3559
      %v3591 = vunpack.c.l.bf16 %v3560
      %v3592 = vunpack.c.h.bf16 %v3560
      %v3593 = vadd.f32 %v3561, %v3577
      %v3594 = vadd.f32 %v3562, %v3578
      %v3595 = vadd.f32 %v3563, %v3579
      %v3596 = vadd.f32 %v3564, %v3580
      %v3597 = vadd.f32 %v3565, %v3581
      %v3598 = vadd.f32 %v3566, %v3582
      %v3599 = vadd.f32 %v3567, %v3583
      %v3600 = vadd.f32 %v3568, %v3584
      %v3601 = vadd.f32 %v3569, %v3585
      %v3602 = vadd.f32 %v3570, %v3586
      %v3603 = vadd.f32 %v3571, %v3587
      %v3604 = vadd.f32 %v3572, %v3588
      %v3605 = vadd.f32 %v3573, %v3589
      %v3606 = vadd.f32 %v3574, %v3590
      %v3607 = vadd.f32 %v3575, %v3591
      %v3608 = vadd.f32 %v3576, %v3592
      %v3609 = vpack.c.bf16 %v3595, %v3593
      %v3610 = vpack.c.bf16 %v3596, %v3594
      %v3611 = vpack.c.bf16 %v3599, %v3597
      %v3612 = vpack.c.bf16 %v3600, %v3598
      %v3613 = vpack.c.bf16 %v3603, %v3601
      %v3614 = vpack.c.bf16 %v3604, %v3602
      %v3615 = vpack.c.bf16 %v3607, %v3605
      %v3616 = vpack.c.bf16 %v3608, %v3606
      %v3617 = vld [vmem:[%s1141] sm:$0xff]
      %v3618 = vld [vmem:[%s1141 + $0x8] sm:$0xff]
      %v3619 = vld [vmem:[%s1141 + $0x10] sm:$0xff]
      %v3620 = vld [vmem:[%s1141 + $0x18] sm:$0xff]
      %v3621 = vld [vmem:[%s1141 + $0x20] sm:$0xff]
      %v3622 = vld [vmem:[%s1141 + $0x28] sm:$0xff]
      %v3623 = vld [vmem:[%s1141 + $0x30] sm:$0xff]
      %v3624 = vld [vmem:[%s1141 + $0x38] sm:$0xff]
      %v3625 = vld [vmem:[%s1141 + $0x40] sm:$0xff]
      %v3626 = vld [vmem:[%s1141 + $0x48] sm:$0xff]
      %v3627 = vld [vmem:[%s1141 + $0x50] sm:$0xff]
      %v3628 = vld [vmem:[%s1141 + $0x58] sm:$0xff]
      %v3629 = vld [vmem:[%s1141 + $0x60] sm:$0xff]
      %v3630 = vld [vmem:[%s1141 + $0x68] sm:$0xff]
      %v3631 = vld [vmem:[%s1141 + $0x70] sm:$0xff]
      %v3632 = vld [vmem:[%s1141 + $0x78] sm:$0xff]
      %v3633 = vld [vmem:[%s1141 + $0x80] sm:$0xff]
      %v3634 = vld [vmem:[%s1141 + $0x88] sm:$0xff]
      %v3635 = vld [vmem:[%s1141 + $0x90] sm:$0xff]
      %v3636 = vld [vmem:[%s1141 + $0x98] sm:$0xff]
      %v3637 = vld [vmem:[%s1141 + $0xa0] sm:$0xff]
      %v3638 = vld [vmem:[%s1141 + $0xa8] sm:$0xff]
      %v3639 = vld [vmem:[%s1141 + $0xb0] sm:$0xff]
      %v3640 = vld [vmem:[%s1141 + $0xb8] sm:$0xff]
      %v3641 = vld [vmem:[%s1141 + $0xc0] sm:$0xff]
      %v3642 = vld [vmem:[%s1141 + $0xc8] sm:$0xff]
      %v3643 = vld [vmem:[%s1141 + $0xd0] sm:$0xff]
      %v3644 = vld [vmem:[%s1141 + $0xd8] sm:$0xff]
      %v3645 = vld [vmem:[%s1141 + $0xe0] sm:$0xff]
      %v3646 = vld [vmem:[%s1141 + $0xe8] sm:$0xff]
      %v3647 = vld [vmem:[%s1141 + $0xf0] sm:$0xff]
      %v3648 = vld [vmem:[%s1141 + $0xf8] sm:$0xff]
      %v3649 = vld [vmem:[%s1146] sm:$0xff]
      %v3650 = vld [vmem:[%s1146 + $0x8] sm:$0xff]
      %v3651 = vld [vmem:[%s1146 + $0x10] sm:$0xff]
      %v3652 = vld [vmem:[%s1146 + $0x18] sm:$0xff]
      %v3653 = vld [vmem:[%s1146 + $0x20] sm:$0xff]
      %v3654 = vld [vmem:[%s1146 + $0x28] sm:$0xff]
      %v3655 = vld [vmem:[%s1146 + $0x30] sm:$0xff]
      %v3656 = vld [vmem:[%s1146 + $0x38] sm:$0xff]
      %v3657 = vld [vmem:[%s1146 + $0x40] sm:$0xff]
      %v3658 = vld [vmem:[%s1146 + $0x48] sm:$0xff]
      %v3659 = vld [vmem:[%s1146 + $0x50] sm:$0xff]
      %v3660 = vld [vmem:[%s1146 + $0x58] sm:$0xff]
      %v3661 = vld [vmem:[%s1146 + $0x60] sm:$0xff]
      %v3662 = vld [vmem:[%s1146 + $0x68] sm:$0xff]
      %v3663 = vld [vmem:[%s1146 + $0x70] sm:$0xff]
      %v3664 = vld [vmem:[%s1146 + $0x78] sm:$0xff]
      %v3673 = vunpack.c.l.b16 %v1193
      %v3674 = vunpack.c.l.b16 %v1194
      %v3675 = vunpack.c.l.b16 %v1195
      %v3676 = vunpack.c.l.b16 %v1196
      %v3677 = vunpack.c.l.b16 %v1197
      %v3678 = vunpack.c.l.b16 %v1198
      %v3679 = vunpack.c.l.b16 %v1199
      %v3680 = vunpack.c.l.b16 %v1200
      %v3681 = vpack.c.b16 %v3674, %v3673
      %v3682 = vpack.c.b16 %v3676, %v3675
      %v3683 = vpack.c.b16 %v3678, %v3677
      %v3684 = vpack.c.b16 %v3680, %v3679
      %v3705 = vunpack.c.l.b16 %v3649
      %v3706 = vunpack.c.h.b16 %v3649
      %v3707 = vunpack.c.l.b16 %v3650
      %v3708 = vunpack.c.h.b16 %v3650
      %v3709 = vunpack.c.l.b16 %v3651
      %v3710 = vunpack.c.h.b16 %v3651
      %v3711 = vunpack.c.l.b16 %v3652
      %v3712 = vunpack.c.h.b16 %v3652
      %v3713 = vunpack.c.l.b16 %v3653
      %v3714 = vunpack.c.h.b16 %v3653
      %v3715 = vunpack.c.l.b16 %v3654
      %v3716 = vunpack.c.h.b16 %v3654
      %v3717 = vunpack.c.l.b16 %v3655
      %v3718 = vunpack.c.h.b16 %v3655
      %v3719 = vunpack.c.l.b16 %v3656
      %v3720 = vunpack.c.h.b16 %v3656
      %v3721 = vunpack.c.l.b16 %v3657
      %v3722 = vunpack.c.h.b16 %v3657
      %v3723 = vunpack.c.l.b16 %v3658
      %v3724 = vunpack.c.h.b16 %v3658
      %v3725 = vunpack.c.l.b16 %v3659
      %v3726 = vunpack.c.h.b16 %v3659
      %v3727 = vunpack.c.l.b16 %v3660
      %v3728 = vunpack.c.h.b16 %v3660
      %v3729 = vunpack.c.l.b16 %v3661
      %v3730 = vunpack.c.h.b16 %v3661
      %v3731 = vunpack.c.l.b16 %v3662
      %v3732 = vunpack.c.h.b16 %v3662
      %v3733 = vunpack.c.l.b16 %v3663
      %v3734 = vunpack.c.h.b16 %v3663
      %v3735 = vunpack.c.l.b16 %v3664
      %v3736 = vunpack.c.h.b16 %v3664
      %v3737 = vpack.c.b16 %v3707, %v3705
      %v3738 = vpack.c.b16 %v3708, %v3706
      %v3739 = vpack.c.b16 %v3711, %v3709
      %v3740 = vpack.c.b16 %v3712, %v3710
      %v3741 = vpack.c.b16 %v3715, %v3713
      %v3742 = vpack.c.b16 %v3716, %v3714
      %v3743 = vpack.c.b16 %v3719, %v3717
      %v3744 = vpack.c.b16 %v3720, %v3718
      %v3745 = vpack.c.b16 %v3723, %v3721
      %v3746 = vpack.c.b16 %v3724, %v3722
      %v3747 = vpack.c.b16 %v3727, %v3725
      %v3748 = vpack.c.b16 %v3728, %v3726
      %v3749 = vpack.c.b16 %v3731, %v3729
      %v3750 = vpack.c.b16 %v3732, %v3730
      %v3751 = vpack.c.b16 %v3735, %v3733
      %v3752 = vpack.c.b16 %v3736, %v3734
      %3769 = vmatpush.bf16.msra.mxu0 %v3751
      %3770 = vmatpush.bf16.msra.mxu0 %v3749
      %3771 = vmatpush.bf16.msra.mxu0 %v3747
      %3772 = vmatpush.bf16.msra.mxu0 %v3745
      %3773 = vmatpush.bf16.msra.mxu0 %v3743
      %3774 = vmatpush.bf16.msra.mxu0 %v3741
      %3775 = vmatpush.bf16.msra.mxu0 %v3739
      %3776 = vmatpush.bf16.msra.mxu0 %v3737
      %3777 = vmatmul.bf16.gmra.mxu0 %v3681
      %v3778 = vpop.f32.mrf.mxu0
      %v3779 = vadd.f32 0.0, %v3778
      %v3780 = vpop.f32.mrf.mxu0
      %v3781 = vadd.f32 0.0, %v3780
      %3782 = vmatmul.bf16.gmra.mxu0 %v3682
      %v3783 = vpop.f32.mrf.mxu0
      %v3784 = vadd.f32 0.0, %v3783
      %v3785 = vpop.f32.mrf.mxu0
      %v3786 = vadd.f32 0.0, %v3785
      %3787 = vmatmul.bf16.gmra.mxu0 %v3683
      %v3788 = vpop.f32.mrf.mxu0
      %v3789 = vadd.f32 0.0, %v3788
      %v3790 = vpop.f32.mrf.mxu0
      %v3791 = vadd.f32 0.0, %v3790
      %3792 = vmatmul.bf16.gmra.mxu0 %v3684
      %v3793 = vpop.f32.mrf.mxu0
      %v3794 = vadd.f32 0.0, %v3793
      %v3795 = vpop.f32.mrf.mxu0
      %v3796 = vadd.f32 0.0, %v3795
      %3797 = vdwg.mxu0
      %3798 = vmatpush.bf16.msra.mxu0 %v3752
      %3799 = vmatpush.bf16.msra.mxu0 %v3750
      %3800 = vmatpush.bf16.msra.mxu0 %v3748
      %3801 = vmatpush.bf16.msra.mxu0 %v3746
      %3802 = vmatpush.bf16.msra.mxu0 %v3744
      %3803 = vmatpush.bf16.msra.mxu0 %v3742
      %3804 = vmatpush.bf16.msra.mxu0 %v3740
      %3805 = vmatpush.bf16.msra.mxu0 %v3738
      %3806 = vmatmul.bf16.gmra.mxu0 %v3681
      %v3807 = vpop.f32.mrf.mxu0
      %v3808 = vadd.f32 0.0, %v3807
      %v3809 = vpop.f32.mrf.mxu0
      %v3810 = vadd.f32 0.0, %v3809
      %3811 = vmatmul.bf16.gmra.mxu0 %v3682
      %v3812 = vpop.f32.mrf.mxu0
      %v3813 = vadd.f32 0.0, %v3812
      %v3814 = vpop.f32.mrf.mxu0
      %v3815 = vadd.f32 0.0, %v3814
      %3816 = vmatmul.bf16.gmra.mxu0 %v3683
      %v3817 = vpop.f32.mrf.mxu0
      %v3818 = vadd.f32 0.0, %v3817
      %v3819 = vpop.f32.mrf.mxu0
      %v3820 = vadd.f32 0.0, %v3819
      %3821 = vmatmul.bf16.gmra.mxu0 %v3684
      %v3822 = vpop.f32.mrf.mxu0
      %v3823 = vadd.f32 0.0, %v3822
      %v3824 = vpop.f32.mrf.mxu0
      %v3825 = vadd.f32 0.0, %v3824
      %3826 = vdwg.mxu0
      %v3859 = vunpack.c.l.b16 %v3617
      %v3860 = vunpack.c.h.b16 %v3617
      %v3861 = vunpack.c.l.b16 %v3618
      %v3862 = vunpack.c.h.b16 %v3618
      %v3863 = vunpack.c.l.b16 %v3619
      %v3864 = vunpack.c.h.b16 %v3619
      %v3865 = vunpack.c.l.b16 %v3620
      %v3866 = vunpack.c.h.b16 %v3620
      %v3867 = vunpack.c.l.b16 %v3621
      %v3868 = vunpack.c.h.b16 %v3621
      %v3869 = vunpack.c.l.b16 %v3622
      %v3870 = vunpack.c.h.b16 %v3622
      %v3871 = vunpack.c.l.b16 %v3623
      %v3872 = vunpack.c.h.b16 %v3623
      %v3873 = vunpack.c.l.b16 %v3624
      %v3874 = vunpack.c.h.b16 %v3624
      %v3875 = vunpack.c.l.b16 %v3625
      %v3876 = vunpack.c.h.b16 %v3625
      %v3877 = vunpack.c.l.b16 %v3626
      %v3878 = vunpack.c.h.b16 %v3626
      %v3879 = vunpack.c.l.b16 %v3627
      %v3880 = vunpack.c.h.b16 %v3627
      %v3881 = vunpack.c.l.b16 %v3628
      %v3882 = vunpack.c.h.b16 %v3628
      %v3883 = vunpack.c.l.b16 %v3629
      %v3884 = vunpack.c.h.b16 %v3629
      %v3885 = vunpack.c.l.b16 %v3630
      %v3886 = vunpack.c.h.b16 %v3630
      %v3887 = vunpack.c.l.b16 %v3631
      %v3888 = vunpack.c.h.b16 %v3631
      %v3889 = vunpack.c.l.b16 %v3632
      %v3890 = vunpack.c.h.b16 %v3632
      %v3891 = vunpack.c.l.b16 %v3633
      %v3892 = vunpack.c.h.b16 %v3633
      %v3893 = vunpack.c.l.b16 %v3634
      %v3894 = vunpack.c.h.b16 %v3634
      %v3895 = vunpack.c.l.b16 %v3635
      %v3896 = vunpack.c.h.b16 %v3635
      %v3897 = vunpack.c.l.b16 %v3636
      %v3898 = vunpack.c.h.b16 %v3636
      %v3899 = vunpack.c.l.b16 %v3637
      %v3900 = vunpack.c.h.b16 %v3637
      %v3901 = vunpack.c.l.b16 %v3638
      %v3902 = vunpack.c.h.b16 %v3638
      %v3903 = vunpack.c.l.b16 %v3639
      %v3904 = vunpack.c.h.b16 %v3639
      %v3905 = vunpack.c.l.b16 %v3640
      %v3906 = vunpack.c.h.b16 %v3640
      %v3907 = vunpack.c.l.b16 %v3641
      %v3908 = vunpack.c.h.b16 %v3641
      %v3909 = vunpack.c.l.b16 %v3642
      %v3910 = vunpack.c.h.b16 %v3642
      %v3911 = vunpack.c.l.b16 %v3643
      %v3912 = vunpack.c.h.b16 %v3643
      %v3913 = vunpack.c.l.b16 %v3644
      %v3914 = vunpack.c.h.b16 %v3644
      %v3915 = vunpack.c.l.b16 %v3645
      %v3916 = vunpack.c.h.b16 %v3645
      %v3917 = vunpack.c.l.b16 %v3646
      %v3918 = vunpack.c.h.b16 %v3646
      %v3919 = vunpack.c.l.b16 %v3647
      %v3920 = vunpack.c.h.b16 %v3647
      %v3921 = vunpack.c.l.b16 %v3648
      %v3922 = vunpack.c.h.b16 %v3648
      %v3923 = vpack.c.b16 %v3861, %v3859
      %v3924 = vpack.c.b16 %v3862, %v3860
      %v3925 = vpack.c.b16 %v3865, %v3863
      %v3926 = vpack.c.b16 %v3866, %v3864
      %v3927 = vpack.c.b16 %v3869, %v3867
      %v3928 = vpack.c.b16 %v3870, %v3868
      %v3929 = vpack.c.b16 %v3873, %v3871
      %v3930 = vpack.c.b16 %v3874, %v3872
      %v3931 = vpack.c.b16 %v3877, %v3875
      %v3932 = vpack.c.b16 %v3878, %v3876
      %v3933 = vpack.c.b16 %v3881, %v3879
      %v3934 = vpack.c.b16 %v3882, %v3880
      %v3935 = vpack.c.b16 %v3885, %v3883
      %v3936 = vpack.c.b16 %v3886, %v3884
      %v3937 = vpack.c.b16 %v3889, %v3887
      %v3938 = vpack.c.b16 %v3890, %v3888
      %v3939 = vpack.c.b16 %v3893, %v3891
      %v3940 = vpack.c.b16 %v3894, %v3892
      %v3941 = vpack.c.b16 %v3897, %v3895
      %v3942 = vpack.c.b16 %v3898, %v3896
      %v3943 = vpack.c.b16 %v3901, %v3899
      %v3944 = vpack.c.b16 %v3902, %v3900
      %v3945 = vpack.c.b16 %v3905, %v3903
      %v3946 = vpack.c.b16 %v3906, %v3904
      %v3947 = vpack.c.b16 %v3909, %v3907
      %v3948 = vpack.c.b16 %v3910, %v3908
      %v3949 = vpack.c.b16 %v3913, %v3911
      %v3950 = vpack.c.b16 %v3914, %v3912
      %v3951 = vpack.c.b16 %v3917, %v3915
      %v3952 = vpack.c.b16 %v3918, %v3916
      %v3953 = vpack.c.b16 %v3921, %v3919
      %v3954 = vpack.c.b16 %v3922, %v3920
      %3987 = vmatpush.bf16.msra.mxu0 %v3937
      %3988 = vmatpush.bf16.msra.mxu0 %v3935
      %3989 = vmatpush.bf16.msra.mxu0 %v3933
      %3990 = vmatpush.bf16.msra.mxu0 %v3931
      %3991 = vmatpush.bf16.msra.mxu0 %v3929
      %3992 = vmatpush.bf16.msra.mxu0 %v3927
      %3993 = vmatpush.bf16.msra.mxu0 %v3925
      %3994 = vmatpush.bf16.msra.mxu0 %v3923
      %3995 = vmatmul.bf16.gmra.mxu0 %v3609
      %v3996 = vpop.f32.mrf.mxu0
      %v3997 = vadd.f32 %v3779, %v3996
      %v3998 = vpop.f32.mrf.mxu0
      %v3999 = vadd.f32 %v3781, %v3998
      %4000 = vmatmul.bf16.gmra.mxu0 %v3611
      %v4001 = vpop.f32.mrf.mxu0
      %v4002 = vadd.f32 %v3784, %v4001
      %v4003 = vpop.f32.mrf.mxu0
      %v4004 = vadd.f32 %v3786, %v4003
      %4005 = vmatmul.bf16.gmra.mxu0 %v3613
      %v4006 = vpop.f32.mrf.mxu0
      %v4007 = vadd.f32 %v3789, %v4006
      %v4008 = vpop.f32.mrf.mxu0
      %v4009 = vadd.f32 %v3791, %v4008
      %4010 = vmatmul.bf16.gmra.mxu0 %v3615
      %v4011 = vpop.f32.mrf.mxu0
      %v4012 = vadd.f32 %v3794, %v4011
      %v4013 = vpop.f32.mrf.mxu0
      %v4014 = vadd.f32 %v3796, %v4013
      %4015 = vdwg.mxu0
      %4016 = vmatpush.bf16.msra.mxu0 %v3953
      %4017 = vmatpush.bf16.msra.mxu0 %v3951
      %4018 = vmatpush.bf16.msra.mxu0 %v3949
      %4019 = vmatpush.bf16.msra.mxu0 %v3947
      %4020 = vmatpush.bf16.msra.mxu0 %v3945
      %4021 = vmatpush.bf16.msra.mxu0 %v3943
      %4022 = vmatpush.bf16.msra.mxu0 %v3941
      %4023 = vmatpush.bf16.msra.mxu0 %v3939
      %4024 = vmatmul.bf16.gmra.mxu0 %v3610
      %v4025 = vpop.f32.mrf.mxu0
      %v4026 = vadd.f32 %v3997, %v4025
      %v4027 = vpop.f32.mrf.mxu0
      %v4028 = vadd.f32 %v3999, %v4027
      %4029 = vmatmul.bf16.gmra.mxu0 %v3612
      %v4030 = vpop.f32.mrf.mxu0
      %v4031 = vadd.f32 %v4002, %v4030
      %v4032 = vpop.f32.mrf.mxu0
      %v4033 = vadd.f32 %v4004, %v4032
      %4034 = vmatmul.bf16.gmra.mxu0 %v3614
      %v4035 = vpop.f32.mrf.mxu0
      %v4036 = vadd.f32 %v4007, %v4035
      %v4037 = vpop.f32.mrf.mxu0
      %v4038 = vadd.f32 %v4009, %v4037
      %4039 = vmatmul.bf16.gmra.mxu0 %v3616
      %v4040 = vpop.f32.mrf.mxu0
      %v4041 = vadd.f32 %v4012, %v4040
      %v4042 = vpop.f32.mrf.mxu0
      %v4043 = vadd.f32 %v4014, %v4042
      %4044 = vdwg.mxu0
      %4045 = vmatpush.bf16.msra.mxu0 %v3938
      %4046 = vmatpush.bf16.msra.mxu0 %v3936
      %4047 = vmatpush.bf16.msra.mxu0 %v3934
      %4048 = vmatpush.bf16.msra.mxu0 %v3932
      %4049 = vmatpush.bf16.msra.mxu0 %v3930
      %4050 = vmatpush.bf16.msra.mxu0 %v3928
      %4051 = vmatpush.bf16.msra.mxu0 %v3926
      %4052 = vmatpush.bf16.msra.mxu0 %v3924
      %4053 = vmatmul.bf16.gmra.mxu0 %v3609
      %v4054 = vpop.f32.mrf.mxu0
      %v4055 = vadd.f32 %v3808, %v4054
      %v4056 = vpop.f32.mrf.mxu0
      %v4057 = vadd.f32 %v3810, %v4056
      %4058 = vmatmul.bf16.gmra.mxu0 %v3611
      %v4059 = vpop.f32.mrf.mxu0
      %v4060 = vadd.f32 %v3813, %v4059
      %v4061 = vpop.f32.mrf.mxu0
      %v4062 = vadd.f32 %v3815, %v4061
      %4063 = vmatmul.bf16.gmra.mxu0 %v3613
      %v4064 = vpop.f32.mrf.mxu0
      %v4065 = vadd.f32 %v3818, %v4064
      %v4066 = vpop.f32.mrf.mxu0
      %v4067 = vadd.f32 %v3820, %v4066
      %4068 = vmatmul.bf16.gmra.mxu0 %v3615
      %v4069 = vpop.f32.mrf.mxu0
      %v4070 = vadd.f32 %v3823, %v4069
      %v4071 = vpop.f32.mrf.mxu0
      %v4072 = vadd.f32 %v3825, %v4071
      %4073 = vdwg.mxu0
      %4074 = vmatpush.bf16.msra.mxu0 %v3954
      %4075 = vmatpush.bf16.msra.mxu0 %v3952
      %4076 = vmatpush.bf16.msra.mxu0 %v3950
      %4077 = vmatpush.bf16.msra.mxu0 %v3948
      %4078 = vmatpush.bf16.msra.mxu0 %v3946
      %4079 = vmatpush.bf16.msra.mxu0 %v3944
      %4080 = vmatpush.bf16.msra.mxu0 %v3942
      %4081 = vmatpush.bf16.msra.mxu0 %v3940
      %4082 = vmatmul.bf16.gmra.mxu0 %v3610
      %v4083 = vpop.f32.mrf.mxu0
      %v4084 = vadd.f32 %v4055, %v4083
      %v4085 = vpop.f32.mrf.mxu0
      %v4086 = vadd.f32 %v4057, %v4085
      %4087 = vmatmul.bf16.gmra.mxu0 %v3612
      %v4088 = vpop.f32.mrf.mxu0
      %v4089 = vadd.f32 %v4060, %v4088
      %v4090 = vpop.f32.mrf.mxu0
      %v4091 = vadd.f32 %v4062, %v4090
      %4092 = vmatmul.bf16.gmra.mxu0 %v3614
      %v4093 = vpop.f32.mrf.mxu0
      %v4094 = vadd.f32 %v4065, %v4093
      %v4095 = vpop.f32.mrf.mxu0
      %v4096 = vadd.f32 %v4067, %v4095
      %4097 = vmatmul.bf16.gmra.mxu0 %v3616
      %v4098 = vpop.f32.mrf.mxu0
      %v4099 = vadd.f32 %v4070, %v4098
      %v4100 = vpop.f32.mrf.mxu0
      %v4101 = vadd.f32 %v4072, %v4100
      %4102 = vdwg.mxu0
      %v4103 = vld [vmem:[%s17] sm:$0x3]
      %v4105 = vperm.slane %v4103, 0
      %v4106 = vperm.slane %v4103, 1
      %v4109 = vadd.f32 %v4026, %v4105
      %v4110 = vadd.f32 %v4084, %v4106
      %v4111 = vadd.f32 %v4028, %v4105
      %v4112 = vadd.f32 %v4086, %v4106
      %v4113 = vadd.f32 %v4031, %v4105
      %v4114 = vadd.f32 %v4089, %v4106
      %v4115 = vadd.f32 %v4033, %v4105
      %v4116 = vadd.f32 %v4091, %v4106
      %v4117 = vadd.f32 %v4036, %v4105
      %v4118 = vadd.f32 %v4094, %v4106
      %v4119 = vadd.f32 %v4038, %v4105
      %v4120 = vadd.f32 %v4096, %v4106
      %v4121 = vadd.f32 %v4041, %v4105
      %v4122 = vadd.f32 %v4099, %v4106
      %v4123 = vadd.f32 %v4043, %v4105
      %v4124 = vadd.f32 %v4101, %v4106
      %v4125 = vpack.c.bf16 %v4110, %v4109
      %v4126 = vpack.c.bf16 %v4112, %v4111
      %v4127 = vpack.c.bf16 %v4114, %v4113
      %v4128 = vpack.c.bf16 %v4116, %v4115
      %v4129 = vpack.c.bf16 %v4118, %v4117
      %v4130 = vpack.c.bf16 %v4120, %v4119
      %v4131 = vpack.c.bf16 %v4122, %v4121
      %v4132 = vpack.c.bf16 %v4124, %v4123
      %v4133 = vunpack.c.l.bf16 %v4125
      %v4134 = vunpack.c.h.bf16 %v4125
      %v4135 = vunpack.c.l.bf16 %v4126
      %v4136 = vunpack.c.h.bf16 %v4126
      %v4137 = vunpack.c.l.bf16 %v4127
      %v4138 = vunpack.c.h.bf16 %v4127
      %v4139 = vunpack.c.l.bf16 %v4128
      %v4140 = vunpack.c.h.bf16 %v4128
      %v4141 = vunpack.c.l.bf16 %v4129
      %v4142 = vunpack.c.h.bf16 %v4129
      %v4143 = vunpack.c.l.bf16 %v4130
      %v4144 = vunpack.c.h.bf16 %v4130
      %v4145 = vunpack.c.l.bf16 %v4131
      %v4146 = vunpack.c.h.bf16 %v4131
      %v4147 = vunpack.c.l.bf16 %v4132
      %v4148 = vunpack.c.h.bf16 %v4132
      %v4149 = vmul.f32 %v4133, 0.20019531
      %v4150 = vmul.f32 %v4134, 0.20019531
      %v4151 = vmul.f32 %v4135, 0.20019531
      %v4152 = vmul.f32 %v4136, 0.20019531
      %v4153 = vmul.f32 %v4137, 0.20019531
      %v4154 = vmul.f32 %v4138, 0.20019531
      %v4155 = vmul.f32 %v4139, 0.20019531
      %v4156 = vmul.f32 %v4140, 0.20019531
      %v4157 = vmul.f32 %v4141, 0.20019531
      %v4158 = vmul.f32 %v4142, 0.20019531
      %v4159 = vmul.f32 %v4143, 0.20019531
      %v4160 = vmul.f32 %v4144, 0.20019531
      %v4161 = vmul.f32 %v4145, 0.20019531
      %v4162 = vmul.f32 %v4146, 0.20019531
      %v4163 = vmul.f32 %v4147, 0.20019531
      %v4164 = vmul.f32 %v4148, 0.20019531
      %v4165 = vpack.c.bf16 %v4150, %v4149
      %v4166 = vpack.c.bf16 %v4152, %v4151
      %v4167 = vpack.c.bf16 %v4154, %v4153
      %v4168 = vpack.c.bf16 %v4156, %v4155
      %v4169 = vpack.c.bf16 %v4158, %v4157
      %v4170 = vpack.c.bf16 %v4160, %v4159
      %v4171 = vpack.c.bf16 %v4162, %v4161
      %v4172 = vpack.c.bf16 %v4164, %v4163
      %v4173 = vunpack.c.l.bf16 %v4165
      %v4174 = vunpack.c.h.bf16 %v4165
      %v4175 = vunpack.c.l.bf16 %v4166
      %v4176 = vunpack.c.h.bf16 %v4166
      %v4177 = vunpack.c.l.bf16 %v4167
      %v4178 = vunpack.c.h.bf16 %v4167
      %v4179 = vunpack.c.l.bf16 %v4168
      %v4180 = vunpack.c.h.bf16 %v4168
      %v4181 = vunpack.c.l.bf16 %v4169
      %v4182 = vunpack.c.h.bf16 %v4169
      %v4183 = vunpack.c.l.bf16 %v4170
      %v4184 = vunpack.c.h.bf16 %v4170
      %v4185 = vunpack.c.l.bf16 %v4171
      %v4186 = vunpack.c.h.bf16 %v4171
      %v4187 = vunpack.c.l.bf16 %v4172
      %v4188 = vunpack.c.h.bf16 %v4172
      %v4189 = vmax.f32 %v4133, %v4173
      %v4190 = vmax.f32 %v4134, %v4174
      %v4191 = vmax.f32 %v4135, %v4175
      %v4192 = vmax.f32 %v4136, %v4176
      %v4193 = vmax.f32 %v4137, %v4177
      %v4194 = vmax.f32 %v4138, %v4178
      %v4195 = vmax.f32 %v4139, %v4179
      %v4196 = vmax.f32 %v4140, %v4180
      %v4197 = vmax.f32 %v4141, %v4181
      %v4198 = vmax.f32 %v4142, %v4182
      %v4199 = vmax.f32 %v4143, %v4183
      %v4200 = vmax.f32 %v4144, %v4184
      %v4201 = vmax.f32 %v4145, %v4185
      %v4202 = vmax.f32 %v4146, %v4186
      %v4203 = vmax.f32 %v4147, %v4187
      %v4204 = vmax.f32 %v4148, %v4188
      %v4205 = vpack.c.bf16 %v4191, %v4189
      %v4206 = vpack.c.bf16 %v4192, %v4190
      %v4207 = vpack.c.bf16 %v4195, %v4193
      %v4208 = vpack.c.bf16 %v4196, %v4194
      %v4209 = vpack.c.bf16 %v4199, %v4197
      %v4210 = vpack.c.bf16 %v4200, %v4198
      %v4211 = vpack.c.bf16 %v4203, %v4201
      %v4212 = vpack.c.bf16 %v4204, %v4202
      %v4213 = vld [vmem:[%s1151] sm:$0xff]
      %v4214 = vld [vmem:[%s1151 + $0x8] sm:$0xff]
      %v4215 = vld [vmem:[%s1151 + $0x10] sm:$0xff]
      %v4216 = vld [vmem:[%s1151 + $0x18] sm:$0xff]
      %v4217 = vld [vmem:[%s1151 + $0x20] sm:$0xff]
      %v4218 = vld [vmem:[%s1151 + $0x28] sm:$0xff]
      %v4219 = vld [vmem:[%s1151 + $0x30] sm:$0xff]
      %v4220 = vld [vmem:[%s1151 + $0x38] sm:$0xff]
      %v4221 = vld [vmem:[%s1151 + $0x40] sm:$0xff]
      %v4222 = vld [vmem:[%s1151 + $0x48] sm:$0xff]
      %v4223 = vld [vmem:[%s1151 + $0x50] sm:$0xff]
      %v4224 = vld [vmem:[%s1151 + $0x58] sm:$0xff]
      %v4225 = vld [vmem:[%s1151 + $0x60] sm:$0xff]
      %v4226 = vld [vmem:[%s1151 + $0x68] sm:$0xff]
      %v4227 = vld [vmem:[%s1151 + $0x70] sm:$0xff]
      %v4228 = vld [vmem:[%s1151 + $0x78] sm:$0xff]
      %v4229 = vld [vmem:[%s1151 + $0x80] sm:$0xff]
      %v4230 = vld [vmem:[%s1151 + $0x88] sm:$0xff]
      %v4231 = vld [vmem:[%s1151 + $0x90] sm:$0xff]
      %v4232 = vld [vmem:[%s1151 + $0x98] sm:$0xff]
      %v4233 = vld [vmem:[%s1151 + $0xa0] sm:$0xff]
      %v4234 = vld [vmem:[%s1151 + $0xa8] sm:$0xff]
      %v4235 = vld [vmem:[%s1151 + $0xb0] sm:$0xff]
      %v4236 = vld [vmem:[%s1151 + $0xb8] sm:$0xff]
      %v4237 = vld [vmem:[%s1151 + $0xc0] sm:$0xff]
      %v4238 = vld [vmem:[%s1151 + $0xc8] sm:$0xff]
      %v4239 = vld [vmem:[%s1151 + $0xd0] sm:$0xff]
      %v4240 = vld [vmem:[%s1151 + $0xd8] sm:$0xff]
      %v4241 = vld [vmem:[%s1151 + $0xe0] sm:$0xff]
      %v4242 = vld [vmem:[%s1151 + $0xe8] sm:$0xff]
      %v4243 = vld [vmem:[%s1151 + $0xf0] sm:$0xff]
      %v4244 = vld [vmem:[%s1151 + $0xf8] sm:$0xff]
      %v4245 = vld [vmem:[%s19] sm:$0x3]
      %v4247 = vperm.slane %v4245, 0
      %v4248 = vperm.slane %v4245, 1
      %v4283 = vunpack.c.l.b16 %v4213
      %v4284 = vunpack.c.h.b16 %v4213
      %v4285 = vunpack.c.l.b16 %v4214
      %v4286 = vunpack.c.h.b16 %v4214
      %v4287 = vunpack.c.l.b16 %v4215
      %v4288 = vunpack.c.h.b16 %v4215
      %v4289 = vunpack.c.l.b16 %v4216
      %v4290 = vunpack.c.h.b16 %v4216
      %v4291 = vunpack.c.l.b16 %v4217
      %v4292 = vunpack.c.h.b16 %v4217
      %v4293 = vunpack.c.l.b16 %v4218
      %v4294 = vunpack.c.h.b16 %v4218
      %v4295 = vunpack.c.l.b16 %v4219
      %v4296 = vunpack.c.h.b16 %v4219
      %v4297 = vunpack.c.l.b16 %v4220
      %v4298 = vunpack.c.h.b16 %v4220
      %v4299 = vunpack.c.l.b16 %v4221
      %v4300 = vunpack.c.h.b16 %v4221
      %v4301 = vunpack.c.l.b16 %v4222
      %v4302 = vunpack.c.h.b16 %v4222
      %v4303 = vunpack.c.l.b16 %v4223
      %v4304 = vunpack.c.h.b16 %v4223
      %v4305 = vunpack.c.l.b16 %v4224
      %v4306 = vunpack.c.h.b16 %v4224
      %v4307 = vunpack.c.l.b16 %v4225
      %v4308 = vunpack.c.h.b16 %v4225
      %v4309 = vunpack.c.l.b16 %v4226
      %v4310 = vunpack.c.h.b16 %v4226
      %v4311 = vunpack.c.l.b16 %v4227
      %v4312 = vunpack.c.h.b16 %v4227
      %v4313 = vunpack.c.l.b16 %v4228
      %v4314 = vunpack.c.h.b16 %v4228
      %v4315 = vunpack.c.l.b16 %v4229
      %v4316 = vunpack.c.h.b16 %v4229
      %v4317 = vunpack.c.l.b16 %v4230
      %v4318 = vunpack.c.h.b16 %v4230
      %v4319 = vunpack.c.l.b16 %v4231
      %v4320 = vunpack.c.h.b16 %v4231
      %v4321 = vunpack.c.l.b16 %v4232
      %v4322 = vunpack.c.h.b16 %v4232
      %v4323 = vunpack.c.l.b16 %v4233
      %v4324 = vunpack.c.h.b16 %v4233
      %v4325 = vunpack.c.l.b16 %v4234
      %v4326 = vunpack.c.h.b16 %v4234
      %v4327 = vunpack.c.l.b16 %v4235
      %v4328 = vunpack.c.h.b16 %v4235
      %v4329 = vunpack.c.l.b16 %v4236
      %v4330 = vunpack.c.h.b16 %v4236
      %v4331 = vunpack.c.l.b16 %v4237
      %v4332 = vunpack.c.h.b16 %v4237
      %v4333 = vunpack.c.l.b16 %v4238
      %v4334 = vunpack.c.h.b16 %v4238
      %v4335 = vunpack.c.l.b16 %v4239
      %v4336 = vunpack.c.h.b16 %v4239
      %v4337 = vunpack.c.l.b16 %v4240
      %v4338 = vunpack.c.h.b16 %v4240
      %v4339 = vunpack.c.l.b16 %v4241
      %v4340 = vunpack.c.h.b16 %v4241
      %v4341 = vunpack.c.l.b16 %v4242
      %v4342 = vunpack.c.h.b16 %v4242
      %v4343 = vunpack.c.l.b16 %v4243
      %v4344 = vunpack.c.h.b16 %v4243
      %v4345 = vunpack.c.l.b16 %v4244
      %v4346 = vunpack.c.h.b16 %v4244
      %v4347 = vpack.c.b16 %v4285, %v4283
      %v4348 = vpack.c.b16 %v4286, %v4284
      %v4349 = vpack.c.b16 %v4289, %v4287
      %v4350 = vpack.c.b16 %v4290, %v4288
      %v4351 = vpack.c.b16 %v4293, %v4291
      %v4352 = vpack.c.b16 %v4294, %v4292
      %v4353 = vpack.c.b16 %v4297, %v4295
      %v4354 = vpack.c.b16 %v4298, %v4296
      %v4355 = vpack.c.b16 %v4301, %v4299
      %v4356 = vpack.c.b16 %v4302, %v4300
      %v4357 = vpack.c.b16 %v4305, %v4303
      %v4358 = vpack.c.b16 %v4306, %v4304
      %v4359 = vpack.c.b16 %v4309, %v4307
      %v4360 = vpack.c.b16 %v4310, %v4308
      %v4361 = vpack.c.b16 %v4313, %v4311
      %v4362 = vpack.c.b16 %v4314, %v4312
      %v4363 = vpack.c.b16 %v4317, %v4315
      %v4364 = vpack.c.b16 %v4318, %v4316
      %v4365 = vpack.c.b16 %v4321, %v4319
      %v4366 = vpack.c.b16 %v4322, %v4320
      %v4367 = vpack.c.b16 %v4325, %v4323
      %v4368 = vpack.c.b16 %v4326, %v4324
      %v4369 = vpack.c.b16 %v4329, %v4327
      %v4370 = vpack.c.b16 %v4330, %v4328
      %v4371 = vpack.c.b16 %v4333, %v4331
      %v4372 = vpack.c.b16 %v4334, %v4332
      %v4373 = vpack.c.b16 %v4337, %v4335
      %v4374 = vpack.c.b16 %v4338, %v4336
      %v4375 = vpack.c.b16 %v4341, %v4339
      %v4376 = vpack.c.b16 %v4342, %v4340
      %v4377 = vpack.c.b16 %v4345, %v4343
      %v4378 = vpack.c.b16 %v4346, %v4344
      %4411 = vmatpush.bf16.msra.mxu0 %v4361
      %4412 = vmatpush.bf16.msra.mxu0 %v4359
      %4413 = vmatpush.bf16.msra.mxu0 %v4357
      %4414 = vmatpush.bf16.msra.mxu0 %v4355
      %4415 = vmatpush.bf16.msra.mxu0 %v4353
      %4416 = vmatpush.bf16.msra.mxu0 %v4351
      %4417 = vmatpush.bf16.msra.mxu0 %v4349
      %4418 = vmatpush.bf16.msra.mxu0 %v4347
      %4419 = vmatmul.bf16.gmra.mxu0 %v4205
      %v4420 = vpop.f32.mrf.mxu0
      %v4421 = vadd.f32 %v4247, %v4420
      %v4422 = vpop.f32.mrf.mxu0
      %v4423 = vadd.f32 %v4247, %v4422
      %4424 = vmatmul.bf16.gmra.mxu0 %v4207
      %v4425 = vpop.f32.mrf.mxu0
      %v4426 = vadd.f32 %v4247, %v4425
      %v4427 = vpop.f32.mrf.mxu0
      %v4428 = vadd.f32 %v4247, %v4427
      %4429 = vmatmul.bf16.gmra.mxu0 %v4209
      %v4430 = vpop.f32.mrf.mxu0
      %v4431 = vadd.f32 %v4247, %v4430
      %v4432 = vpop.f32.mrf.mxu0
      %v4433 = vadd.f32 %v4247, %v4432
      %4434 = vmatmul.bf16.gmra.mxu0 %v4211
      %v4435 = vpop.f32.mrf.mxu0
      %v4436 = vadd.f32 %v4247, %v4435
      %v4437 = vpop.f32.mrf.mxu0
      %v4438 = vadd.f32 %v4247, %v4437
      %4439 = vdwg.mxu0
      %4440 = vmatpush.bf16.msra.mxu0 %v4377
      %4441 = vmatpush.bf16.msra.mxu0 %v4375
      %4442 = vmatpush.bf16.msra.mxu0 %v4373
      %4443 = vmatpush.bf16.msra.mxu0 %v4371
      %4444 = vmatpush.bf16.msra.mxu0 %v4369
      %4445 = vmatpush.bf16.msra.mxu0 %v4367
      %4446 = vmatpush.bf16.msra.mxu0 %v4365
      %4447 = vmatpush.bf16.msra.mxu0 %v4363
      %4448 = vmatmul.bf16.gmra.mxu0 %v4206
      %v4449 = vpop.f32.mrf.mxu0
      %v4450 = vadd.f32 %v4421, %v4449
      %v4451 = vpop.f32.mrf.mxu0
      %v4452 = vadd.f32 %v4423, %v4451
      %4453 = vmatmul.bf16.gmra.mxu0 %v4208
      %v4454 = vpop.f32.mrf.mxu0
      %v4455 = vadd.f32 %v4426, %v4454
      %v4456 = vpop.f32.mrf.mxu0
      %v4457 = vadd.f32 %v4428, %v4456
      %4458 = vmatmul.bf16.gmra.mxu0 %v4210
      %v4459 = vpop.f32.mrf.mxu0
      %v4460 = vadd.f32 %v4431, %v4459
      %v4461 = vpop.f32.mrf.mxu0
      %v4462 = vadd.f32 %v4433, %v4461
      %4463 = vmatmul.bf16.gmra.mxu0 %v4212
      %v4464 = vpop.f32.mrf.mxu0
      %v4465 = vadd.f32 %v4436, %v4464
      %v4466 = vpop.f32.mrf.mxu0
      %v4467 = vadd.f32 %v4438, %v4466
      %4468 = vdwg.mxu0
      %4469 = vmatpush.bf16.msra.mxu0 %v4362
      %4470 = vmatpush.bf16.msra.mxu0 %v4360
      %4471 = vmatpush.bf16.msra.mxu0 %v4358
      %4472 = vmatpush.bf16.msra.mxu0 %v4356
      %4473 = vmatpush.bf16.msra.mxu0 %v4354
      %4474 = vmatpush.bf16.msra.mxu0 %v4352
      %4475 = vmatpush.bf16.msra.mxu0 %v4350
      %4476 = vmatpush.bf16.msra.mxu0 %v4348
      %4477 = vmatmul.bf16.gmra.mxu0 %v4205
      %v4478 = vpop.f32.mrf.mxu0
      %v4479 = vadd.f32 %v4248, %v4478
      %v4480 = vpop.f32.mrf.mxu0
      %v4481 = vadd.f32 %v4248, %v4480
      %4482 = vmatmul.bf16.gmra.mxu0 %v4207
      %v4483 = vpop.f32.mrf.mxu0
      %v4484 = vadd.f32 %v4248, %v4483
      %v4485 = vpop.f32.mrf.mxu0
      %v4486 = vadd.f32 %v4248, %v4485
      %4487 = vmatmul.bf16.gmra.mxu0 %v4209
      %v4488 = vpop.f32.mrf.mxu0
      %v4489 = vadd.f32 %v4248, %v4488
      %v4490 = vpop.f32.mrf.mxu0
      %v4491 = vadd.f32 %v4248, %v4490
      %4492 = vmatmul.bf16.gmra.mxu0 %v4211
      %v4493 = vpop.f32.mrf.mxu0
      %v4494 = vadd.f32 %v4248, %v4493
      %v4495 = vpop.f32.mrf.mxu0
      %v4496 = vadd.f32 %v4248, %v4495
      %4497 = vdwg.mxu0
      %4498 = vmatpush.bf16.msra.mxu0 %v4378
      %4499 = vmatpush.bf16.msra.mxu0 %v4376
      %4500 = vmatpush.bf16.msra.mxu0 %v4374
      %4501 = vmatpush.bf16.msra.mxu0 %v4372
      %4502 = vmatpush.bf16.msra.mxu0 %v4370
      %4503 = vmatpush.bf16.msra.mxu0 %v4368
      %4504 = vmatpush.bf16.msra.mxu0 %v4366
      %4505 = vmatpush.bf16.msra.mxu0 %v4364
      %4506 = vmatmul.bf16.gmra.mxu0 %v4206
      %v4507 = vpop.f32.mrf.mxu0
      %v4508 = vadd.f32 %v4479, %v4507
      %v4509 = vpop.f32.mrf.mxu0
      %v4510 = vadd.f32 %v4481, %v4509
      %4511 = vmatmul.bf16.gmra.mxu0 %v4208
      %v4512 = vpop.f32.mrf.mxu0
      %v4513 = vadd.f32 %v4484, %v4512
      %v4514 = vpop.f32.mrf.mxu0
      %v4515 = vadd.f32 %v4486, %v4514
      %4516 = vmatmul.bf16.gmra.mxu0 %v4210
      %v4517 = vpop.f32.mrf.mxu0
      %v4518 = vadd.f32 %v4489, %v4517
      %v4519 = vpop.f32.mrf.mxu0
      %v4520 = vadd.f32 %v4491, %v4519
      %4521 = vmatmul.bf16.gmra.mxu0 %v4212
      %v4522 = vpop.f32.mrf.mxu0
      %v4523 = vadd.f32 %v4494, %v4522
      %v4524 = vpop.f32.mrf.mxu0
      %v4525 = vadd.f32 %v4496, %v4524
      %4526 = vdwg.mxu0
      %v4527 = vpack.c.bf16 %v4508, %v4450
      %v4528 = vpack.c.bf16 %v4510, %v4452
      %v4529 = vpack.c.bf16 %v4513, %v4455
      %v4530 = vpack.c.bf16 %v4515, %v4457
      %v4531 = vpack.c.bf16 %v4518, %v4460
      %v4532 = vpack.c.bf16 %v4520, %v4462
      %v4533 = vpack.c.bf16 %v4523, %v4465
      %v4534 = vpack.c.bf16 %v4525, %v4467
      %v4535 = vunpack.c.l.bf16 %v4527
      %v4536 = vunpack.c.h.bf16 %v4527
      %v4537 = vunpack.c.l.bf16 %v4528
      %v4538 = vunpack.c.h.bf16 %v4528
      %v4539 = vunpack.c.l.bf16 %v4529
      %v4540 = vunpack.c.h.bf16 %v4529
      %v4541 = vunpack.c.l.bf16 %v4530
      %v4542 = vunpack.c.h.bf16 %v4530
      %v4543 = vunpack.c.l.bf16 %v4531
      %v4544 = vunpack.c.h.bf16 %v4531
      %v4545 = vunpack.c.l.bf16 %v4532
      %v4546 = vunpack.c.h.bf16 %v4532
      %v4547 = vunpack.c.l.bf16 %v4533
      %v4548 = vunpack.c.h.bf16 %v4533
      %v4549 = vunpack.c.l.bf16 %v4534
      %v4550 = vunpack.c.h.bf16 %v4534
      %v4551 = vmul.f32 %v4535, 0.20019531
      %v4552 = vmul.f32 %v4536, 0.20019531
      %v4553 = vmul.f32 %v4537, 0.20019531
      %v4554 = vmul.f32 %v4538, 0.20019531
      %v4555 = vmul.f32 %v4539, 0.20019531
      %v4556 = vmul.f32 %v4540, 0.20019531
      %v4557 = vmul.f32 %v4541, 0.20019531
      %v4558 = vmul.f32 %v4542, 0.20019531
      %v4559 = vmul.f32 %v4543, 0.20019531
      %v4560 = vmul.f32 %v4544, 0.20019531
      %v4561 = vmul.f32 %v4545, 0.20019531
      %v4562 = vmul.f32 %v4546, 0.20019531
      %v4563 = vmul.f32 %v4547, 0.20019531
      %v4564 = vmul.f32 %v4548, 0.20019531
      %v4565 = vmul.f32 %v4549, 0.20019531
      %v4566 = vmul.f32 %v4550, 0.20019531
      %v4567 = vpack.c.bf16 %v4552, %v4551
      %v4568 = vpack.c.bf16 %v4554, %v4553
      %v4569 = vpack.c.bf16 %v4556, %v4555
      %v4570 = vpack.c.bf16 %v4558, %v4557
      %v4571 = vpack.c.bf16 %v4560, %v4559
      %v4572 = vpack.c.bf16 %v4562, %v4561
      %v4573 = vpack.c.bf16 %v4564, %v4563
      %v4574 = vpack.c.bf16 %v4566, %v4565
      %v4575 = vunpack.c.l.bf16 %v4567
      %v4576 = vunpack.c.h.bf16 %v4567
      %v4577 = vunpack.c.l.bf16 %v4568
      %v4578 = vunpack.c.h.bf16 %v4568
      %v4579 = vunpack.c.l.bf16 %v4569
      %v4580 = vunpack.c.h.bf16 %v4569
      %v4581 = vunpack.c.l.bf16 %v4570
      %v4582 = vunpack.c.h.bf16 %v4570
      %v4583 = vunpack.c.l.bf16 %v4571
      %v4584 = vunpack.c.h.bf16 %v4571
      %v4585 = vunpack.c.l.bf16 %v4572
      %v4586 = vunpack.c.h.bf16 %v4572
      %v4587 = vunpack.c.l.bf16 %v4573
      %v4588 = vunpack.c.h.bf16 %v4573
      %v4589 = vunpack.c.l.bf16 %v4574
      %v4590 = vunpack.c.h.bf16 %v4574
      %v4591 = vmax.f32 %v4535, %v4575
      %v4592 = vmax.f32 %v4536, %v4576
      %v4593 = vmax.f32 %v4537, %v4577
      %v4594 = vmax.f32 %v4538, %v4578
      %v4595 = vmax.f32 %v4539, %v4579
      %v4596 = vmax.f32 %v4540, %v4580
      %v4597 = vmax.f32 %v4541, %v4581
      %v4598 = vmax.f32 %v4542, %v4582
      %v4599 = vmax.f32 %v4543, %v4583
      %v4600 = vmax.f32 %v4544, %v4584
      %v4601 = vmax.f32 %v4545, %v4585
      %v4602 = vmax.f32 %v4546, %v4586
      %v4603 = vmax.f32 %v4547, %v4587
      %v4604 = vmax.f32 %v4548, %v4588
      %v4605 = vmax.f32 %v4549, %v4589
      %v4606 = vmax.f32 %v4550, %v4590
      %v4607 = vpack.c.bf16 %v4592, %v4591
      %v4608 = vpack.c.bf16 %v4594, %v4593
      %v4609 = vpack.c.bf16 %v4596, %v4595
      %v4610 = vpack.c.bf16 %v4598, %v4597
      %v4611 = vpack.c.bf16 %v4600, %v4599
      %v4612 = vpack.c.bf16 %v4602, %v4601
      %v4613 = vpack.c.bf16 %v4604, %v4603
      %v4614 = vpack.c.bf16 %v4606, %v4605
      %v4615 = vld [vmem:[%s20] sm:$0xff]
      %v4616 = vld [vmem:[%s20 + $0x8] sm:$0xff]
      %v4617 = vld [vmem:[%s20 + $0x10] sm:$0xff]
      %v4618 = vld [vmem:[%s20 + $0x18] sm:$0xff]
      %v4619 = vld [vmem:[%s20 + $0x20] sm:$0xff]
      %v4620 = vld [vmem:[%s20 + $0x28] sm:$0xff]
      %v4621 = vld [vmem:[%s20 + $0x30] sm:$0xff]
      %v4622 = vld [vmem:[%s20 + $0x38] sm:$0xff]
      %v4623 = vld [vmem:[%s20 + $0x40] sm:$0xff]
      %v4624 = vld [vmem:[%s20 + $0x48] sm:$0xff]
      %v4625 = vld [vmem:[%s20 + $0x50] sm:$0xff]
      %v4626 = vld [vmem:[%s20 + $0x58] sm:$0xff]
      %v4627 = vld [vmem:[%s20 + $0x60] sm:$0xff]
      %v4628 = vld [vmem:[%s20 + $0x68] sm:$0xff]
      %v4629 = vld [vmem:[%s20 + $0x70] sm:$0xff]
      %v4630 = vld [vmem:[%s20 + $0x78] sm:$0xff]
      %v4631 = vld [vmem:[%s20 + $0x80] sm:$0xff]
      %v4632 = vld [vmem:[%s20 + $0x88] sm:$0xff]
      %v4633 = vld [vmem:[%s20 + $0x90] sm:$0xff]
      %v4634 = vld [vmem:[%s20 + $0x98] sm:$0xff]
      %v4635 = vld [vmem:[%s20 + $0xa0] sm:$0xff]
      %v4636 = vld [vmem:[%s20 + $0xa8] sm:$0xff]
      %v4637 = vld [vmem:[%s20 + $0xb0] sm:$0xff]
      %v4638 = vld [vmem:[%s20 + $0xb8] sm:$0xff]
      %v4639 = vld [vmem:[%s20 + $0xc0] sm:$0xff]
      %v4640 = vld [vmem:[%s20 + $0xc8] sm:$0xff]
      %v4641 = vld [vmem:[%s20 + $0xd0] sm:$0xff]
      %v4642 = vld [vmem:[%s20 + $0xd8] sm:$0xff]
      %v4643 = vld [vmem:[%s20 + $0xe0] sm:$0xff]
      %v4644 = vld [vmem:[%s20 + $0xe8] sm:$0xff]
      %v4645 = vld [vmem:[%s20 + $0xf0] sm:$0xff]
      %v4646 = vld [vmem:[%s20 + $0xf8] sm:$0xff]
      %v4647 = vld [vmem:[%s21] sm:$0xff]
      %v4648 = vld [vmem:[%s21 + $0x8] sm:$0xff]
      %v4649 = vld [vmem:[%s21 + $0x10] sm:$0xff]
      %v4650 = vld [vmem:[%s21 + $0x18] sm:$0xff]
      %v4651 = vld [vmem:[%s21 + $0x20] sm:$0xff]
      %v4652 = vld [vmem:[%s21 + $0x28] sm:$0xff]
      %v4653 = vld [vmem:[%s21 + $0x30] sm:$0xff]
      %v4654 = vld [vmem:[%s21 + $0x38] sm:$0xff]
      %v4655 = vld [vmem:[%s21 + $0x40] sm:$0xff]
      %v4656 = vld [vmem:[%s21 + $0x48] sm:$0xff]
      %v4657 = vld [vmem:[%s21 + $0x50] sm:$0xff]
      %v4658 = vld [vmem:[%s21 + $0x58] sm:$0xff]
      %v4659 = vld [vmem:[%s21 + $0x60] sm:$0xff]
      %v4660 = vld [vmem:[%s21 + $0x68] sm:$0xff]
      %v4661 = vld [vmem:[%s21 + $0x70] sm:$0xff]
      %v4662 = vld [vmem:[%s21 + $0x78] sm:$0xff]
      %v4679 = vunpack.c.l.b16 %v4647
      %v4680 = vunpack.c.h.b16 %v4647
      %v4681 = vunpack.c.l.b16 %v4648
      %v4682 = vunpack.c.h.b16 %v4648
      %v4683 = vunpack.c.l.b16 %v4649
      %v4684 = vunpack.c.h.b16 %v4649
      %v4685 = vunpack.c.l.b16 %v4650
      %v4686 = vunpack.c.h.b16 %v4650
      %v4687 = vunpack.c.l.b16 %v4651
      %v4688 = vunpack.c.h.b16 %v4651
      %v4689 = vunpack.c.l.b16 %v4652
      %v4690 = vunpack.c.h.b16 %v4652
      %v4691 = vunpack.c.l.b16 %v4653
      %v4692 = vunpack.c.h.b16 %v4653
      %v4693 = vunpack.c.l.b16 %v4654
      %v4694 = vunpack.c.h.b16 %v4654
      %v4695 = vunpack.c.l.b16 %v4655
      %v4696 = vunpack.c.h.b16 %v4655
      %v4697 = vunpack.c.l.b16 %v4656
      %v4698 = vunpack.c.h.b16 %v4656
      %v4699 = vunpack.c.l.b16 %v4657
      %v4700 = vunpack.c.h.b16 %v4657
      %v4701 = vunpack.c.l.b16 %v4658
      %v4702 = vunpack.c.h.b16 %v4658
      %v4703 = vunpack.c.l.b16 %v4659
      %v4704 = vunpack.c.h.b16 %v4659
      %v4705 = vunpack.c.l.b16 %v4660
      %v4706 = vunpack.c.h.b16 %v4660
      %v4707 = vunpack.c.l.b16 %v4661
      %v4708 = vunpack.c.h.b16 %v4661
      %v4709 = vunpack.c.l.b16 %v4662
      %v4710 = vunpack.c.h.b16 %v4662
      %v4711 = vpack.c.b16 %v4681, %v4679
      %v4712 = vpack.c.b16 %v4682, %v4680
      %v4713 = vpack.c.b16 %v4685, %v4683
      %v4714 = vpack.c.b16 %v4686, %v4684
      %v4715 = vpack.c.b16 %v4689, %v4687
      %v4716 = vpack.c.b16 %v4690, %v4688
      %v4717 = vpack.c.b16 %v4693, %v4691
      %v4718 = vpack.c.b16 %v4694, %v4692
      %v4719 = vpack.c.b16 %v4697, %v4695
      %v4720 = vpack.c.b16 %v4698, %v4696
      %v4721 = vpack.c.b16 %v4701, %v4699
      %v4722 = vpack.c.b16 %v4702, %v4700
      %v4723 = vpack.c.b16 %v4705, %v4703
      %v4724 = vpack.c.b16 %v4706, %v4704
      %v4725 = vpack.c.b16 %v4709, %v4707
      %v4726 = vpack.c.b16 %v4710, %v4708
      %4743 = vmatpush.bf16.msra.mxu0 %v4725
      %4744 = vmatpush.bf16.msra.mxu0 %v4723
      %4745 = vmatpush.bf16.msra.mxu0 %v4721
      %4746 = vmatpush.bf16.msra.mxu0 %v4719
      %4747 = vmatpush.bf16.msra.mxu0 %v4717
      %4748 = vmatpush.bf16.msra.mxu0 %v4715
      %4749 = vmatpush.bf16.msra.mxu0 %v4713
      %4750 = vmatpush.bf16.msra.mxu0 %v4711
      %4751 = vmatmul.bf16.gmra.mxu0 %v3681
      %v4752 = vpop.f32.mrf.mxu0
      %v4753 = vadd.f32 0.0, %v4752
      %v4754 = vpop.f32.mrf.mxu0
      %v4755 = vadd.f32 0.0, %v4754
      %4756 = vmatmul.bf16.gmra.mxu0 %v3682
      %v4757 = vpop.f32.mrf.mxu0
      %v4758 = vadd.f32 0.0, %v4757
      %v4759 = vpop.f32.mrf.mxu0
      %v4760 = vadd.f32 0.0, %v4759
      %4761 = vmatmul.bf16.gmra.mxu0 %v3683
      %v4762 = vpop.f32.mrf.mxu0
      %v4763 = vadd.f32 0.0, %v4762
      %v4764 = vpop.f32.mrf.mxu0
      %v4765 = vadd.f32 0.0, %v4764
      %4766 = vmatmul.bf16.gmra.mxu0 %v3684
      %v4767 = vpop.f32.mrf.mxu0
      %v4768 = vadd.f32 0.0, %v4767
      %v4769 = vpop.f32.mrf.mxu0
      %v4770 = vadd.f32 0.0, %v4769
      %4771 = vdwg.mxu0
      %4772 = vmatpush.bf16.msra.mxu0 %v4726
      %4773 = vmatpush.bf16.msra.mxu0 %v4724
      %4774 = vmatpush.bf16.msra.mxu0 %v4722
      %4775 = vmatpush.bf16.msra.mxu0 %v4720
      %4776 = vmatpush.bf16.msra.mxu0 %v4718
      %4777 = vmatpush.bf16.msra.mxu0 %v4716
      %4778 = vmatpush.bf16.msra.mxu0 %v4714
      %4779 = vmatpush.bf16.msra.mxu0 %v4712
      %4780 = vmatmul.bf16.gmra.mxu0 %v3681
      %v4781 = vpop.f32.mrf.mxu0
      %v4782 = vadd.f32 0.0, %v4781
      %v4783 = vpop.f32.mrf.mxu0
      %v4784 = vadd.f32 0.0, %v4783
      %4785 = vmatmul.bf16.gmra.mxu0 %v3682
      %v4786 = vpop.f32.mrf.mxu0
      %v4787 = vadd.f32 0.0, %v4786
      %v4788 = vpop.f32.mrf.mxu0
      %v4789 = vadd.f32 0.0, %v4788
      %4790 = vmatmul.bf16.gmra.mxu0 %v3683
      %v4791 = vpop.f32.mrf.mxu0
      %v4792 = vadd.f32 0.0, %v4791
      %v4793 = vpop.f32.mrf.mxu0
      %v4794 = vadd.f32 0.0, %v4793
      %4795 = vmatmul.bf16.gmra.mxu0 %v3684
      %v4796 = vpop.f32.mrf.mxu0
      %v4797 = vadd.f32 0.0, %v4796
      %v4798 = vpop.f32.mrf.mxu0
      %v4799 = vadd.f32 0.0, %v4798
      %4800 = vdwg.mxu0
      %v4833 = vunpack.c.l.b16 %v4615
      %v4834 = vunpack.c.h.b16 %v4615
      %v4835 = vunpack.c.l.b16 %v4616
      %v4836 = vunpack.c.h.b16 %v4616
      %v4837 = vunpack.c.l.b16 %v4617
      %v4838 = vunpack.c.h.b16 %v4617
      %v4839 = vunpack.c.l.b16 %v4618
      %v4840 = vunpack.c.h.b16 %v4618
      %v4841 = vunpack.c.l.b16 %v4619
      %v4842 = vunpack.c.h.b16 %v4619
      %v4843 = vunpack.c.l.b16 %v4620
      %v4844 = vunpack.c.h.b16 %v4620
      %v4845 = vunpack.c.l.b16 %v4621
      %v4846 = vunpack.c.h.b16 %v4621
      %v4847 = vunpack.c.l.b16 %v4622
      %v4848 = vunpack.c.h.b16 %v4622
      %v4849 = vunpack.c.l.b16 %v4623
      %v4850 = vunpack.c.h.b16 %v4623
      %v4851 = vunpack.c.l.b16 %v4624
      %v4852 = vunpack.c.h.b16 %v4624
      %v4853 = vunpack.c.l.b16 %v4625
      %v4854 = vunpack.c.h.b16 %v4625
      %v4855 = vunpack.c.l.b16 %v4626
      %v4856 = vunpack.c.h.b16 %v4626
      %v4857 = vunpack.c.l.b16 %v4627
      %v4858 = vunpack.c.h.b16 %v4627
      %v4859 = vunpack.c.l.b16 %v4628
      %v4860 = vunpack.c.h.b16 %v4628
      %v4861 = vunpack.c.l.b16 %v4629
      %v4862 = vunpack.c.h.b16 %v4629
      %v4863 = vunpack.c.l.b16 %v4630
      %v4864 = vunpack.c.h.b16 %v4630
      %v4865 = vunpack.c.l.b16 %v4631
      %v4866 = vunpack.c.h.b16 %v4631
      %v4867 = vunpack.c.l.b16 %v4632
      %v4868 = vunpack.c.h.b16 %v4632
      %v4869 = vunpack.c.l.b16 %v4633
      %v4870 = vunpack.c.h.b16 %v4633
      %v4871 = vunpack.c.l.b16 %v4634
      %v4872 = vunpack.c.h.b16 %v4634
      %v4873 = vunpack.c.l.b16 %v4635
      %v4874 = vunpack.c.h.b16 %v4635
      %v4875 = vunpack.c.l.b16 %v4636
      %v4876 = vunpack.c.h.b16 %v4636
      %v4877 = vunpack.c.l.b16 %v4637
      %v4878 = vunpack.c.h.b16 %v4637
      %v4879 = vunpack.c.l.b16 %v4638
      %v4880 = vunpack.c.h.b16 %v4638
      %v4881 = vunpack.c.l.b16 %v4639
      %v4882 = vunpack.c.h.b16 %v4639
      %v4883 = vunpack.c.l.b16 %v4640
      %v4884 = vunpack.c.h.b16 %v4640
      %v4885 = vunpack.c.l.b16 %v4641
      %v4886 = vunpack.c.h.b16 %v4641
      %v4887 = vunpack.c.l.b16 %v4642
      %v4888 = vunpack.c.h.b16 %v4642
      %v4889 = vunpack.c.l.b16 %v4643
      %v4890 = vunpack.c.h.b16 %v4643
      %v4891 = vunpack.c.l.b16 %v4644
      %v4892 = vunpack.c.h.b16 %v4644
      %v4893 = vunpack.c.l.b16 %v4645
      %v4894 = vunpack.c.h.b16 %v4645
      %v4895 = vunpack.c.l.b16 %v4646
      %v4896 = vunpack.c.h.b16 %v4646
      %v4897 = vpack.c.b16 %v4835, %v4833
      %v4898 = vpack.c.b16 %v4836, %v4834
      %v4899 = vpack.c.b16 %v4839, %v4837
      %v4900 = vpack.c.b16 %v4840, %v4838
      %v4901 = vpack.c.b16 %v4843, %v4841
      %v4902 = vpack.c.b16 %v4844, %v4842
      %v4903 = vpack.c.b16 %v4847, %v4845
      %v4904 = vpack.c.b16 %v4848, %v4846
      %v4905 = vpack.c.b16 %v4851, %v4849
      %v4906 = vpack.c.b16 %v4852, %v4850
      %v4907 = vpack.c.b16 %v4855, %v4853
      %v4908 = vpack.c.b16 %v4856, %v4854
      %v4909 = vpack.c.b16 %v4859, %v4857
      %v4910 = vpack.c.b16 %v4860, %v4858
      %v4911 = vpack.c.b16 %v4863, %v4861
      %v4912 = vpack.c.b16 %v4864, %v4862
      %v4913 = vpack.c.b16 %v4867, %v4865
      %v4914 = vpack.c.b16 %v4868, %v4866
      %v4915 = vpack.c.b16 %v4871, %v4869
      %v4916 = vpack.c.b16 %v4872, %v4870
      %v4917 = vpack.c.b16 %v4875, %v4873
      %v4918 = vpack.c.b16 %v4876, %v4874
      %v4919 = vpack.c.b16 %v4879, %v4877
      %v4920 = vpack.c.b16 %v4880, %v4878
      %v4921 = vpack.c.b16 %v4883, %v4881
      %v4922 = vpack.c.b16 %v4884, %v4882
      %v4923 = vpack.c.b16 %v4887, %v4885
      %v4924 = vpack.c.b16 %v4888, %v4886
      %v4925 = vpack.c.b16 %v4891, %v4889
      %v4926 = vpack.c.b16 %v4892, %v4890
      %v4927 = vpack.c.b16 %v4895, %v4893
      %v4928 = vpack.c.b16 %v4896, %v4894
      %4961 = vmatpush.bf16.msra.mxu0 %v4911
      %4962 = vmatpush.bf16.msra.mxu0 %v4909
      %4963 = vmatpush.bf16.msra.mxu0 %v4907
      %4964 = vmatpush.bf16.msra.mxu0 %v4905
      %4965 = vmatpush.bf16.msra.mxu0 %v4903
      %4966 = vmatpush.bf16.msra.mxu0 %v4901
      %4967 = vmatpush.bf16.msra.mxu0 %v4899
      %4968 = vmatpush.bf16.msra.mxu0 %v4897
      %4969 = vmatmul.bf16.gmra.mxu0 %v3609
      %v4970 = vpop.f32.mrf.mxu0
      %v4971 = vadd.f32 %v4753, %v4970
      %v4972 = vpop.f32.mrf.mxu0
      %v4973 = vadd.f32 %v4755, %v4972
      %4974 = vmatmul.bf16.gmra.mxu0 %v3611
      %v4975 = vpop.f32.mrf.mxu0
      %v4976 = vadd.f32 %v4758, %v4975
      %v4977 = vpop.f32.mrf.mxu0
      %v4978 = vadd.f32 %v4760, %v4977
      %4979 = vmatmul.bf16.gmra.mxu0 %v3613
      %v4980 = vpop.f32.mrf.mxu0
      %v4981 = vadd.f32 %v4763, %v4980
      %v4982 = vpop.f32.mrf.mxu0
      %v4983 = vadd.f32 %v4765, %v4982
      %4984 = vmatmul.bf16.gmra.mxu0 %v3615
      %v4985 = vpop.f32.mrf.mxu0
      %v4986 = vadd.f32 %v4768, %v4985
      %v4987 = vpop.f32.mrf.mxu0
      %v4988 = vadd.f32 %v4770, %v4987
      %4989 = vdwg.mxu0
      %4990 = vmatpush.bf16.msra.mxu0 %v4927
      %4991 = vmatpush.bf16.msra.mxu0 %v4925
      %4992 = vmatpush.bf16.msra.mxu0 %v4923
      %4993 = vmatpush.bf16.msra.mxu0 %v4921
      %4994 = vmatpush.bf16.msra.mxu0 %v4919
      %4995 = vmatpush.bf16.msra.mxu0 %v4917
      %4996 = vmatpush.bf16.msra.mxu0 %v4915
      %4997 = vmatpush.bf16.msra.mxu0 %v4913
      %4998 = vmatmul.bf16.gmra.mxu0 %v3610
      %v4999 = vpop.f32.mrf.mxu0
      %v5000 = vadd.f32 %v4971, %v4999
      %v5001 = vpop.f32.mrf.mxu0
      %v5002 = vadd.f32 %v4973, %v5001
      %5003 = vmatmul.bf16.gmra.mxu0 %v3612
      %v5004 = vpop.f32.mrf.mxu0
      %v5005 = vadd.f32 %v4976, %v5004
      %v5006 = vpop.f32.mrf.mxu0
      %v5007 = vadd.f32 %v4978, %v5006
      %5008 = vmatmul.bf16.gmra.mxu0 %v3614
      %v5009 = vpop.f32.mrf.mxu0
      %v5010 = vadd.f32 %v4981, %v5009
      %v5011 = vpop.f32.mrf.mxu0
      %v5012 = vadd.f32 %v4983, %v5011
      %5013 = vmatmul.bf16.gmra.mxu0 %v3616
      %v5014 = vpop.f32.mrf.mxu0
      %v5015 = vadd.f32 %v4986, %v5014
      %v5016 = vpop.f32.mrf.mxu0
      %v5017 = vadd.f32 %v4988, %v5016
      %5018 = vdwg.mxu0
      %5019 = vmatpush.bf16.msra.mxu0 %v4912
      %5020 = vmatpush.bf16.msra.mxu0 %v4910
      %5021 = vmatpush.bf16.msra.mxu0 %v4908
      %5022 = vmatpush.bf16.msra.mxu0 %v4906
      %5023 = vmatpush.bf16.msra.mxu0 %v4904
      %5024 = vmatpush.bf16.msra.mxu0 %v4902
      %5025 = vmatpush.bf16.msra.mxu0 %v4900
      %5026 = vmatpush.bf16.msra.mxu0 %v4898
      %5027 = vmatmul.bf16.gmra.mxu0 %v3609
      %v5028 = vpop.f32.mrf.mxu0
      %v5029 = vadd.f32 %v4782, %v5028
      %v5030 = vpop.f32.mrf.mxu0
      %v5031 = vadd.f32 %v4784, %v5030
      %5032 = vmatmul.bf16.gmra.mxu0 %v3611
      %v5033 = vpop.f32.mrf.mxu0
      %v5034 = vadd.f32 %v4787, %v5033
      %v5035 = vpop.f32.mrf.mxu0
      %v5036 = vadd.f32 %v4789, %v5035
      %5037 = vmatmul.bf16.gmra.mxu0 %v3613
      %v5038 = vpop.f32.mrf.mxu0
      %v5039 = vadd.f32 %v4792, %v5038
      %v5040 = vpop.f32.mrf.mxu0
      %v5041 = vadd.f32 %v4794, %v5040
      %5042 = vmatmul.bf16.gmra.mxu0 %v3615
      %v5043 = vpop.f32.mrf.mxu0
      %v5044 = vadd.f32 %v4797, %v5043
      %v5045 = vpop.f32.mrf.mxu0
      %v5046 = vadd.f32 %v4799, %v5045
      %5047 = vdwg.mxu0
      %5048 = vmatpush.bf16.msra.mxu0 %v4928
      %5049 = vmatpush.bf16.msra.mxu0 %v4926
      %5050 = vmatpush.bf16.msra.mxu0 %v4924
      %5051 = vmatpush.bf16.msra.mxu0 %v4922
      %5052 = vmatpush.bf16.msra.mxu0 %v4920
      %5053 = vmatpush.bf16.msra.mxu0 %v4918
      %5054 = vmatpush.bf16.msra.mxu0 %v4916
      %5055 = vmatpush.bf16.msra.mxu0 %v4914
      %5056 = vmatmul.bf16.gmra.mxu0 %v3610
      %v5057 = vpop.f32.mrf.mxu0
      %v5058 = vadd.f32 %v5029, %v5057
      %v5059 = vpop.f32.mrf.mxu0
      %v5060 = vadd.f32 %v5031, %v5059
      %5061 = vmatmul.bf16.gmra.mxu0 %v3612
      %v5062 = vpop.f32.mrf.mxu0
      %v5063 = vadd.f32 %v5034, %v5062
      %v5064 = vpop.f32.mrf.mxu0
      %v5065 = vadd.f32 %v5036, %v5064
      %5066 = vmatmul.bf16.gmra.mxu0 %v3614
      %v5067 = vpop.f32.mrf.mxu0
      %v5068 = vadd.f32 %v5039, %v5067
      %v5069 = vpop.f32.mrf.mxu0
      %v5070 = vadd.f32 %v5041, %v5069
      %5071 = vmatmul.bf16.gmra.mxu0 %v3616
      %v5072 = vpop.f32.mrf.mxu0
      %v5073 = vadd.f32 %v5044, %v5072
      %v5074 = vpop.f32.mrf.mxu0
      %v5075 = vadd.f32 %v5046, %v5074
      %5076 = vdwg.mxu0
      %v5077 = vpack.c.bf16 %v5058, %v5000
      %v5078 = vpack.c.bf16 %v5060, %v5002
      %v5079 = vpack.c.bf16 %v5063, %v5005
      %v5080 = vpack.c.bf16 %v5065, %v5007
      %v5081 = vpack.c.bf16 %v5068, %v5010
      %v5082 = vpack.c.bf16 %v5070, %v5012
      %v5083 = vpack.c.bf16 %v5073, %v5015
      %v5084 = vpack.c.bf16 %v5075, %v5017
      %v5085 = vunpack.c.l.bf16 %v4607
      %v5086 = vunpack.c.h.bf16 %v4607
      %v5087 = vunpack.c.l.bf16 %v4608
      %v5088 = vunpack.c.h.bf16 %v4608
      %v5089 = vunpack.c.l.bf16 %v4609
      %v5090 = vunpack.c.h.bf16 %v4609
      %v5091 = vunpack.c.l.bf16 %v4610
      %v5092 = vunpack.c.h.bf16 %v4610
      %v5093 = vunpack.c.l.bf16 %v4611
      %v5094 = vunpack.c.h.bf16 %v4611
      %v5095 = vunpack.c.l.bf16 %v4612
      %v5096 = vunpack.c.h.bf16 %v4612
      %v5097 = vunpack.c.l.bf16 %v4613
      %v5098 = vunpack.c.h.bf16 %v4613
      %v5099 = vunpack.c.l.bf16 %v4614
      %v5100 = vunpack.c.h.bf16 %v4614
      %v5101 = vunpack.c.l.bf16 %v5077
      %v5102 = vunpack.c.h.bf16 %v5077
      %v5103 = vunpack.c.l.bf16 %v5078
      %v5104 = vunpack.c.h.bf16 %v5078
      %v5105 = vunpack.c.l.bf16 %v5079
      %v5106 = vunpack.c.h.bf16 %v5079
      %v5107 = vunpack.c.l.bf16 %v5080
      %v5108 = vunpack.c.h.bf16 %v5080
      %v5109 = vunpack.c.l.bf16 %v5081
      %v5110 = vunpack.c.h.bf16 %v5081
      %v5111 = vunpack.c.l.bf16 %v5082
      %v5112 = vunpack.c.h.bf16 %v5082
      %v5113 = vunpack.c.l.bf16 %v5083
      %v5114 = vunpack.c.h.bf16 %v5083
      %v5115 = vunpack.c.l.bf16 %v5084
      %v5116 = vunpack.c.h.bf16 %v5084
      %v5117 = vadd.f32 %v5085, %v5101
      %v5118 = vadd.f32 %v5086, %v5102
      %v5119 = vadd.f32 %v5087, %v5103
      %v5120 = vadd.f32 %v5088, %v5104
      %v5121 = vadd.f32 %v5089, %v5105
      %v5122 = vadd.f32 %v5090, %v5106
      %v5123 = vadd.f32 %v5091, %v5107
      %v5124 = vadd.f32 %v5092, %v5108
      %v5125 = vadd.f32 %v5093, %v5109
      %v5126 = vadd.f32 %v5094, %v5110
      %v5127 = vadd.f32 %v5095, %v5111
      %v5128 = vadd.f32 %v5096, %v5112
      %v5129 = vadd.f32 %v5097, %v5113
      %v5130 = vadd.f32 %v5098, %v5114
      %v5131 = vadd.f32 %v5099, %v5115
      %v5132 = vadd.f32 %v5100, %v5116
      %v5133 = vpack.c.bf16 %v5118, %v5117
      %v5134 = vpack.c.bf16 %v5120, %v5119
      %v5135 = vpack.c.bf16 %v5122, %v5121
      %v5136 = vpack.c.bf16 %v5124, %v5123
      %v5137 = vpack.c.bf16 %v5126, %v5125
      %v5138 = vpack.c.bf16 %v5128, %v5127
      %v5139 = vpack.c.bf16 %v5130, %v5129
      %v5140 = vpack.c.bf16 %v5132, %v5131
      %v5141 = vld [vmem:[%s1156] sm:$0xff]
      %v5142 = vld [vmem:[%s1156 + $0x8] sm:$0xff]
      %v5143 = vld [vmem:[%s1156 + $0x10] sm:$0xff]
      %v5144 = vld [vmem:[%s1156 + $0x18] sm:$0xff]
      %v5145 = vld [vmem:[%s1156 + $0x20] sm:$0xff]
      %v5146 = vld [vmem:[%s1156 + $0x28] sm:$0xff]
      %v5147 = vld [vmem:[%s1156 + $0x30] sm:$0xff]
      %v5148 = vld [vmem:[%s1156 + $0x38] sm:$0xff]
      %v5149 = vld [vmem:[%s1156 + $0x40] sm:$0xff]
      %v5150 = vld [vmem:[%s1156 + $0x48] sm:$0xff]
      %v5151 = vld [vmem:[%s1156 + $0x50] sm:$0xff]
      %v5152 = vld [vmem:[%s1156 + $0x58] sm:$0xff]
      %v5153 = vld [vmem:[%s1156 + $0x60] sm:$0xff]
      %v5154 = vld [vmem:[%s1156 + $0x68] sm:$0xff]
      %v5155 = vld [vmem:[%s1156 + $0x70] sm:$0xff]
      %v5156 = vld [vmem:[%s1156 + $0x78] sm:$0xff]
      %v5157 = vld [vmem:[%s1156 + $0x80] sm:$0xff]
      %v5158 = vld [vmem:[%s1156 + $0x88] sm:$0xff]
      %v5159 = vld [vmem:[%s1156 + $0x90] sm:$0xff]
      %v5160 = vld [vmem:[%s1156 + $0x98] sm:$0xff]
      %v5161 = vld [vmem:[%s1156 + $0xa0] sm:$0xff]
      %v5162 = vld [vmem:[%s1156 + $0xa8] sm:$0xff]
      %v5163 = vld [vmem:[%s1156 + $0xb0] sm:$0xff]
      %v5164 = vld [vmem:[%s1156 + $0xb8] sm:$0xff]
      %v5165 = vld [vmem:[%s1156 + $0xc0] sm:$0xff]
      %v5166 = vld [vmem:[%s1156 + $0xc8] sm:$0xff]
      %v5167 = vld [vmem:[%s1156 + $0xd0] sm:$0xff]
      %v5168 = vld [vmem:[%s1156 + $0xd8] sm:$0xff]
      %v5169 = vld [vmem:[%s1156 + $0xe0] sm:$0xff]
      %v5170 = vld [vmem:[%s1156 + $0xe8] sm:$0xff]
      %v5171 = vld [vmem:[%s1156 + $0xf0] sm:$0xff]
      %v5172 = vld [vmem:[%s1156 + $0xf8] sm:$0xff]
      %v5173 = vld [vmem:[%s23] sm:$0x3]
      %v5175 = vperm.slane %v5173, 0
      %v5176 = vperm.slane %v5173, 1
      %v5187 = vunpack.c.l.b16 %v5133
      %v5188 = vunpack.c.h.b16 %v5133
      %v5189 = vunpack.c.l.b16 %v5134
      %v5190 = vunpack.c.h.b16 %v5134
      %v5191 = vunpack.c.l.b16 %v5135
      %v5192 = vunpack.c.h.b16 %v5135
      %v5193 = vunpack.c.l.b16 %v5136
      %v5194 = vunpack.c.h.b16 %v5136
      %v5195 = vunpack.c.l.b16 %v5137
      %v5196 = vunpack.c.h.b16 %v5137
      %v5197 = vunpack.c.l.b16 %v5138
      %v5198 = vunpack.c.h.b16 %v5138
      %v5199 = vunpack.c.l.b16 %v5139
      %v5200 = vunpack.c.h.b16 %v5139
      %v5201 = vunpack.c.l.b16 %v5140
      %v5202 = vunpack.c.h.b16 %v5140
      %v5203 = vpack.c.b16 %v5189, %v5187
      %v5204 = vpack.c.b16 %v5190, %v5188
      %v5205 = vpack.c.b16 %v5193, %v5191
      %v5206 = vpack.c.b16 %v5194, %v5192
      %v5207 = vpack.c.b16 %v5197, %v5195
      %v5208 = vpack.c.b16 %v5198, %v5196
      %v5209 = vpack.c.b16 %v5201, %v5199
      %v5210 = vpack.c.b16 %v5202, %v5200
      %v5251 = vunpack.c.l.b16 %v5141
      %v5252 = vunpack.c.h.b16 %v5141
      %v5253 = vunpack.c.l.b16 %v5142
      %v5254 = vunpack.c.h.b16 %v5142
      %v5255 = vunpack.c.l.b16 %v5143
      %v5256 = vunpack.c.h.b16 %v5143
      %v5257 = vunpack.c.l.b16 %v5144
      %v5258 = vunpack.c.h.b16 %v5144
      %v5259 = vunpack.c.l.b16 %v5145
      %v5260 = vunpack.c.h.b16 %v5145
      %v5261 = vunpack.c.l.b16 %v5146
      %v5262 = vunpack.c.h.b16 %v5146
      %v5263 = vunpack.c.l.b16 %v5147
      %v5264 = vunpack.c.h.b16 %v5147
      %v5265 = vunpack.c.l.b16 %v5148
      %v5266 = vunpack.c.h.b16 %v5148
      %v5267 = vunpack.c.l.b16 %v5149
      %v5268 = vunpack.c.h.b16 %v5149
      %v5269 = vunpack.c.l.b16 %v5150
      %v5270 = vunpack.c.h.b16 %v5150
      %v5271 = vunpack.c.l.b16 %v5151
      %v5272 = vunpack.c.h.b16 %v5151
      %v5273 = vunpack.c.l.b16 %v5152
      %v5274 = vunpack.c.h.b16 %v5152
      %v5275 = vunpack.c.l.b16 %v5153
      %v5276 = vunpack.c.h.b16 %v5153
      %v5277 = vunpack.c.l.b16 %v5154
      %v5278 = vunpack.c.h.b16 %v5154
      %v5279 = vunpack.c.l.b16 %v5155
      %v5280 = vunpack.c.h.b16 %v5155
      %v5281 = vunpack.c.l.b16 %v5156
      %v5282 = vunpack.c.h.b16 %v5156
      %v5283 = vunpack.c.l.b16 %v5157
      %v5284 = vunpack.c.h.b16 %v5157
      %v5285 = vunpack.c.l.b16 %v5158
      %v5286 = vunpack.c.h.b16 %v5158
      %v5287 = vunpack.c.l.b16 %v5159
      %v5288 = vunpack.c.h.b16 %v5159
      %v5289 = vunpack.c.l.b16 %v5160
      %v5290 = vunpack.c.h.b16 %v5160
      %v5291 = vunpack.c.l.b16 %v5161
      %v5292 = vunpack.c.h.b16 %v5161
      %v5293 = vunpack.c.l.b16 %v5162
      %v5294 = vunpack.c.h.b16 %v5162
      %v5295 = vunpack.c.l.b16 %v5163
      %v5296 = vunpack.c.h.b16 %v5163
      %v5297 = vunpack.c.l.b16 %v5164
      %v5298 = vunpack.c.h.b16 %v5164
      %v5299 = vunpack.c.l.b16 %v5165
      %v5300 = vunpack.c.h.b16 %v5165
      %v5301 = vunpack.c.l.b16 %v5166
      %v5302 = vunpack.c.h.b16 %v5166
      %v5303 = vunpack.c.l.b16 %v5167
      %v5304 = vunpack.c.h.b16 %v5167
      %v5305 = vunpack.c.l.b16 %v5168
      %v5306 = vunpack.c.h.b16 %v5168
      %v5307 = vunpack.c.l.b16 %v5169
      %v5308 = vunpack.c.h.b16 %v5169
      %v5309 = vunpack.c.l.b16 %v5170
      %v5310 = vunpack.c.h.b16 %v5170
      %v5311 = vunpack.c.l.b16 %v5171
      %v5312 = vunpack.c.h.b16 %v5171
      %v5313 = vunpack.c.l.b16 %v5172
      %v5314 = vunpack.c.h.b16 %v5172
      %v5315 = vpack.c.b16 %v5253, %v5251
      %v5316 = vpack.c.b16 %v5254, %v5252
      %v5317 = vpack.c.b16 %v5257, %v5255
      %v5318 = vpack.c.b16 %v5258, %v5256
      %v5319 = vpack.c.b16 %v5261, %v5259
      %v5320 = vpack.c.b16 %v5262, %v5260
      %v5321 = vpack.c.b16 %v5265, %v5263
      %v5322 = vpack.c.b16 %v5266, %v5264
      %v5323 = vpack.c.b16 %v5269, %v5267
      %v5324 = vpack.c.b16 %v5270, %v5268
      %v5325 = vpack.c.b16 %v5273, %v5271
      %v5326 = vpack.c.b16 %v5274, %v5272
      %v5327 = vpack.c.b16 %v5277, %v5275
      %v5328 = vpack.c.b16 %v5278, %v5276
      %v5329 = vpack.c.b16 %v5281, %v5279
      %v5330 = vpack.c.b16 %v5282, %v5280
      %v5331 = vpack.c.b16 %v5285, %v5283
      %v5332 = vpack.c.b16 %v5286, %v5284
      %v5333 = vpack.c.b16 %v5289, %v5287
      %v5334 = vpack.c.b16 %v5290, %v5288
      %v5335 = vpack.c.b16 %v5293, %v5291
      %v5336 = vpack.c.b16 %v5294, %v5292
      %v5337 = vpack.c.b16 %v5297, %v5295
      %v5338 = vpack.c.b16 %v5298, %v5296
      %v5339 = vpack.c.b16 %v5301, %v5299
      %v5340 = vpack.c.b16 %v5302, %v5300
      %v5341 = vpack.c.b16 %v5305, %v5303
      %v5342 = vpack.c.b16 %v5306, %v5304
      %v5343 = vpack.c.b16 %v5309, %v5307
      %v5344 = vpack.c.b16 %v5310, %v5308
      %v5345 = vpack.c.b16 %v5313, %v5311
      %v5346 = vpack.c.b16 %v5314, %v5312
      %5379 = vmatpush.bf16.msra.mxu0 %v5329
      %5380 = vmatpush.bf16.msra.mxu0 %v5327
      %5381 = vmatpush.bf16.msra.mxu0 %v5325
      %5382 = vmatpush.bf16.msra.mxu0 %v5323
      %5383 = vmatpush.bf16.msra.mxu0 %v5321
      %5384 = vmatpush.bf16.msra.mxu0 %v5319
      %5385 = vmatpush.bf16.msra.mxu0 %v5317
      %5386 = vmatpush.bf16.msra.mxu0 %v5315
      %5387 = vmatmul.bf16.gmra.mxu0 %v5203
      %v5388 = vpop.f32.mrf.mxu0
      %v5389 = vadd.f32 %v5175, %v5388
      %v5390 = vpop.f32.mrf.mxu0
      %v5391 = vadd.f32 %v5175, %v5390
      %5392 = vmatmul.bf16.gmra.mxu0 %v5205
      %v5393 = vpop.f32.mrf.mxu0
      %v5394 = vadd.f32 %v5175, %v5393
      %v5395 = vpop.f32.mrf.mxu0
      %v5396 = vadd.f32 %v5175, %v5395
      %5397 = vmatmul.bf16.gmra.mxu0 %v5207
      %v5398 = vpop.f32.mrf.mxu0
      %v5399 = vadd.f32 %v5175, %v5398
      %v5400 = vpop.f32.mrf.mxu0
      %v5401 = vadd.f32 %v5175, %v5400
      %5402 = vmatmul.bf16.gmra.mxu0 %v5209
      %v5403 = vpop.f32.mrf.mxu0
      %v5404 = vadd.f32 %v5175, %v5403
      %v5405 = vpop.f32.mrf.mxu0
      %v5406 = vadd.f32 %v5175, %v5405
      %5407 = vdwg.mxu0
      %5408 = vmatpush.bf16.msra.mxu0 %v5345
      %5409 = vmatpush.bf16.msra.mxu0 %v5343
      %5410 = vmatpush.bf16.msra.mxu0 %v5341
      %5411 = vmatpush.bf16.msra.mxu0 %v5339
      %5412 = vmatpush.bf16.msra.mxu0 %v5337
      %5413 = vmatpush.bf16.msra.mxu0 %v5335
      %5414 = vmatpush.bf16.msra.mxu0 %v5333
      %5415 = vmatpush.bf16.msra.mxu0 %v5331
      %5416 = vmatmul.bf16.gmra.mxu0 %v5204
      %v5417 = vpop.f32.mrf.mxu0
      %v5418 = vadd.f32 %v5389, %v5417
      %v5419 = vpop.f32.mrf.mxu0
      %v5420 = vadd.f32 %v5391, %v5419
      %5421 = vmatmul.bf16.gmra.mxu0 %v5206
      %v5422 = vpop.f32.mrf.mxu0
      %v5423 = vadd.f32 %v5394, %v5422
      %v5424 = vpop.f32.mrf.mxu0
      %v5425 = vadd.f32 %v5396, %v5424
      %5426 = vmatmul.bf16.gmra.mxu0 %v5208
      %v5427 = vpop.f32.mrf.mxu0
      %v5428 = vadd.f32 %v5399, %v5427
      %v5429 = vpop.f32.mrf.mxu0
      %v5430 = vadd.f32 %v5401, %v5429
      %5431 = vmatmul.bf16.gmra.mxu0 %v5210
      %v5432 = vpop.f32.mrf.mxu0
      %v5433 = vadd.f32 %v5404, %v5432
      %v5434 = vpop.f32.mrf.mxu0
      %v5435 = vadd.f32 %v5406, %v5434
      %5436 = vdwg.mxu0
      %5437 = vmatpush.bf16.msra.mxu0 %v5330
      %5438 = vmatpush.bf16.msra.mxu0 %v5328
      %5439 = vmatpush.bf16.msra.mxu0 %v5326
      %5440 = vmatpush.bf16.msra.mxu0 %v5324
      %5441 = vmatpush.bf16.msra.mxu0 %v5322
      %5442 = vmatpush.bf16.msra.mxu0 %v5320
      %5443 = vmatpush.bf16.msra.mxu0 %v5318
      %5444 = vmatpush.bf16.msra.mxu0 %v5316
      %5445 = vmatmul.bf16.gmra.mxu0 %v5203
      %v5446 = vpop.f32.mrf.mxu0
      %v5447 = vadd.f32 %v5176, %v5446
      %v5448 = vpop.f32.mrf.mxu0
      %v5449 = vadd.f32 %v5176, %v5448
      %5450 = vmatmul.bf16.gmra.mxu0 %v5205
      %v5451 = vpop.f32.mrf.mxu0
      %v5452 = vadd.f32 %v5176, %v5451
      %v5453 = vpop.f32.mrf.mxu0
      %v5454 = vadd.f32 %v5176, %v5453
      %5455 = vmatmul.bf16.gmra.mxu0 %v5207
      %v5456 = vpop.f32.mrf.mxu0
      %v5457 = vadd.f32 %v5176, %v5456
      %v5458 = vpop.f32.mrf.mxu0
      %v5459 = vadd.f32 %v5176, %v5458
      %5460 = vmatmul.bf16.gmra.mxu0 %v5209
      %v5461 = vpop.f32.mrf.mxu0
      %v5462 = vadd.f32 %v5176, %v5461
      %v5463 = vpop.f32.mrf.mxu0
      %v5464 = vadd.f32 %v5176, %v5463
      %5465 = vdwg.mxu0
      %5466 = vmatpush.bf16.msra.mxu0 %v5346
      %5467 = vmatpush.bf16.msra.mxu0 %v5344
      %5468 = vmatpush.bf16.msra.mxu0 %v5342
      %5469 = vmatpush.bf16.msra.mxu0 %v5340
      %5470 = vmatpush.bf16.msra.mxu0 %v5338
      %5471 = vmatpush.bf16.msra.mxu0 %v5336
      %5472 = vmatpush.bf16.msra.mxu0 %v5334
      %5473 = vmatpush.bf16.msra.mxu0 %v5332
      %5474 = vmatmul.bf16.gmra.mxu0 %v5204
      %v5475 = vpop.f32.mrf.mxu0
      %v5476 = vadd.f32 %v5447, %v5475
      %v5477 = vpop.f32.mrf.mxu0
      %v5478 = vadd.f32 %v5449, %v5477
      %5479 = vmatmul.bf16.gmra.mxu0 %v5206
      %v5480 = vpop.f32.mrf.mxu0
      %v5481 = vadd.f32 %v5452, %v5480
      %v5482 = vpop.f32.mrf.mxu0
      %v5483 = vadd.f32 %v5454, %v5482
      %5484 = vmatmul.bf16.gmra.mxu0 %v5208
      %v5485 = vpop.f32.mrf.mxu0
      %v5486 = vadd.f32 %v5457, %v5485
      %v5487 = vpop.f32.mrf.mxu0
      %v5488 = vadd.f32 %v5459, %v5487
      %5489 = vmatmul.bf16.gmra.mxu0 %v5210
      %v5490 = vpop.f32.mrf.mxu0
      %v5491 = vadd.f32 %v5462, %v5490
      %v5492 = vpop.f32.mrf.mxu0
      %v5493 = vadd.f32 %v5464, %v5492
      %5494 = vdwg.mxu0
      %v5495 = vpack.c.bf16 %v5476, %v5418
      %v5496 = vpack.c.bf16 %v5478, %v5420
      %v5497 = vpack.c.bf16 %v5481, %v5423
      %v5498 = vpack.c.bf16 %v5483, %v5425
      %v5499 = vpack.c.bf16 %v5486, %v5428
      %v5500 = vpack.c.bf16 %v5488, %v5430
      %v5501 = vpack.c.bf16 %v5491, %v5433
      %v5502 = vpack.c.bf16 %v5493, %v5435
      %v5503 = vunpack.c.l.bf16 %v5495
      %v5504 = vunpack.c.h.bf16 %v5495
      %v5505 = vunpack.c.l.bf16 %v5496
      %v5506 = vunpack.c.h.bf16 %v5496
      %v5507 = vunpack.c.l.bf16 %v5497
      %v5508 = vunpack.c.h.bf16 %v5497
      %v5509 = vunpack.c.l.bf16 %v5498
      %v5510 = vunpack.c.h.bf16 %v5498
      %v5511 = vunpack.c.l.bf16 %v5499
      %v5512 = vunpack.c.h.bf16 %v5499
      %v5513 = vunpack.c.l.bf16 %v5500
      %v5514 = vunpack.c.h.bf16 %v5500
      %v5515 = vunpack.c.l.bf16 %v5501
      %v5516 = vunpack.c.h.bf16 %v5501
      %v5517 = vunpack.c.l.bf16 %v5502
      %v5518 = vunpack.c.h.bf16 %v5502
      %v5519 = vmul.f32 %v5503, 0.20019531
      %v5520 = vmul.f32 %v5504, 0.20019531
      %v5521 = vmul.f32 %v5505, 0.20019531
      %v5522 = vmul.f32 %v5506, 0.20019531
      %v5523 = vmul.f32 %v5507, 0.20019531
      %v5524 = vmul.f32 %v5508, 0.20019531
      %v5525 = vmul.f32 %v5509, 0.20019531
      %v5526 = vmul.f32 %v5510, 0.20019531
      %v5527 = vmul.f32 %v5511, 0.20019531
      %v5528 = vmul.f32 %v5512, 0.20019531
      %v5529 = vmul.f32 %v5513, 0.20019531
      %v5530 = vmul.f32 %v5514, 0.20019531
      %v5531 = vmul.f32 %v5515, 0.20019531
      %v5532 = vmul.f32 %v5516, 0.20019531
      %v5533 = vmul.f32 %v5517, 0.20019531
      %v5534 = vmul.f32 %v5518, 0.20019531
      %v5535 = vpack.c.bf16 %v5520, %v5519
      %v5536 = vpack.c.bf16 %v5522, %v5521
      %v5537 = vpack.c.bf16 %v5524, %v5523
      %v5538 = vpack.c.bf16 %v5526, %v5525
      %v5539 = vpack.c.bf16 %v5528, %v5527
      %v5540 = vpack.c.bf16 %v5530, %v5529
      %v5541 = vpack.c.bf16 %v5532, %v5531
      %v5542 = vpack.c.bf16 %v5534, %v5533
      %v5543 = vunpack.c.l.bf16 %v5535
      %v5544 = vunpack.c.h.bf16 %v5535
      %v5545 = vunpack.c.l.bf16 %v5536
      %v5546 = vunpack.c.h.bf16 %v5536
      %v5547 = vunpack.c.l.bf16 %v5537
      %v5548 = vunpack.c.h.bf16 %v5537
      %v5549 = vunpack.c.l.bf16 %v5538
      %v5550 = vunpack.c.h.bf16 %v5538
      %v5551 = vunpack.c.l.bf16 %v5539
      %v5552 = vunpack.c.h.bf16 %v5539
      %v5553 = vunpack.c.l.bf16 %v5540
      %v5554 = vunpack.c.h.bf16 %v5540
      %v5555 = vunpack.c.l.bf16 %v5541
      %v5556 = vunpack.c.h.bf16 %v5541
      %v5557 = vunpack.c.l.bf16 %v5542
      %v5558 = vunpack.c.h.bf16 %v5542
      %v5559 = vmax.f32 %v5503, %v5543
      %v5560 = vmax.f32 %v5504, %v5544
      %v5561 = vmax.f32 %v5505, %v5545
      %v5562 = vmax.f32 %v5506, %v5546
      %v5563 = vmax.f32 %v5507, %v5547
      %v5564 = vmax.f32 %v5508, %v5548
      %v5565 = vmax.f32 %v5509, %v5549
      %v5566 = vmax.f32 %v5510, %v5550
      %v5567 = vmax.f32 %v5511, %v5551
      %v5568 = vmax.f32 %v5512, %v5552
      %v5569 = vmax.f32 %v5513, %v5553
      %v5570 = vmax.f32 %v5514, %v5554
      %v5571 = vmax.f32 %v5515, %v5555
      %v5572 = vmax.f32 %v5516, %v5556
      %v5573 = vmax.f32 %v5517, %v5557
      %v5574 = vmax.f32 %v5518, %v5558
      %v5575 = vpack.c.bf16 %v5561, %v5559
      %v5576 = vpack.c.bf16 %v5562, %v5560
      %v5577 = vpack.c.bf16 %v5565, %v5563
      %v5578 = vpack.c.bf16 %v5566, %v5564
      %v5579 = vpack.c.bf16 %v5569, %v5567
      %v5580 = vpack.c.bf16 %v5570, %v5568
      %v5581 = vpack.c.bf16 %v5573, %v5571
      %v5582 = vpack.c.bf16 %v5574, %v5572
      %v5583 = vld [vmem:[%s1161] sm:$0xff]
      %v5584 = vld [vmem:[%s1161 + $0x8] sm:$0xff]
      %v5585 = vld [vmem:[%s1161 + $0x10] sm:$0xff]
      %v5586 = vld [vmem:[%s1161 + $0x18] sm:$0xff]
      %v5587 = vld [vmem:[%s1161 + $0x20] sm:$0xff]
      %v5588 = vld [vmem:[%s1161 + $0x28] sm:$0xff]
      %v5589 = vld [vmem:[%s1161 + $0x30] sm:$0xff]
      %v5590 = vld [vmem:[%s1161 + $0x38] sm:$0xff]
      %v5591 = vld [vmem:[%s1161 + $0x40] sm:$0xff]
      %v5592 = vld [vmem:[%s1161 + $0x48] sm:$0xff]
      %v5593 = vld [vmem:[%s1161 + $0x50] sm:$0xff]
      %v5594 = vld [vmem:[%s1161 + $0x58] sm:$0xff]
      %v5595 = vld [vmem:[%s1161 + $0x60] sm:$0xff]
      %v5596 = vld [vmem:[%s1161 + $0x68] sm:$0xff]
      %v5597 = vld [vmem:[%s1161 + $0x70] sm:$0xff]
      %v5598 = vld [vmem:[%s1161 + $0x78] sm:$0xff]
      %v5599 = vld [vmem:[%s1161 + $0x80] sm:$0xff]
      %v5600 = vld [vmem:[%s1161 + $0x88] sm:$0xff]
      %v5601 = vld [vmem:[%s1161 + $0x90] sm:$0xff]
      %v5602 = vld [vmem:[%s1161 + $0x98] sm:$0xff]
      %v5603 = vld [vmem:[%s1161 + $0xa0] sm:$0xff]
      %v5604 = vld [vmem:[%s1161 + $0xa8] sm:$0xff]
      %v5605 = vld [vmem:[%s1161 + $0xb0] sm:$0xff]
      %v5606 = vld [vmem:[%s1161 + $0xb8] sm:$0xff]
      %v5607 = vld [vmem:[%s1161 + $0xc0] sm:$0xff]
      %v5608 = vld [vmem:[%s1161 + $0xc8] sm:$0xff]
      %v5609 = vld [vmem:[%s1161 + $0xd0] sm:$0xff]
      %v5610 = vld [vmem:[%s1161 + $0xd8] sm:$0xff]
      %v5611 = vld [vmem:[%s1161 + $0xe0] sm:$0xff]
      %v5612 = vld [vmem:[%s1161 + $0xe8] sm:$0xff]
      %v5613 = vld [vmem:[%s1161 + $0xf0] sm:$0xff]
      %v5614 = vld [vmem:[%s1161 + $0xf8] sm:$0xff]
      %v5615 = vld [vmem:[%s25] sm:$0x3]
      %v5617 = vperm.slane %v5615, 0
      %v5618 = vperm.slane %v5615, 1
      %v5653 = vunpack.c.l.b16 %v5583
      %v5654 = vunpack.c.h.b16 %v5583
      %v5655 = vunpack.c.l.b16 %v5584
      %v5656 = vunpack.c.h.b16 %v5584
      %v5657 = vunpack.c.l.b16 %v5585
      %v5658 = vunpack.c.h.b16 %v5585
      %v5659 = vunpack.c.l.b16 %v5586
      %v5660 = vunpack.c.h.b16 %v5586
      %v5661 = vunpack.c.l.b16 %v5587
      %v5662 = vunpack.c.h.b16 %v5587
      %v5663 = vunpack.c.l.b16 %v5588
      %v5664 = vunpack.c.h.b16 %v5588
      %v5665 = vunpack.c.l.b16 %v5589
      %v5666 = vunpack.c.h.b16 %v5589
      %v5667 = vunpack.c.l.b16 %v5590
      %v5668 = vunpack.c.h.b16 %v5590
      %v5669 = vunpack.c.l.b16 %v5591
      %v5670 = vunpack.c.h.b16 %v5591
      %v5671 = vunpack.c.l.b16 %v5592
      %v5672 = vunpack.c.h.b16 %v5592
      %v5673 = vunpack.c.l.b16 %v5593
      %v5674 = vunpack.c.h.b16 %v5593
      %v5675 = vunpack.c.l.b16 %v5594
      %v5676 = vunpack.c.h.b16 %v5594
      %v5677 = vunpack.c.l.b16 %v5595
      %v5678 = vunpack.c.h.b16 %v5595
      %v5679 = vunpack.c.l.b16 %v5596
      %v5680 = vunpack.c.h.b16 %v5596
      %v5681 = vunpack.c.l.b16 %v5597
      %v5682 = vunpack.c.h.b16 %v5597
      %v5683 = vunpack.c.l.b16 %v5598
      %v5684 = vunpack.c.h.b16 %v5598
      %v5685 = vunpack.c.l.b16 %v5599
      %v5686 = vunpack.c.h.b16 %v5599
      %v5687 = vunpack.c.l.b16 %v5600
      %v5688 = vunpack.c.h.b16 %v5600
      %v5689 = vunpack.c.l.b16 %v5601
      %v5690 = vunpack.c.h.b16 %v5601
      %v5691 = vunpack.c.l.b16 %v5602
      %v5692 = vunpack.c.h.b16 %v5602
      %v5693 = vunpack.c.l.b16 %v5603
      %v5694 = vunpack.c.h.b16 %v5603
      %v5695 = vunpack.c.l.b16 %v5604
      %v5696 = vunpack.c.h.b16 %v5604
      %v5697 = vunpack.c.l.b16 %v5605
      %v5698 = vunpack.c.h.b16 %v5605
      %v5699 = vunpack.c.l.b16 %v5606
      %v5700 = vunpack.c.h.b16 %v5606
      %v5701 = vunpack.c.l.b16 %v5607
      %v5702 = vunpack.c.h.b16 %v5607
      %v5703 = vunpack.c.l.b16 %v5608
      %v5704 = vunpack.c.h.b16 %v5608
      %v5705 = vunpack.c.l.b16 %v5609
      %v5706 = vunpack.c.h.b16 %v5609
      %v5707 = vunpack.c.l.b16 %v5610
      %v5708 = vunpack.c.h.b16 %v5610
      %v5709 = vunpack.c.l.b16 %v5611
      %v5710 = vunpack.c.h.b16 %v5611
      %v5711 = vunpack.c.l.b16 %v5612
      %v5712 = vunpack.c.h.b16 %v5612
      %v5713 = vunpack.c.l.b16 %v5613
      %v5714 = vunpack.c.h.b16 %v5613
      %v5715 = vunpack.c.l.b16 %v5614
      %v5716 = vunpack.c.h.b16 %v5614
      %v5717 = vpack.c.b16 %v5655, %v5653
      %v5718 = vpack.c.b16 %v5656, %v5654
      %v5719 = vpack.c.b16 %v5659, %v5657
      %v5720 = vpack.c.b16 %v5660, %v5658
      %v5721 = vpack.c.b16 %v5663, %v5661
      %v5722 = vpack.c.b16 %v5664, %v5662
      %v5723 = vpack.c.b16 %v5667, %v5665
      %v5724 = vpack.c.b16 %v5668, %v5666
      %v5725 = vpack.c.b16 %v5671, %v5669
      %v5726 = vpack.c.b16 %v5672, %v5670
      %v5727 = vpack.c.b16 %v5675, %v5673
      %v5728 = vpack.c.b16 %v5676, %v5674
      %v5729 = vpack.c.b16 %v5679, %v5677
      %v5730 = vpack.c.b16 %v5680, %v5678
      %v5731 = vpack.c.b16 %v5683, %v5681
      %v5732 = vpack.c.b16 %v5684, %v5682
      %v5733 = vpack.c.b16 %v5687, %v5685
      %v5734 = vpack.c.b16 %v5688, %v5686
      %v5735 = vpack.c.b16 %v5691, %v5689
      %v5736 = vpack.c.b16 %v5692, %v5690
      %v5737 = vpack.c.b16 %v5695, %v5693
      %v5738 = vpack.c.b16 %v5696, %v5694
      %v5739 = vpack.c.b16 %v5699, %v5697
      %v5740 = vpack.c.b16 %v5700, %v5698
      %v5741 = vpack.c.b16 %v5703, %v5701
      %v5742 = vpack.c.b16 %v5704, %v5702
      %v5743 = vpack.c.b16 %v5707, %v5705
      %v5744 = vpack.c.b16 %v5708, %v5706
      %v5745 = vpack.c.b16 %v5711, %v5709
      %v5746 = vpack.c.b16 %v5712, %v5710
      %v5747 = vpack.c.b16 %v5715, %v5713
      %v5748 = vpack.c.b16 %v5716, %v5714
      %5781 = vmatpush.bf16.msra.mxu0 %v5731
      %5782 = vmatpush.bf16.msra.mxu0 %v5729
      %5783 = vmatpush.bf16.msra.mxu0 %v5727
      %5784 = vmatpush.bf16.msra.mxu0 %v5725
      %5785 = vmatpush.bf16.msra.mxu0 %v5723
      %5786 = vmatpush.bf16.msra.mxu0 %v5721
      %5787 = vmatpush.bf16.msra.mxu0 %v5719
      %5788 = vmatpush.bf16.msra.mxu0 %v5717
      %5789 = vmatmul.bf16.gmra.mxu0 %v5575
      %v5790 = vpop.f32.mrf.mxu0
      %v5791 = vadd.f32 %v5617, %v5790
      %v5792 = vpop.f32.mrf.mxu0
      %v5793 = vadd.f32 %v5617, %v5792
      %5794 = vmatmul.bf16.gmra.mxu0 %v5577
      %v5795 = vpop.f32.mrf.mxu0
      %v5796 = vadd.f32 %v5617, %v5795
      %v5797 = vpop.f32.mrf.mxu0
      %v5798 = vadd.f32 %v5617, %v5797
      %5799 = vmatmul.bf16.gmra.mxu0 %v5579
      %v5800 = vpop.f32.mrf.mxu0
      %v5801 = vadd.f32 %v5617, %v5800
      %v5802 = vpop.f32.mrf.mxu0
      %v5803 = vadd.f32 %v5617, %v5802
      %5804 = vmatmul.bf16.gmra.mxu0 %v5581
      %v5805 = vpop.f32.mrf.mxu0
      %v5806 = vadd.f32 %v5617, %v5805
      %v5807 = vpop.f32.mrf.mxu0
      %v5808 = vadd.f32 %v5617, %v5807
      %5809 = vdwg.mxu0
      %5810 = vmatpush.bf16.msra.mxu0 %v5747
      %5811 = vmatpush.bf16.msra.mxu0 %v5745
      %5812 = vmatpush.bf16.msra.mxu0 %v5743
      %5813 = vmatpush.bf16.msra.mxu0 %v5741
      %5814 = vmatpush.bf16.msra.mxu0 %v5739
      %5815 = vmatpush.bf16.msra.mxu0 %v5737
      %5816 = vmatpush.bf16.msra.mxu0 %v5735
      %5817 = vmatpush.bf16.msra.mxu0 %v5733
      %5818 = vmatmul.bf16.gmra.mxu0 %v5576
      %v5819 = vpop.f32.mrf.mxu0
      %v5820 = vadd.f32 %v5791, %v5819
      %v5821 = vpop.f32.mrf.mxu0
      %v5822 = vadd.f32 %v5793, %v5821
      %5823 = vmatmul.bf16.gmra.mxu0 %v5578
      %v5824 = vpop.f32.mrf.mxu0
      %v5825 = vadd.f32 %v5796, %v5824
      %v5826 = vpop.f32.mrf.mxu0
      %v5827 = vadd.f32 %v5798, %v5826
      %5828 = vmatmul.bf16.gmra.mxu0 %v5580
      %v5829 = vpop.f32.mrf.mxu0
      %v5830 = vadd.f32 %v5801, %v5829
      %v5831 = vpop.f32.mrf.mxu0
      %v5832 = vadd.f32 %v5803, %v5831
      %5833 = vmatmul.bf16.gmra.mxu0 %v5582
      %v5834 = vpop.f32.mrf.mxu0
      %v5835 = vadd.f32 %v5806, %v5834
      %v5836 = vpop.f32.mrf.mxu0
      %v5837 = vadd.f32 %v5808, %v5836
      %5838 = vdwg.mxu0
      %5839 = vmatpush.bf16.msra.mxu0 %v5732
      %5840 = vmatpush.bf16.msra.mxu0 %v5730
      %5841 = vmatpush.bf16.msra.mxu0 %v5728
      %5842 = vmatpush.bf16.msra.mxu0 %v5726
      %5843 = vmatpush.bf16.msra.mxu0 %v5724
      %5844 = vmatpush.bf16.msra.mxu0 %v5722
      %5845 = vmatpush.bf16.msra.mxu0 %v5720
      %5846 = vmatpush.bf16.msra.mxu0 %v5718
      %5847 = vmatmul.bf16.gmra.mxu0 %v5575
      %v5848 = vpop.f32.mrf.mxu0
      %v5849 = vadd.f32 %v5618, %v5848
      %v5850 = vpop.f32.mrf.mxu0
      %v5851 = vadd.f32 %v5618, %v5850
      %5852 = vmatmul.bf16.gmra.mxu0 %v5577
      %v5853 = vpop.f32.mrf.mxu0
      %v5854 = vadd.f32 %v5618, %v5853
      %v5855 = vpop.f32.mrf.mxu0
      %v5856 = vadd.f32 %v5618, %v5855
      %5857 = vmatmul.bf16.gmra.mxu0 %v5579
      %v5858 = vpop.f32.mrf.mxu0
      %v5859 = vadd.f32 %v5618, %v5858
      %v5860 = vpop.f32.mrf.mxu0
      %v5861 = vadd.f32 %v5618, %v5860
      %5862 = vmatmul.bf16.gmra.mxu0 %v5581
      %v5863 = vpop.f32.mrf.mxu0
      %v5864 = vadd.f32 %v5618, %v5863
      %v5865 = vpop.f32.mrf.mxu0
      %v5866 = vadd.f32 %v5618, %v5865
      %5867 = vdwg.mxu0
      %5868 = vmatpush.bf16.msra.mxu0 %v5748
      %5869 = vmatpush.bf16.msra.mxu0 %v5746
      %5870 = vmatpush.bf16.msra.mxu0 %v5744
      %5871 = vmatpush.bf16.msra.mxu0 %v5742
      %5872 = vmatpush.bf16.msra.mxu0 %v5740
      %5873 = vmatpush.bf16.msra.mxu0 %v5738
      %5874 = vmatpush.bf16.msra.mxu0 %v5736
      %5875 = vmatpush.bf16.msra.mxu0 %v5734
      %5876 = vmatmul.bf16.gmra.mxu0 %v5576
      %v5877 = vpop.f32.mrf.mxu0
      %v5878 = vadd.f32 %v5849, %v5877
      %v5879 = vpop.f32.mrf.mxu0
      %v5880 = vadd.f32 %v5851, %v5879
      %5881 = vmatmul.bf16.gmra.mxu0 %v5578
      %v5882 = vpop.f32.mrf.mxu0
      %v5883 = vadd.f32 %v5854, %v5882
      %v5884 = vpop.f32.mrf.mxu0
      %v5885 = vadd.f32 %v5856, %v5884
      %5886 = vmatmul.bf16.gmra.mxu0 %v5580
      %v5887 = vpop.f32.mrf.mxu0
      %v5888 = vadd.f32 %v5859, %v5887
      %v5889 = vpop.f32.mrf.mxu0
      %v5890 = vadd.f32 %v5861, %v5889
      %5891 = vmatmul.bf16.gmra.mxu0 %v5582
      %v5892 = vpop.f32.mrf.mxu0
      %v5893 = vadd.f32 %v5864, %v5892
      %v5894 = vpop.f32.mrf.mxu0
      %v5895 = vadd.f32 %v5866, %v5894
      %5896 = vdwg.mxu0
      %v5897 = vpack.c.bf16 %v5878, %v5820
      %v5898 = vpack.c.bf16 %v5880, %v5822
      %v5899 = vpack.c.bf16 %v5883, %v5825
      %v5900 = vpack.c.bf16 %v5885, %v5827
      %v5901 = vpack.c.bf16 %v5888, %v5830
      %v5902 = vpack.c.bf16 %v5890, %v5832
      %v5903 = vpack.c.bf16 %v5893, %v5835
      %v5904 = vpack.c.bf16 %v5895, %v5837
      %v5905 = vunpack.c.l.bf16 %v5897
      %v5906 = vunpack.c.h.bf16 %v5897
      %v5907 = vunpack.c.l.bf16 %v5898
      %v5908 = vunpack.c.h.bf16 %v5898
      %v5909 = vunpack.c.l.bf16 %v5899
      %v5910 = vunpack.c.h.bf16 %v5899
      %v5911 = vunpack.c.l.bf16 %v5900
      %v5912 = vunpack.c.h.bf16 %v5900
      %v5913 = vunpack.c.l.bf16 %v5901
      %v5914 = vunpack.c.h.bf16 %v5901
      %v5915 = vunpack.c.l.bf16 %v5902
      %v5916 = vunpack.c.h.bf16 %v5902
      %v5917 = vunpack.c.l.bf16 %v5903
      %v5918 = vunpack.c.h.bf16 %v5903
      %v5919 = vunpack.c.l.bf16 %v5904
      %v5920 = vunpack.c.h.bf16 %v5904
      %v5921 = vmul.f32 %v5905, 0.20019531
      %v5922 = vmul.f32 %v5906, 0.20019531
      %v5923 = vmul.f32 %v5907, 0.20019531
      %v5924 = vmul.f32 %v5908, 0.20019531
      %v5925 = vmul.f32 %v5909, 0.20019531
      %v5926 = vmul.f32 %v5910, 0.20019531
      %v5927 = vmul.f32 %v5911, 0.20019531
      %v5928 = vmul.f32 %v5912, 0.20019531
      %v5929 = vmul.f32 %v5913, 0.20019531
      %v5930 = vmul.f32 %v5914, 0.20019531
      %v5931 = vmul.f32 %v5915, 0.20019531
      %v5932 = vmul.f32 %v5916, 0.20019531
      %v5933 = vmul.f32 %v5917, 0.20019531
      %v5934 = vmul.f32 %v5918, 0.20019531
      %v5935 = vmul.f32 %v5919, 0.20019531
      %v5936 = vmul.f32 %v5920, 0.20019531
      %v5937 = vpack.c.bf16 %v5922, %v5921
      %v5938 = vpack.c.bf16 %v5924, %v5923
      %v5939 = vpack.c.bf16 %v5926, %v5925
      %v5940 = vpack.c.bf16 %v5928, %v5927
      %v5941 = vpack.c.bf16 %v5930, %v5929
      %v5942 = vpack.c.bf16 %v5932, %v5931
      %v5943 = vpack.c.bf16 %v5934, %v5933
      %v5944 = vpack.c.bf16 %v5936, %v5935
      %v5945 = vunpack.c.l.bf16 %v5937
      %v5946 = vunpack.c.h.bf16 %v5937
      %v5947 = vunpack.c.l.bf16 %v5938
      %v5948 = vunpack.c.h.bf16 %v5938
      %v5949 = vunpack.c.l.bf16 %v5939
      %v5950 = vunpack.c.h.bf16 %v5939
      %v5951 = vunpack.c.l.bf16 %v5940
      %v5952 = vunpack.c.h.bf16 %v5940
      %v5953 = vunpack.c.l.bf16 %v5941
      %v5954 = vunpack.c.h.bf16 %v5941
      %v5955 = vunpack.c.l.bf16 %v5942
      %v5956 = vunpack.c.h.bf16 %v5942
      %v5957 = vunpack.c.l.bf16 %v5943
      %v5958 = vunpack.c.h.bf16 %v5943
      %v5959 = vunpack.c.l.bf16 %v5944
      %v5960 = vunpack.c.h.bf16 %v5944
      %v5961 = vmax.f32 %v5905, %v5945
      %v5962 = vmax.f32 %v5906, %v5946
      %v5963 = vmax.f32 %v5907, %v5947
      %v5964 = vmax.f32 %v5908, %v5948
      %v5965 = vmax.f32 %v5909, %v5949
      %v5966 = vmax.f32 %v5910, %v5950
      %v5967 = vmax.f32 %v5911, %v5951
      %v5968 = vmax.f32 %v5912, %v5952
      %v5969 = vmax.f32 %v5913, %v5953
      %v5970 = vmax.f32 %v5914, %v5954
      %v5971 = vmax.f32 %v5915, %v5955
      %v5972 = vmax.f32 %v5916, %v5956
      %v5973 = vmax.f32 %v5917, %v5957
      %v5974 = vmax.f32 %v5918, %v5958
      %v5975 = vmax.f32 %v5919, %v5959
      %v5976 = vmax.f32 %v5920, %v5960
      %v5977 = vpack.c.bf16 %v5962, %v5961
      %v5978 = vpack.c.bf16 %v5964, %v5963
      %v5979 = vpack.c.bf16 %v5966, %v5965
      %v5980 = vpack.c.bf16 %v5968, %v5967
      %v5981 = vpack.c.bf16 %v5970, %v5969
      %v5982 = vpack.c.bf16 %v5972, %v5971
      %v5983 = vpack.c.bf16 %v5974, %v5973
      %v5984 = vpack.c.bf16 %v5976, %v5975
      %v5985 = vunpack.c.l.bf16 %v5133
      %v5986 = vunpack.c.h.bf16 %v5133
      %v5987 = vunpack.c.l.bf16 %v5134
      %v5988 = vunpack.c.h.bf16 %v5134
      %v5989 = vunpack.c.l.bf16 %v5135
      %v5990 = vunpack.c.h.bf16 %v5135
      %v5991 = vunpack.c.l.bf16 %v5136
      %v5992 = vunpack.c.h.bf16 %v5136
      %v5993 = vunpack.c.l.bf16 %v5137
      %v5994 = vunpack.c.h.bf16 %v5137
      %v5995 = vunpack.c.l.bf16 %v5138
      %v5996 = vunpack.c.h.bf16 %v5138
      %v5997 = vunpack.c.l.bf16 %v5139
      %v5998 = vunpack.c.h.bf16 %v5139
      %v5999 = vunpack.c.l.bf16 %v5140
      %v6000 = vunpack.c.h.bf16 %v5140
      %v6001 = vmul.f32 %v5985, 0.70703125
      %v6002 = vmul.f32 %v5986, 0.70703125
      %v6003 = vmul.f32 %v5987, 0.70703125
      %v6004 = vmul.f32 %v5988, 0.70703125
      %v6005 = vmul.f32 %v5989, 0.70703125
      %v6006 = vmul.f32 %v5990, 0.70703125
      %v6007 = vmul.f32 %v5991, 0.70703125
      %v6008 = vmul.f32 %v5992, 0.70703125
      %v6009 = vmul.f32 %v5993, 0.70703125
      %v6010 = vmul.f32 %v5994, 0.70703125
      %v6011 = vmul.f32 %v5995, 0.70703125
      %v6012 = vmul.f32 %v5996, 0.70703125
      %v6013 = vmul.f32 %v5997, 0.70703125
      %v6014 = vmul.f32 %v5998, 0.70703125
      %v6015 = vmul.f32 %v5999, 0.70703125
      %v6016 = vmul.f32 %v6000, 0.70703125
      %v6017 = vpack.c.bf16 %v6002, %v6001
      %v6018 = vpack.c.bf16 %v6004, %v6003
      %v6019 = vpack.c.bf16 %v6006, %v6005
      %v6020 = vpack.c.bf16 %v6008, %v6007
      %v6021 = vpack.c.bf16 %v6010, %v6009
      %v6022 = vpack.c.bf16 %v6012, %v6011
      %v6023 = vpack.c.bf16 %v6014, %v6013
      %v6024 = vpack.c.bf16 %v6016, %v6015
      %v6025 = vunpack.c.l.bf16 %v5977
      %v6026 = vunpack.c.h.bf16 %v5977
      %v6027 = vunpack.c.l.bf16 %v5978
      %v6028 = vunpack.c.h.bf16 %v5978
      %v6029 = vunpack.c.l.bf16 %v5979
      %v6030 = vunpack.c.h.bf16 %v5979
      %v6031 = vunpack.c.l.bf16 %v5980
      %v6032 = vunpack.c.h.bf16 %v5980
      %v6033 = vunpack.c.l.bf16 %v5981
      %v6034 = vunpack.c.h.bf16 %v5981
      %v6035 = vunpack.c.l.bf16 %v5982
      %v6036 = vunpack.c.h.bf16 %v5982
      %v6037 = vunpack.c.l.bf16 %v5983
      %v6038 = vunpack.c.h.bf16 %v5983
      %v6039 = vunpack.c.l.bf16 %v5984
      %v6040 = vunpack.c.h.bf16 %v5984
      %v6041 = vunpack.c.l.bf16 %v6017
      %v6042 = vunpack.c.h.bf16 %v6017
      %v6043 = vunpack.c.l.bf16 %v6018
      %v6044 = vunpack.c.h.bf16 %v6018
      %v6045 = vunpack.c.l.bf16 %v6019
      %v6046 = vunpack.c.h.bf16 %v6019
      %v6047 = vunpack.c.l.bf16 %v6020
      %v6048 = vunpack.c.h.bf16 %v6020
      %v6049 = vunpack.c.l.bf16 %v6021
      %v6050 = vunpack.c.h.bf16 %v6021
      %v6051 = vunpack.c.l.bf16 %v6022
      %v6052 = vunpack.c.h.bf16 %v6022
      %v6053 = vunpack.c.l.bf16 %v6023
      %v6054 = vunpack.c.h.bf16 %v6023
      %v6055 = vunpack.c.l.bf16 %v6024
      %v6056 = vunpack.c.h.bf16 %v6024
      %v6057 = vadd.f32 %v6025, %v6041
      %v6058 = vadd.f32 %v6026, %v6042
      %v6059 = vadd.f32 %v6027, %v6043
      %v6060 = vadd.f32 %v6028, %v6044
      %v6061 = vadd.f32 %v6029, %v6045
      %v6062 = vadd.f32 %v6030, %v6046
      %v6063 = vadd.f32 %v6031, %v6047
      %v6064 = vadd.f32 %v6032, %v6048
      %v6065 = vadd.f32 %v6033, %v6049
      %v6066 = vadd.f32 %v6034, %v6050
      %v6067 = vadd.f32 %v6035, %v6051
      %v6068 = vadd.f32 %v6036, %v6052
      %v6069 = vadd.f32 %v6037, %v6053
      %v6070 = vadd.f32 %v6038, %v6054
      %v6071 = vadd.f32 %v6039, %v6055
      %v6072 = vadd.f32 %v6040, %v6056
      %v6073 = vpack.c.bf16 %v6059, %v6057
      %v6074 = vpack.c.bf16 %v6060, %v6058
      %v6075 = vpack.c.bf16 %v6063, %v6061
      %v6076 = vpack.c.bf16 %v6064, %v6062
      %v6077 = vpack.c.bf16 %v6067, %v6065
      %v6078 = vpack.c.bf16 %v6068, %v6066
      %v6079 = vpack.c.bf16 %v6071, %v6069
      %v6080 = vpack.c.bf16 %v6072, %v6070
      %v6081 = vld [vmem:[%s1166] sm:$0xf]
      %v6082 = vld [vmem:[%s1166 + $0x4] sm:$0xf]
      %v6083 = vld [vmem:[%s1166 + $0x8] sm:$0xf]
      %v6084 = vld [vmem:[%s1166 + $0xc] sm:$0xf]
      %v6085 = vld [vmem:[%s1166 + $0x10] sm:$0xf]
      %v6086 = vld [vmem:[%s1166 + $0x14] sm:$0xf]
      %v6087 = vld [vmem:[%s1166 + $0x18] sm:$0xf]
      %v6088 = vld [vmem:[%s1166 + $0x1c] sm:$0xf]
      %v6089 = vld [vmem:[%s1166 + $0x20] sm:$0xf]
      %v6090 = vld [vmem:[%s1166 + $0x24] sm:$0xf]
      %v6091 = vld [vmem:[%s1166 + $0x28] sm:$0xf]
      %v6092 = vld [vmem:[%s1166 + $0x2c] sm:$0xf]
      %v6093 = vld [vmem:[%s1166 + $0x30] sm:$0xf]
      %v6094 = vld [vmem:[%s1166 + $0x34] sm:$0xf]
      %v6095 = vld [vmem:[%s1166 + $0x38] sm:$0xf]
      %v6096 = vld [vmem:[%s1166 + $0x3c] sm:$0xf]
      %v6097 = vld [vmem:[%s1166 + $0x40] sm:$0xf]
      %v6098 = vld [vmem:[%s1166 + $0x44] sm:$0xf]
      %v6099 = vld [vmem:[%s1166 + $0x48] sm:$0xf]
      %v6100 = vld [vmem:[%s1166 + $0x4c] sm:$0xf]
      %v6101 = vld [vmem:[%s1166 + $0x50] sm:$0xf]
      %v6102 = vld [vmem:[%s1166 + $0x54] sm:$0xf]
      %v6103 = vld [vmem:[%s1166 + $0x58] sm:$0xf]
      %v6104 = vld [vmem:[%s1166 + $0x5c] sm:$0xf]
      %v6105 = vld [vmem:[%s1166 + $0x60] sm:$0xf]
      %v6106 = vld [vmem:[%s1166 + $0x64] sm:$0xf]
      %v6107 = vld [vmem:[%s1166 + $0x68] sm:$0xf]
      %v6108 = vld [vmem:[%s1166 + $0x6c] sm:$0xf]
      %v6109 = vld [vmem:[%s1166 + $0x70] sm:$0xf]
      %v6110 = vld [vmem:[%s1166 + $0x74] sm:$0xf]
      %v6111 = vld [vmem:[%s1166 + $0x78] sm:$0xf]
      %v6112 = vld [vmem:[%s1166 + $0x7c] sm:$0xf]
      %v6113 = vld [vmem:[%s27] sm:$0x1]
      %v6115 = vperm.slane %v6113, 0
      %v6149 = vunpack.c.l.b16 %v6081
      %v6150 = vunpack.c.l.b16 %v6082
      %v6151 = vunpack.c.l.b16 %v6083
      %v6152 = vunpack.c.l.b16 %v6084
      %v6153 = vunpack.c.l.b16 %v6085
      %v6154 = vunpack.c.l.b16 %v6086
      %v6155 = vunpack.c.l.b16 %v6087
      %v6156 = vunpack.c.l.b16 %v6088
      %v6157 = vunpack.c.l.b16 %v6089
      %v6158 = vunpack.c.l.b16 %v6090
      %v6159 = vunpack.c.l.b16 %v6091
      %v6160 = vunpack.c.l.b16 %v6092
      %v6161 = vunpack.c.l.b16 %v6093
      %v6162 = vunpack.c.l.b16 %v6094
      %v6163 = vunpack.c.l.b16 %v6095
      %v6164 = vunpack.c.l.b16 %v6096
      %v6165 = vunpack.c.l.b16 %v6097
      %v6166 = vunpack.c.l.b16 %v6098
      %v6167 = vunpack.c.l.b16 %v6099
      %v6168 = vunpack.c.l.b16 %v6100
      %v6169 = vunpack.c.l.b16 %v6101
      %v6170 = vunpack.c.l.b16 %v6102
      %v6171 = vunpack.c.l.b16 %v6103
      %v6172 = vunpack.c.l.b16 %v6104
      %v6173 = vunpack.c.l.b16 %v6105
      %v6174 = vunpack.c.l.b16 %v6106
      %v6175 = vunpack.c.l.b16 %v6107
      %v6176 = vunpack.c.l.b16 %v6108
      %v6177 = vunpack.c.l.b16 %v6109
      %v6178 = vunpack.c.l.b16 %v6110
      %v6179 = vunpack.c.l.b16 %v6111
      %v6180 = vunpack.c.l.b16 %v6112
      %v6181 = vpack.c.b16 %v6150, %v6149
      %v6182 = vpack.c.b16 %v6152, %v6151
      %v6183 = vpack.c.b16 %v6154, %v6153
      %v6184 = vpack.c.b16 %v6156, %v6155
      %v6185 = vpack.c.b16 %v6158, %v6157
      %v6186 = vpack.c.b16 %v6160, %v6159
      %v6187 = vpack.c.b16 %v6162, %v6161
      %v6188 = vpack.c.b16 %v6164, %v6163
      %v6189 = vpack.c.b16 %v6166, %v6165
      %v6190 = vpack.c.b16 %v6168, %v6167
      %v6191 = vpack.c.b16 %v6170, %v6169
      %v6192 = vpack.c.b16 %v6172, %v6171
      %v6193 = vpack.c.b16 %v6174, %v6173
      %v6194 = vpack.c.b16 %v6176, %v6175
      %v6195 = vpack.c.b16 %v6178, %v6177
      %v6196 = vpack.c.b16 %v6180, %v6179
      %6213 = vmatpush.bf16.msra.mxu0 %v6188
      %6214 = vmatpush.bf16.msra.mxu0 %v6187
      %6215 = vmatpush.bf16.msra.mxu0 %v6186
      %6216 = vmatpush.bf16.msra.mxu0 %v6185
      %6217 = vmatpush.bf16.msra.mxu0 %v6184
      %6218 = vmatpush.bf16.msra.mxu0 %v6183
      %6219 = vmatpush.bf16.msra.mxu0 %v6182
      %6220 = vmatpush.bf16.msra.mxu0 %v6181
      %6221 = vmatmul.bf16.gmra.mxu0 %v6073
      %v6222 = vpop.f32.mrf.mxu0
      %v6223 = vadd.f32 %v6115, %v6222
      %v6224 = vpop.f32.mrf.mxu0
      %v6225 = vadd.f32 %v6115, %v6224
      %6226 = vmatmul.bf16.gmra.mxu0 %v6075
      %v6227 = vpop.f32.mrf.mxu0
      %v6228 = vadd.f32 %v6115, %v6227
      %v6229 = vpop.f32.mrf.mxu0
      %v6230 = vadd.f32 %v6115, %v6229
      %6231 = vmatmul.bf16.gmra.mxu0 %v6077
      %v6232 = vpop.f32.mrf.mxu0
      %v6233 = vadd.f32 %v6115, %v6232
      %v6234 = vpop.f32.mrf.mxu0
      %v6235 = vadd.f32 %v6115, %v6234
      %6236 = vmatmul.bf16.gmra.mxu0 %v6079
      %v6237 = vpop.f32.mrf.mxu0
      %v6238 = vadd.f32 %v6115, %v6237
      %v6239 = vpop.f32.mrf.mxu0
      %v6240 = vadd.f32 %v6115, %v6239
      %6241 = vdwg.mxu0
      %6242 = vmatpush.bf16.msra.mxu0 %v6196
      %6243 = vmatpush.bf16.msra.mxu0 %v6195
      %6244 = vmatpush.bf16.msra.mxu0 %v6194
      %6245 = vmatpush.bf16.msra.mxu0 %v6193
      %6246 = vmatpush.bf16.msra.mxu0 %v6192
      %6247 = vmatpush.bf16.msra.mxu0 %v6191
      %6248 = vmatpush.bf16.msra.mxu0 %v6190
      %6249 = vmatpush.bf16.msra.mxu0 %v6189
      %6250 = vmatmul.bf16.gmra.mxu0 %v6074
      %v6251 = vpop.f32.mrf.mxu0
      %v6252 = vadd.f32 %v6223, %v6251
      %v6253 = vpop.f32.mrf.mxu0
      %v6254 = vadd.f32 %v6225, %v6253
      %6255 = vmatmul.bf16.gmra.mxu0 %v6076
      %v6256 = vpop.f32.mrf.mxu0
      %v6257 = vadd.f32 %v6228, %v6256
      %v6258 = vpop.f32.mrf.mxu0
      %v6259 = vadd.f32 %v6230, %v6258
      %6260 = vmatmul.bf16.gmra.mxu0 %v6078
      %v6261 = vpop.f32.mrf.mxu0
      %v6262 = vadd.f32 %v6233, %v6261
      %v6263 = vpop.f32.mrf.mxu0
      %v6264 = vadd.f32 %v6235, %v6263
      %6265 = vmatmul.bf16.gmra.mxu0 %v6080
      %v6266 = vpop.f32.mrf.mxu0
      %v6267 = vadd.f32 %v6238, %v6266
      %v6268 = vpop.f32.mrf.mxu0
      %v6269 = vadd.f32 %v6240, %v6268
      %6270 = vdwg.mxu0
      %v6271 = vpack.c.bf16 %v6252, %v6252
      %v6272 = vpack.c.bf16 %v6254, %v6254
      %v6273 = vpack.c.bf16 %v6257, %v6257
      %v6274 = vpack.c.bf16 %v6259, %v6259
      %v6275 = vpack.c.bf16 %v6262, %v6262
      %v6276 = vpack.c.bf16 %v6264, %v6264
      %v6277 = vpack.c.bf16 %v6267, %v6267
      %v6278 = vpack.c.bf16 %v6269, %v6269
      %6279 = vst [vmem:[%s1175] sm:$0xf] %v6271
      %6280 = vst [vmem:[%s1175 + $0x4] sm:$0xf] %v6272
      %6281 = vst [vmem:[%s1175 + $0x8] sm:$0xf] %v6273
      %6282 = vst [vmem:[%s1175 + $0xc] sm:$0xf] %v6274
      %6283 = vst [vmem:[%s1175 + $0x10] sm:$0xf] %v6275
      %6284 = vst [vmem:[%s1175 + $0x14] sm:$0xf] %v6276
      %6285 = vst [vmem:[%s1175 + $0x18] sm:$0xf] %v6277
      %6286 = vst [vmem:[%s1175 + $0x1c] sm:$0xf] %v6278
      %s6287 = smul.u32 8, %s44
      %p6288 = scmp.lt.s32.totalorder %s43, 1
      %s6289 = scalar_select %p6288, %s43, 1
      %p6290 = scmp.lt.s32.totalorder %s6287, 7
      %s6291 = scalar_select %p6290, %s6287, 7
      %s6292 = smul.addr %s6289, 8
      %s6293 = sadd.s32 %s6291, %s6292
      %s6294 = smul.addr %s6293, 4
      %s6295 = scalar_lea.vmem %s28, %s6294
      // Predicated region
      $region133: #{mlp_forward.1} parent=131 // pred_check
        %p6296 = pneg %p735
      $region134: #{mlp_forward.1} parent=131 // pred_check_branch
        %6298 = sbr.rel (%p6296) target = $region136
      $region135: #{mlp_forward.1} parent=131 // pred_region
        %s6299 = smul.u32 8, %s44
      $region136: #{mlp_forward.1} parent=131 // pred_fallthru
        _
    $region132: #{mlp_forward.1} parent=5 // pred_fallthru
      _
    %p6300 = scmp.le.s32.totalorder 2, %s34
    // Predicated region
    $region137: #{mlp_forward.1} parent=5 // pred_check
      %p6301 = pneg %p6300
    $region138: #{mlp_forward.1} parent=5 // pred_check_branch
      %6303 = sbr.rel (%p6301) target = $region140
    $region139: #{mlp_forward.1} parent=5 // pred_region
      %s6304 = ssub.s32 %s34, 2
      // Predicated region
      $region141: #{mlp_forward.1} parent=139 // pred_check
        %p6305 = pneg %p741
      $region142: #{mlp_forward.1} parent=139 // pred_check_branch
        %6307 = sbr.rel (%p6305) target = $region144
      $region143: #{mlp_forward.1} parent=139 // pred_region
        %s6308 = smul.u32 8, %s46
        %p6309 = scmp.lt.s32.totalorder %s45, 1
        %s6310 = scalar_select %p6309, %s45, 1
        %p6311 = scmp.lt.s32.totalorder %s6308, 7
        %s6312 = scalar_select %p6311, %s6308, 7
        %s6313 = smul.addr %s6310, 8
        %s6314 = sadd.s32 %s6312, %s6313
        %s6315 = smul.addr %s6314, 4
        %s6316 = scalar_lea.vmem %s28, %s6315
      $region144: #{mlp_forward.1} parent=139 // pred_fallthru
        _
    $region140: #{mlp_forward.1} parent=5 // pred_fallthru
      _
  $region6: #{mlp_forward.1} parent=0 // loop_footer
    %s38 = sadd.s32 1, %s34
  $region7: #{mlp_forward.1} parent=0 // loop_footer_branch
    %33 = sbr.rel target = $region3
  $region8: #{mlp_forward.1} parent=0 // loop_exit
    _

</llo_original>
